<compile_context>
chip_gen: v7x
topology: tpu7x:2x2x1
jax: 0.10.0
libtpu: 0.0.40
codegen_flags: <defaults>
</compile_context>

<pallas_src>
import functools

import jax
import jax.numpy as jnp
from jax.experimental import pallas as pl
from jax.experimental.pallas import tpu as pltpu

EPS = 1e-5
NEG_SLOPE = 0.1


def _round_up(x, m):
    return ((x + m - 1) // m) * m


def _leaky(v):
    return jnp.where(v > 0, v, NEG_SLOPE * v)


# ------------------------------ fused kernel --------------------------------

def _make_down_block_kernel(*, cin, cout, chalf, num_blocks,
                            dp, hp, wp, off, spr):
    """Whole downBlock for ONE batch sample, resident on-chip.

    Activation layout: (channels, flattened padded spatial).  The flattening
    radix is (hp*wp, wp, 1) over the padded (dp, hp, wp) output domain; the
    interior [1, dp-2] x [1, hp-2] x [1, wp-2] holds real voxels and the zero
    border doubles as the padding of the next 3x3x3 convolution.
    """
    SP = dp * hp * wp
    SD, SH = hp * wp, wp

    def kernel(x_ref, wd_ref, bd_ref, wa_ref, ba_ref, wb_ref, bb_ref, m_ref,
               o_ref, h_buf, sd_ref, sb_ref):
        mask = m_ref[...]                      # (1, spr) f32, 1 = interior voxel

        # h_buf's halo columns are read (shifted) when stacking the 3x3x3
        # operand, and scratch is uninitialized -> clear it every step.  It is
        # only (chalf x bufh) bf16 (~8 KB); the residual stream needs no VMEM
        # buffer or clearing at all (it is a loop-carried value).
        h_buf[...] = jnp.zeros(h_buf.shape, h_buf.dtype)

        # ---- down1: 3x3x3 / stride 2 / pad 1 --------------------------------
        # Stack the 27 (parity-plane, offset) taps along the contraction axis,
        # then a single MXU matmul with K = 27*cin.
        for a in range(3):
            for b in range(3):
                for c in range(3):
                    p = (a % 2) * 4 + (b % 2) * 2 + (c % 2)
                    o = (a // 2) * SD + (b // 2) * SH + (c // 2)
                    t = a * 9 + b * 3 + c
                    sd_ref[t * cin:(t + 1) * cin, :] = x_ref[0, p, :, o:o + spr]
        acc = jnp.dot(wd_ref[...], sd_ref[...],
                      preferred_element_type=jnp.float32)      # (cout, spr)
        y = mask * _leaky(acc + bd_ref[...])   # border/tail -> 0 (= conv pad)

        # ---- ShortcutBlocks --------------------------------------------------
        for blk in range(num_blocks):
            # 1x1 conv -> chalf channels, BN + LeakyReLU (column-wise dot).
            hv = jnp.dot(wa_ref[blk], y.astype(jnp.bfloat16),
                         preferred_element_type=jnp.float32)
            hv = mask * _leaky(hv + ba_ref[blk])     # mask keeps conv padding 0
            h_buf[:, off:off + spr] = hv.astype(jnp.bfloat16)

            # 3x3x3 / stride 1 / pad 1: stack 27 shifted slices -> one dot,
            # K = 27*chalf.
            for a in range(3):
                for b in range(3):
                    for c in range(3):
                        d = (a - 1) * SD + (b - 1) * SH + (c - 1)
                        t = a * 9 + b * 3 + c
                        sb_ref[t * chalf:(t + 1) * chalf, :] = (
                            h_buf[:, off + d:off + d + spr])
            acc2 = jnp.dot(wb_ref[blk], sb_ref[...],
                           preferred_element_type=jnp.float32)
            y = mask * _leaky(acc2 + bb_ref[blk]) + y          # + residual

        # lane-dense, 128-aligned store (spr contiguous lanes per sample).
        o_ref[0] = y

    return kernel


# ------------------------------- forward ------------------------------------

def down_block_forward(x_ncdhw, kparams, num_blocks=2):
    """downBlock forward.  x_ncdhw: (N, Cin, D, H, W); kernel=3, stride=2, pad=1."""
    x = jnp.transpose(x_ncdhw, (0, 2, 3, 4, 1)).astype(jnp.float32)   # NDHWC
    N, D, H, W, cin = x.shape
    assert D % 2 == 0 and H % 2 == 0 and W % 2 == 0
    do, ho, wo = D // 2, H // 2, W // 2
    dp, hp, wp = do + 2, ho + 2, wo + 2          # padded output domain
    SP = dp * hp * wp
    SD, SH = hp * wp, wp
    halo = SD + SH + 1                           # max |flattened tap shift|
    off = _round_up(halo, 128)                   # lane-aligned scratch base
    spr = _round_up(SP, 128)                     # lane-dense compute/store width
    bufx = _round_up(halo + spr, 128)            # input plane width (+ tap halo)
    bufh = _round_up(off + spr + halo, 128)      # bottleneck scratch width

    cout = kparams["wd"].shape[0]
    chalf = kparams["wa"].shape[1]

    # Layout plumbing (cheap at this size): pad, space-to-depth by the stride
    # (2), flatten spatial with the padded-output radix, zero tail halo.
    xp = jnp.pad(x, ((0, 0), (3, 1), (3, 1), (3, 1), (0, 0)))
    xp = xp.reshape(N, dp, 2, hp, 2, wp, 2, cin)
    xp = xp.transpose(0, 2, 4, 6, 1, 3, 5, 7).reshape(N, 8, SP, cin)
    xp = jnp.transpose(xp, (0, 1, 3, 2))                        # (N, 8, Cin, SP)
    x0 = jnp.pad(xp, ((0, 0), (0, 0), (0, 0), (0, bufx - SP))).astype(jnp.bfloat16)

    # Precomputed interior mask (no in-kernel iota / div / mod).
    idx = jnp.arange(spr, dtype=jnp.int32)
    dd = idx // SD
    hh = (idx // SH) % hp
    ww = idx % wp
    interior = ((idx < SP)
                & (dd >= 1) & (dd <= dp - 2)
                & (hh >= 1) & (hh <= hp - 2)
                & (ww >= 1) & (ww <= wp - 2))
    mask = interior.astype(jnp.float32).reshape(1, spr)

    kernel = _make_down_block_kernel(
        cin=cin, cout=cout, chalf=chalf, num_blocks=num_blocks,
        dp=dp, hp=hp, wp=wp, off=off, spr=spr)

    out = pl.pallas_call(
        kernel,
        out_shape=jax.ShapeDtypeStruct((N, cout, spr), jnp.float32),
        grid_spec=pltpu.PrefetchScalarGridSpec(
            num_scalar_prefetch=0,
            # grid=(N,) "parallel": one sample per step -> both v7x TensorCores
            # busy.  (Single-TC v5e/v6e could fold the batch into the lane axis
            # with grid=(1,) instead.)
            grid=(N,),
            in_specs=[
                pl.BlockSpec((1, 8, cin, bufx), lambda n: (n, 0, 0, 0)),
                pl.BlockSpec((cout, 27 * cin), lambda n: (0, 0)),
                pl.BlockSpec((cout, 1), lambda n: (0, 0)),
                pl.BlockSpec((num_blocks, chalf, cout), lambda n: (0, 0, 0)),
                pl.BlockSpec((num_blocks, chalf, 1), lambda n: (0, 0, 0)),
                pl.BlockSpec((num_blocks, cout, 27 * chalf),
                             lambda n: (0, 0, 0)),
                pl.BlockSpec((num_blocks, cout, 1), lambda n: (0, 0, 0)),
                pl.BlockSpec((1, spr), lambda n: (0, 0)),
            ],
            out_specs=pl.BlockSpec((1, cout, spr), lambda n: (n, 0, 0)),
            scratch_shapes=[
                pltpu.VMEM((chalf, bufh), jnp.bfloat16),      # h (bottleneck+halo)
                pltpu.VMEM((27 * cin, spr), jnp.bfloat16),    # stacked down1 operand
                pltpu.VMEM((27 * chalf, spr), jnp.bfloat16),  # stacked block operand
            ],
        ),
        compiler_params=pltpu.CompilerParams(
            dimension_semantics=("parallel",),
            vmem_limit_bytes=32 * 1024 * 1024),
    )(x0, kparams["wd"], kparams["bd"], kparams["wa"], kparams["ba"],
      kparams["wb"], kparams["bb"], mask)

    y = out[:, :, :SP].reshape(N, cout, dp, hp, wp)
    return y[:, :, 1:1 + do, 1:1 + ho, 1:1 + wo]                # NCDHW


# ------------------------------- parameters ---------------------------------

def init_params(key, in_channels, out_channels, num_blocks=2):
    """Returns (reference_params, kernel_params).

    BN (eval semantics) is folded into the conv weights once at init; the
    folded weights are rounded to bf16 so the kernel's bf16 MXU operands are
    exactly the reference's (f32) effective weights.
    """
    half = out_channels // 2
    keys = jax.random.split(key, 2 + 4 * num_blocks)
    ki = iter(keys)

    def conv_w(k, co, ci, ks):
        return 0.1 * jax.random.normal(k, (co, ci, ks, ks, ks), jnp.float32)

    def bn_params(k, c):
        g = 1.0 + 0.1 * jax.random.normal(k, (c,), jnp.float32)
        b = 0.1 * jax.random.normal(jax.random.fold_in(k, 1), (c,), jnp.float32)
        return g, b

    def fold(w, g):
        scale = g / jnp.sqrt(1.0 + EPS)          # eval BN: mean=0, var=1
        wf = w * scale[:, None, None, None, None]
        return wf.astype(jnp.bfloat16).astype(jnp.float32)

    def flat_taps(wf):          # (Co,Ci,3,3,3) -> (Co, 27*Ci), K = tap*Ci + ci
        co, ci = wf.shape[0], wf.shape[1]
        return (jnp.transpose(wf, (0, 2, 3, 4, 1))
                .reshape(co, 27 * ci).astype(jnp.bfloat16))

    w = conv_w(next(ki), out_channels, in_channels, 3)
    g, b = bn_params(next(ki), out_channels)
    wf = fold(w, g)
    ref = {"down1": {"w": wf, "b": b}, "blocks": []}

    wa, ba, wb, bb = [], [], [], []
    for _ in range(num_blocks):
        w1 = conv_w(next(ki), half, out_channels, 1)
        g1, b1 = bn_params(next(ki), half)
        w1f = fold(w1, g1)
        w2 = conv_w(next(ki), out_channels, half, 3)
        g2, b2 = bn_params(next(ki), out_channels)
        w2f = fold(w2, g2)
        ref["blocks"].append({"w1": w1f, "b1": b1, "w2": w2f, "b2": b2})
        wa.append(w1f[:, :, 0, 0, 0].astype(jnp.bfloat16))
        ba.append(b1.reshape(half, 1))
        wb.append(flat_taps(w2f))
        bb.append(b2.reshape(out_channels, 1))

    kern = {
        "wd": flat_taps(wf),
        "bd": b.reshape(out_channels, 1),
        "wa": jnp.stack(wa), "ba": jnp.stack(ba),
        "wb": jnp.stack(wb), "bb": jnp.stack(bb),
    }
    return ref, kern


# --------------------------- pure-JAX reference -----------------------------

def _ref_conv_bn_lrelu(x, w_oidhw, bias, stride, padding):
    y = jax.lax.conv_general_dilated(
        x, jnp.transpose(w_oidhw, (2, 3, 4, 1, 0)),
        window_strides=(stride,) * 3,
        padding=[(padding, padding)] * 3,
        dimension_numbers=("NDHWC", "DHWIO", "NDHWC"))
    y = y + bias.reshape(1, 1, 1, 1, -1)
    return jnp.where(y > 0, y, NEG_SLOPE * y)


def down_block_reference(x_ncdhw, params):
    x = jnp.transpose(x_ncdhw, (0, 2, 3, 4, 1)).astype(jnp.float32)
    d1 = params["down1"]
    y = _ref_conv_bn_lrelu(x, d1["w"], d1["b"], 2, 1)
    for blk in params["blocks"]:
        h = _ref_conv_bn_lrelu(y, blk["w1"], blk["b1"], 1, 0)
        h2 = _ref_conv_bn_lrelu(h, blk["w2"], blk["b2"], 1, 1)
        y = h2 + y
    return jnp.transpose(y, (0, 4, 1, 2, 3))


# --------------------------------- main --------------------------------------

if __name__ == "__main__":
    in_channels, out_channels = 4, 16
    kernel_size, stride, padding = 3, 2, 1     # structure this kernel targets
    num_blocks = 2
    N, D, H, W = 2, 8, 8, 8

    key = jax.random.PRNGKey(0)
    kx, kp = jax.random.split(key)
    x = jax.random.normal(kx, (N, in_channels, D, H, W), jnp.float32)
    # keep the input bf16-representable so the bf16-operand kernel is compared
    # against the f32 XLA reference without input-quantization noise
    x = x.astype(jnp.bfloat16).astype(jnp.float32)

    ref_params, kern_params = init_params(kp, in_channels, out_channels,
                                          num_blocks=num_blocks)

    fwd = jax.jit(functools.partial(down_block_forward, num_blocks=num_blocks))
    out = jax.block_until_ready(fwd(x, kern_params))

    ref = jax.block_until_ready(down_block_reference(x, ref_params))

    assert out.shape == (N, out_channels, D // stride, H // stride, W // stride)
    # bf16 MXU operands with f32 accumulation -> small, expected deviation
    assert jnp.allclose(out, ref, rtol=2e-2, atol=5e-2), (
        float(jnp.max(jnp.abs(out - ref))))

    print("KERNEL_OK")
</pallas_src>

<mosaic_0001>
module attributes {stable_mosaic.version = 11 : i64} {
  func.func @kernel(%arg0: i32, %arg1: memref<1x8x4x384xbf16, #tpu.memory_space<vmem>>, %arg2: memref<16x108xbf16, #tpu.memory_space<vmem>>, %arg3: memref<16x1xf32, #tpu.memory_space<vmem>>, %arg4: memref<2x8x16xbf16, #tpu.memory_space<vmem>>, %arg5: memref<2x8x1xf32, #tpu.memory_space<vmem>>, %arg6: memref<2x16x216xbf16, #tpu.memory_space<vmem>>, %arg7: memref<2x16x1xf32, #tpu.memory_space<vmem>>, %arg8: memref<1x256xf32, #tpu.memory_space<vmem>>, %arg9: memref<1x16x256xf32, #tpu.memory_space<vmem>>, %arg10: memref<8x512xbf16, #tpu.memory_space<vmem>>, %arg11: memref<108x256xbf16, #tpu.memory_space<vmem>>, %arg12: memref<216x256xbf16, #tpu.memory_space<vmem>>) attributes {dimension_semantics = [#tpu.dimension_semantics<parallel>], iteration_bounds = array<i64: 2>, scalar_prefetch = 0 : i64, scratch_operands = 3 : i64, tpu.core_type = #tpu.core_type<tc>, window_params = [{transform_indices = @transform_0, window_bounds = array<i64: 1, 8, 4, 384>}, {pipeline_mode = #tpu.pipeline_mode<synchronous>, transform_indices = @transform_1, window_bounds = array<i64: 16, 108>}, {pipeline_mode = #tpu.pipeline_mode<synchronous>, transform_indices = @transform_2, window_bounds = array<i64: 16, 1>}, {pipeline_mode = #tpu.pipeline_mode<synchronous>, transform_indices = @transform_3, window_bounds = array<i64: 2, 8, 16>}, {pipeline_mode = #tpu.pipeline_mode<synchronous>, transform_indices = @transform_4, window_bounds = array<i64: 2, 8, 1>}, {pipeline_mode = #tpu.pipeline_mode<synchronous>, transform_indices = @transform_5, window_bounds = array<i64: 2, 16, 216>}, {pipeline_mode = #tpu.pipeline_mode<synchronous>, transform_indices = @transform_6, window_bounds = array<i64: 2, 16, 1>}, {pipeline_mode = #tpu.pipeline_mode<synchronous>, transform_indices = @transform_7, window_bounds = array<i64: 1, 256>}, {transform_indices = @transform_8, window_bounds = array<i64: 1, 16, 256>}]} {
    %c0 = arith.constant 0 : index
    %c0_0 = arith.constant 0 : index
    %0 = vector.load %arg8[%c0, %c0_0] : memref<1x256xf32, #tpu.memory_space<vmem>>, vector<1x256xf32>
    %cst = arith.constant 0.000000e+00 : bf16
    %1 = vector.broadcast %cst : bf16 to vector<8x512xbf16>
    %c0_1 = arith.constant 0 : index
    %c0_2 = arith.constant 0 : index
    %2 = vector.load %arg10[%c0_1, %c0_2] : memref<8x512xbf16, #tpu.memory_space<vmem>>, vector<8x512xbf16>
    tpu.vector_store %arg10[%c0_1, %c0_2], %1 {strides = array<i32>} : memref<8x512xbf16, #tpu.memory_space<vmem>>, vector<8x512xbf16>,
    %c0_3 = arith.constant 0 : index
    %c0_4 = arith.constant 0 : index
    %c0_5 = arith.constant 0 : index
    %c0_6 = arith.constant 0 : index
    %3 = vector.load %arg1[%c0_3, %c0_4, %c0_5, %c0_6] : memref<1x8x4x384xbf16, #tpu.memory_space<vmem>>, vector<1x1x4x256xbf16>
    %4 = vector.shape_cast %3 : vector<1x1x4x256xbf16> to vector<4x256xbf16>
    %c0_7 = arith.constant 0 : index
    %c0_8 = arith.constant 0 : index
    %5 = vector.load %arg11[%c0_7, %c0_8] : memref<108x256xbf16, #tpu.memory_space<vmem>>, vector<4x256xbf16>
    tpu.vector_store %arg11[%c0_7, %c0_8], %4 {strides = array<i32>} : memref<108x256xbf16, #tpu.memory_space<vmem>>, vector<4x256xbf16>,
    %c0_9 = arith.constant 0 : index
    %c1 = arith.constant 1 : index
    %c0_10 = arith.constant 0 : index
    %c0_11 = arith.constant 0 : index
    %6 = vector.load %arg1[%c0_9, %c1, %c0_10, %c0_11] : memref<1x8x4x384xbf16, #tpu.memory_space<vmem>>, vector<1x1x4x256xbf16>
    %7 = vector.shape_cast %6 : vector<1x1x4x256xbf16> to vector<4x256xbf16>
    %c4 = arith.constant 4 : index
    %c0_12 = arith.constant 0 : index
    %8 = vector.load %arg11[%c4, %c0_12] : memref<108x256xbf16, #tpu.memory_space<vmem>>, vector<4x256xbf16>
    tpu.vector_store %arg11[%c4, %c0_12], %7 {strides = array<i32>} : memref<108x256xbf16, #tpu.memory_space<vmem>>, vector<4x256xbf16>,
    %c0_13 = arith.constant 0 : index
    %c0_14 = arith.constant 0 : index
    %c0_15 = arith.constant 0 : index
    %c1_16 = arith.constant 1 : index
    %9 = vector.load %arg1[%c0_13, %c0_14, %c0_15, %c1_16] : memref<1x8x4x384xbf16, #tpu.memory_space<vmem>>, vector<1x1x4x256xbf16>
    %10 = vector.shape_cast %9 : vector<1x1x4x256xbf16> to vector<4x256xbf16>
    %c8 = arith.constant 8 : index
    %c0_17 = arith.constant 0 : index
    %11 = vector.load %arg11[%c8, %c0_17] : memref<108x256xbf16, #tpu.memory_space<vmem>>, vector<4x256xbf16>
    tpu.vector_store %arg11[%c8, %c0_17], %10 {strides = array<i32>} : memref<108x256xbf16, #tpu.memory_space<vmem>>, vector<4x256xbf16>,
    %c0_18 = arith.constant 0 : index
    %c2 = arith.constant 2 : index
    %c0_19 = arith.constant 0 : index
    %c0_20 = arith.constant 0 : index
    %12 = vector.load %arg1[%c0_18, %c2, %c0_19, %c0_20] : memref<1x8x4x384xbf16, #tpu.memory_space<vmem>>, vector<1x1x4x256xbf16>
    %13 = vector.shape_cast %12 : vector<1x1x4x256xbf16> to vector<4x256xbf16>
    %c12 = arith.constant 12 : index
    %c0_21 = arith.constant 0 : index
    %14 = vector.load %arg11[%c12, %c0_21] : memref<108x256xbf16, #tpu.memory_space<vmem>>, vector<4x256xbf16>
    tpu.vector_store %arg11[%c12, %c0_21], %13 {strides = array<i32>} : memref<108x256xbf16, #tpu.memory_space<vmem>>, vector<4x256xbf16>,
    %c0_22 = arith.constant 0 : index
    %c3 = arith.constant 3 : index
    %c0_23 = arith.constant 0 : index
    %c0_24 = arith.constant 0 : index
    %15 = vector.load %arg1[%c0_22, %c3, %c0_23, %c0_24] : memref<1x8x4x384xbf16, #tpu.memory_space<vmem>>, vector<1x1x4x256xbf16>
    %16 = vector.shape_cast %15 : vector<1x1x4x256xbf16> to vector<4x256xbf16>
    %c16 = arith.constant 16 : index
    %c0_25 = arith.constant 0 : index
    %17 = vector.load %arg11[%c16, %c0_25] : memref<108x256xbf16, #tpu.memory_space<vmem>>, vector<4x256xbf16>
    tpu.vector_store %arg11[%c16, %c0_25], %16 {strides = array<i32>} : memref<108x256xbf16, #tpu.memory_space<vmem>>, vector<4x256xbf16>,
    %c0_26 = arith.constant 0 : index
    %c2_27 = arith.constant 2 : index
    %c0_28 = arith.constant 0 : index
    %c1_29 = arith.constant 1 : index
    %18 = vector.load %arg1[%c0_26, %c2_27, %c0_28, %c1_29] : memref<1x8x4x384xbf16, #tpu.memory_space<vmem>>, vector<1x1x4x256xbf16>
    %19 = vector.shape_cast %18 : vector<1x1x4x256xbf16> to vector<4x256xbf16>
    %c20 = arith.constant 20 : index
    %c0_30 = arith.constant 0 : index
    %20 = vector.load %arg11[%c20, %c0_30] : memref<108x256xbf16, #tpu.memory_space<vmem>>, vector<4x256xbf16>
    tpu.vector_store %arg11[%c20, %c0_30], %19 {strides = array<i32>} : memref<108x256xbf16, #tpu.memory_space<vmem>>, vector<4x256xbf16>,
    %c0_31 = arith.constant 0 : index
    %c0_32 = arith.constant 0 : index
    %c0_33 = arith.constant 0 : index
    %c6 = arith.constant 6 : index
    %21 = vector.load %arg1[%c0_31, %c0_32, %c0_33, %c6] : memref<1x8x4x384xbf16, #tpu.memory_space<vmem>>, vector<1x1x4x256xbf16>
    %22 = vector.shape_cast %21 : vector<1x1x4x256xbf16> to vector<4x256xbf16>
    %c24 = arith.constant 24 : index
    %c0_34 = arith.constant 0 : index
    %23 = vector.load %arg11[%c24, %c0_34] : memref<108x256xbf16, #tpu.memory_space<vmem>>, vector<4x256xbf16>
    tpu.vector_store %arg11[%c24, %c0_34], %22 {strides = array<i32>} : memref<108x256xbf16, #tpu.memory_space<vmem>>, vector<4x256xbf16>,
    %c0_35 = arith.constant 0 : index
    %c1_36 = arith.constant 1 : index
    %c0_37 = arith.constant 0 : index
    %c6_38 = arith.constant 6 : index
    %24 = vector.load %arg1[%c0_35, %c1_36, %c0_37, %c6_38] : memref<1x8x4x384xbf16, #tpu.memory_space<vmem>>, vector<1x1x4x256xbf16>
    %25 = vector.shape_cast %24 : vector<1x1x4x256xbf16> to vector<4x256xbf16>
    %c28 = arith.constant 28 : index
    %c0_39 = arith.constant 0 : index
    %26 = vector.load %arg11[%c28, %c0_39] : memref<108x256xbf16, #tpu.memory_space<vmem>>, vector<4x256xbf16>
    tpu.vector_store %arg11[%c28, %c0_39], %25 {strides = array<i32>} : memref<108x256xbf16, #tpu.memory_space<vmem>>, vector<4x256xbf16>,
    %c0_40 = arith.constant 0 : index
    %c0_41 = arith.constant 0 : index
    %c0_42 = arith.constant 0 : index
    %c7 = arith.constant 7 : index
    %27 = vector.load %arg1[%c0_40, %c0_41, %c0_42, %c7] : memref<1x8x4x384xbf16, #tpu.memory_space<vmem>>, vector<1x1x4x256xbf16>
    %28 = vector.shape_cast %27 : vector<1x1x4x256xbf16> to vector<4x256xbf16>
    %c32 = arith.constant 32 : index
    %c0_43 = arith.constant 0 : index
    %29 = vector.load %arg11[%c32, %c0_43] : memref<108x256xbf16, #tpu.memory_space<vmem>>, vector<4x256xbf16>
    tpu.vector_store %arg11[%c32, %c0_43], %28 {strides = array<i32>} : memref<108x256xbf16, #tpu.memory_space<vmem>>, vector<4x256xbf16>,
    %c0_44 = arith.constant 0 : index
    %c4_45 = arith.constant 4 : index
    %c0_46 = arith.constant 0 : index
    %c0_47 = arith.constant 0 : index
    %30 = vector.load %arg1[%c0_44, %c4_45, %c0_46, %c0_47] : memref<1x8x4x384xbf16, #tpu.memory_space<vmem>>, vector<1x1x4x256xbf16>
    %31 = vector.shape_cast %30 : vector<1x1x4x256xbf16> to vector<4x256xbf16>
    %c36 = arith.constant 36 : index
    %c0_48 = arith.constant 0 : index
    %32 = vector.load %arg11[%c36, %c0_48] : memref<108x256xbf16, #tpu.memory_space<vmem>>, vector<4x256xbf16>
    tpu.vector_store %arg11[%c36, %c0_48], %31 {strides = array<i32>} : memref<108x256xbf16, #tpu.memory_space<vmem>>, vector<4x256xbf16>,
    %c0_49 = arith.constant 0 : index
    %c5 = arith.constant 5 : index
    %c0_50 = arith.constant 0 : index
    %c0_51 = arith.constant 0 : index
    %33 = vector.load %arg1[%c0_49, %c5, %c0_50, %c0_51] : memref<1x8x4x384xbf16, #tpu.memory_space<vmem>>, vector<1x1x4x256xbf16>
    %34 = vector.shape_cast %33 : vector<1x1x4x256xbf16> to vector<4x256xbf16>
    %c40 = arith.constant 40 : index
    %c0_52 = arith.constant 0 : index
    %35 = vector.load %arg11[%c40, %c0_52] : memref<108x256xbf16, #tpu.memory_space<vmem>>, vector<4x256xbf16>
    tpu.vector_store %arg11[%c40, %c0_52], %34 {strides = array<i32>} : memref<108x256xbf16, #tpu.memory_space<vmem>>, vector<4x256xbf16>,
    %c0_53 = arith.constant 0 : index
    %c4_54 = arith.constant 4 : index
    %c0_55 = arith.constant 0 : index
    %c1_56 = arith.constant 1 : index
    %36 = vector.load %arg1[%c0_53, %c4_54, %c0_55, %c1_56] : memref<1x8x4x384xbf16, #tpu.memory_space<vmem>>, vector<1x1x4x256xbf16>
    %37 = vector.shape_cast %36 : vector<1x1x4x256xbf16> to vector<4x256xbf16>
    %c44 = arith.constant 44 : index
    %c0_57 = arith.constant 0 : index
    %38 = vector.load %arg11[%c44, %c0_57] : memref<108x256xbf16, #tpu.memory_space<vmem>>, vector<4x256xbf16>
    tpu.vector_store %arg11[%c44, %c0_57], %37 {strides = array<i32>} : memref<108x256xbf16, #tpu.memory_space<vmem>>, vector<4x256xbf16>,
    %c0_58 = arith.constant 0 : index
    %c6_59 = arith.constant 6 : index
    %c0_60 = arith.constant 0 : index
    %c0_61 = arith.constant 0 : index
    %39 = vector.load %arg1[%c0_58, %c6_59, %c0_60, %c0_61] : memref<1x8x4x384xbf16, #tpu.memory_space<vmem>>, vector<1x1x4x256xbf16>
    %40 = vector.shape_cast %39 : vector<1x1x4x256xbf16> to vector<4x256xbf16>
    %c48 = arith.constant 48 : index
    %c0_62 = arith.constant 0 : index
    %41 = vector.load %arg11[%c48, %c0_62] : memref<108x256xbf16, #tpu.memory_space<vmem>>, vector<4x256xbf16>
    tpu.vector_store %arg11[%c48, %c0_62], %40 {strides = array<i32>} : memref<108x256xbf16, #tpu.memory_space<vmem>>, vector<4x256xbf16>,
    %c0_63 = arith.constant 0 : index
    %c7_64 = arith.constant 7 : index
    %c0_65 = arith.constant 0 : index
    %c0_66 = arith.constant 0 : index
    %42 = vector.load %arg1[%c0_63, %c7_64, %c0_65, %c0_66] : memref<1x8x4x384xbf16, #tpu.memory_space<vmem>>, vector<1x1x4x256xbf16>
    %43 = vector.shape_cast %42 : vector<1x1x4x256xbf16> to vector<4x256xbf16>
    %c52 = arith.constant 52 : index
    %c0_67 = arith.constant 0 : index
    %44 = vector.load %arg11[%c52, %c0_67] : memref<108x256xbf16, #tpu.memory_space<vmem>>, vector<4x256xbf16>
    tpu.vector_store %arg11[%c52, %c0_67], %43 {strides = array<i32>} : memref<108x256xbf16, #tpu.memory_space<vmem>>, vector<4x256xbf16>,
    %c0_68 = arith.constant 0 : index
    %c6_69 = arith.constant 6 : index
    %c0_70 = arith.constant 0 : index
    %c1_71 = arith.constant 1 : index
    %45 = vector.load %arg1[%c0_68, %c6_69, %c0_70, %c1_71] : memref<1x8x4x384xbf16, #tpu.memory_space<vmem>>, vector<1x1x4x256xbf16>
    %46 = vector.shape_cast %45 : vector<1x1x4x256xbf16> to vector<4x256xbf16>
    %c56 = arith.constant 56 : index
    %c0_72 = arith.constant 0 : index
    %47 = vector.load %arg11[%c56, %c0_72] : memref<108x256xbf16, #tpu.memory_space<vmem>>, vector<4x256xbf16>
    tpu.vector_store %arg11[%c56, %c0_72], %46 {strides = array<i32>} : memref<108x256xbf16, #tpu.memory_space<vmem>>, vector<4x256xbf16>,
    %c0_73 = arith.constant 0 : index
    %c4_74 = arith.constant 4 : index
    %c0_75 = arith.constant 0 : index
    %c6_76 = arith.constant 6 : index
    %48 = vector.load %arg1[%c0_73, %c4_74, %c0_75, %c6_76] : memref<1x8x4x384xbf16, #tpu.memory_space<vmem>>, vector<1x1x4x256xbf16>
    %49 = vector.shape_cast %48 : vector<1x1x4x256xbf16> to vector<4x256xbf16>
    %c60 = arith.constant 60 : index
    %c0_77 = arith.constant 0 : index
    %50 = vector.load %arg11[%c60, %c0_77] : memref<108x256xbf16, #tpu.memory_space<vmem>>, vector<4x256xbf16>
    tpu.vector_store %arg11[%c60, %c0_77], %49 {strides = array<i32>} : memref<108x256xbf16, #tpu.memory_space<vmem>>, vector<4x256xbf16>,
    %c0_78 = arith.constant 0 : index
    %c5_79 = arith.constant 5 : index
    %c0_80 = arith.constant 0 : index
    %c6_81 = arith.constant 6 : index
    %51 = vector.load %arg1[%c0_78, %c5_79, %c0_80, %c6_81] : memref<1x8x4x384xbf16, #tpu.memory_space<vmem>>, vector<1x1x4x256xbf16>
    %52 = vector.shape_cast %51 : vector<1x1x4x256xbf16> to vector<4x256xbf16>
    %c64 = arith.constant 64 : index
    %c0_82 = arith.constant 0 : index
    %53 = vector.load %arg11[%c64, %c0_82] : memref<108x256xbf16, #tpu.memory_space<vmem>>, vector<4x256xbf16>
    tpu.vector_store %arg11[%c64, %c0_82], %52 {strides = array<i32>} : memref<108x256xbf16, #tpu.memory_space<vmem>>, vector<4x256xbf16>,
    %c0_83 = arith.constant 0 : index
    %c4_84 = arith.constant 4 : index
    %c0_85 = arith.constant 0 : index
    %c7_86 = arith.constant 7 : index
    %54 = vector.load %arg1[%c0_83, %c4_84, %c0_85, %c7_86] : memref<1x8x4x384xbf16, #tpu.memory_space<vmem>>, vector<1x1x4x256xbf16>
    %55 = vector.shape_cast %54 : vector<1x1x4x256xbf16> to vector<4x256xbf16>
    %c68 = arith.constant 68 : index
    %c0_87 = arith.constant 0 : index
    %56 = vector.load %arg11[%c68, %c0_87] : memref<108x256xbf16, #tpu.memory_space<vmem>>, vector<4x256xbf16>
    tpu.vector_store %arg11[%c68, %c0_87], %55 {strides = array<i32>} : memref<108x256xbf16, #tpu.memory_space<vmem>>, vector<4x256xbf16>,
    %c0_88 = arith.constant 0 : index
    %c0_89 = arith.constant 0 : index
    %c0_90 = arith.constant 0 : index
    %c36_91 = arith.constant 36 : index
    %57 = vector.load %arg1[%c0_88, %c0_89, %c0_90, %c36_91] : memref<1x8x4x384xbf16, #tpu.memory_space<vmem>>, vector<1x1x4x256xbf16>
    %58 = vector.shape_cast %57 : vector<1x1x4x256xbf16> to vector<4x256xbf16>
    %c72 = arith.constant 72 : index
    %c0_92 = arith.constant 0 : index
    %59 = vector.load %arg11[%c72, %c0_92] : memref<108x256xbf16, #tpu.memory_space<vmem>>, vector<4x256xbf16>
    tpu.vector_store %arg11[%c72, %c0_92], %58 {strides = array<i32>} : memref<108x256xbf16, #tpu.memory_space<vmem>>, vector<4x256xbf16>,
    %c0_93 = arith.constant 0 : index
    %c1_94 = arith.constant 1 : index
    %c0_95 = arith.constant 0 : index
    %c36_96 = arith.constant 36 : index
    %60 = vector.load %arg1[%c0_93, %c1_94, %c0_95, %c36_96] : memref<1x8x4x384xbf16, #tpu.memory_space<vmem>>, vector<1x1x4x256xbf16>
    %61 = vector.shape_cast %60 : vector<1x1x4x256xbf16> to vector<4x256xbf16>
    %c76 = arith.constant 76 : index
    %c0_97 = arith.constant 0 : index
    %62 = vector.load %arg11[%c76, %c0_97] : memref<108x256xbf16, #tpu.memory_space<vmem>>, vector<4x256xbf16>
    tpu.vector_store %arg11[%c76, %c0_97], %61 {strides = array<i32>} : memref<108x256xbf16, #tpu.memory_space<vmem>>, vector<4x256xbf16>,
    %c0_98 = arith.constant 0 : index
    %c0_99 = arith.constant 0 : index
    %c0_100 = arith.constant 0 : index
    %c37 = arith.constant 37 : index
    %63 = vector.load %arg1[%c0_98, %c0_99, %c0_100, %c37] : memref<1x8x4x384xbf16, #tpu.memory_space<vmem>>, vector<1x1x4x256xbf16>
    %64 = vector.shape_cast %63 : vector<1x1x4x256xbf16> to vector<4x256xbf16>
    %c80 = arith.constant 80 : index
    %c0_101 = arith.constant 0 : index
    %65 = vector.load %arg11[%c80, %c0_101] : memref<108x256xbf16, #tpu.memory_space<vmem>>, vector<4x256xbf16>
    tpu.vector_store %arg11[%c80, %c0_101], %64 {strides = array<i32>} : memref<108x256xbf16, #tpu.memory_space<vmem>>, vector<4x256xbf16>,
    %c0_102 = arith.constant 0 : index
    %c2_103 = arith.constant 2 : index
    %c0_104 = arith.constant 0 : index
    %c36_105 = arith.constant 36 : index
    %66 = vector.load %arg1[%c0_102, %c2_103, %c0_104, %c36_105] : memref<1x8x4x384xbf16, #tpu.memory_space<vmem>>, vector<1x1x4x256xbf16>
    %67 = vector.shape_cast %66 : vector<1x1x4x256xbf16> to vector<4x256xbf16>
    %c84 = arith.constant 84 : index
    %c0_106 = arith.constant 0 : index
    %68 = vector.load %arg11[%c84, %c0_106] : memref<108x256xbf16, #tpu.memory_space<vmem>>, vector<4x256xbf16>
    tpu.vector_store %arg11[%c84, %c0_106], %67 {strides = array<i32>} : memref<108x256xbf16, #tpu.memory_space<vmem>>, vector<4x256xbf16>,
    %c0_107 = arith.constant 0 : index
    %c3_108 = arith.constant 3 : index
    %c0_109 = arith.constant 0 : index
    %c36_110 = arith.constant 36 : index
    %69 = vector.load %arg1[%c0_107, %c3_108, %c0_109, %c36_110] : memref<1x8x4x384xbf16, #tpu.memory_space<vmem>>, vector<1x1x4x256xbf16>
    %70 = vector.shape_cast %69 : vector<1x1x4x256xbf16> to vector<4x256xbf16>
    %c88 = arith.constant 88 : index
    %c0_111 = arith.constant 0 : index
    %71 = vector.load %arg11[%c88, %c0_111] : memref<108x256xbf16, #tpu.memory_space<vmem>>, vector<4x256xbf16>
    tpu.vector_store %arg11[%c88, %c0_111], %70 {strides = array<i32>} : memref<108x256xbf16, #tpu.memory_space<vmem>>, vector<4x256xbf16>,
    %c0_112 = arith.constant 0 : index
    %c2_113 = arith.constant 2 : index
    %c0_114 = arith.constant 0 : index
    %c37_115 = arith.constant 37 : index
    %72 = vector.load %arg1[%c0_112, %c2_113, %c0_114, %c37_115] : memref<1x8x4x384xbf16, #tpu.memory_space<vmem>>, vector<1x1x4x256xbf16>
    %73 = vector.shape_cast %72 : vector<1x1x4x256xbf16> to vector<4x256xbf16>
    %c92 = arith.constant 92 : index
    %c0_116 = arith.constant 0 : index
    %74 = vector.load %arg11[%c92, %c0_116] : memref<108x256xbf16, #tpu.memory_space<vmem>>, vector<4x256xbf16>
    tpu.vector_store %arg11[%c92, %c0_116], %73 {strides = array<i32>} : memref<108x256xbf16, #tpu.memory_space<vmem>>, vector<4x256xbf16>,
    %c0_117 = arith.constant 0 : index
    %c0_118 = arith.constant 0 : index
    %c0_119 = arith.constant 0 : index
    %c42 = arith.constant 42 : index
    %75 = vector.load %arg1[%c0_117, %c0_118, %c0_119, %c42] : memref<1x8x4x384xbf16, #tpu.memory_space<vmem>>, vector<1x1x4x256xbf16>
    %76 = vector.shape_cast %75 : vector<1x1x4x256xbf16> to vector<4x256xbf16>
    %c96 = arith.constant 96 : index
    %c0_120 = arith.constant 0 : index
    %77 = vector.load %arg11[%c96, %c0_120] : memref<108x256xbf16, #tpu.memory_space<vmem>>, vector<4x256xbf16>
    tpu.vector_store %arg11[%c96, %c0_120], %76 {strides = array<i32>} : memref<108x256xbf16, #tpu.memory_space<vmem>>, vector<4x256xbf16>,
    %c0_121 = arith.constant 0 : index
    %c1_122 = arith.constant 1 : index
    %c0_123 = arith.constant 0 : index
    %c42_124 = arith.constant 42 : index
    %78 = vector.load %arg1[%c0_121, %c1_122, %c0_123, %c42_124] : memref<1x8x4x384xbf16, #tpu.memory_space<vmem>>, vector<1x1x4x256xbf16>
    %79 = vector.shape_cast %78 : vector<1x1x4x256xbf16> to vector<4x256xbf16>
    %c100 = arith.constant 100 : index
    %c0_125 = arith.constant 0 : index
    %80 = vector.load %arg11[%c100, %c0_125] : memref<108x256xbf16, #tpu.memory_space<vmem>>, vector<4x256xbf16>
    tpu.vector_store %arg11[%c100, %c0_125], %79 {strides = array<i32>} : memref<108x256xbf16, #tpu.memory_space<vmem>>, vector<4x256xbf16>,
    %c0_126 = arith.constant 0 : index
    %c0_127 = arith.constant 0 : index
    %c0_128 = arith.constant 0 : index
    %c43 = arith.constant 43 : index
    %81 = vector.load %arg1[%c0_126, %c0_127, %c0_128, %c43] : memref<1x8x4x384xbf16, #tpu.memory_space<vmem>>, vector<1x1x4x256xbf16>
    %82 = vector.shape_cast %81 : vector<1x1x4x256xbf16> to vector<4x256xbf16>
    %c104 = arith.constant 104 : index
    %c0_129 = arith.constant 0 : index
    %83 = vector.load %arg11[%c104, %c0_129] : memref<108x256xbf16, #tpu.memory_space<vmem>>, vector<4x256xbf16>
    tpu.vector_store %arg11[%c104, %c0_129], %82 {strides = array<i32>} : memref<108x256xbf16, #tpu.memory_space<vmem>>, vector<4x256xbf16>,
    %c0_130 = arith.constant 0 : index
    %c0_131 = arith.constant 0 : index
    %84 = vector.load %arg2[%c0_130, %c0_131] : memref<16x108xbf16, #tpu.memory_space<vmem>>, vector<16x108xbf16>
    %c0_132 = arith.constant 0 : index
    %c0_133 = arith.constant 0 : index
    %85 = vector.load %arg11[%c0_132, %c0_133] : memref<108x256xbf16, #tpu.memory_space<vmem>>, vector<108x256xbf16>
    %cst_134 = arith.constant dense<0.000000e+00> : vector<16x256xf32>
    %86 = tpu.matmul %84, %85, %cst_134 {dimension_numbers = #tpu.dot_dimension_numbers<[1], [0], [0], [1], [0, 0, 1, 1], [], []>} : vector<16x108xbf16>, vector<108x256xbf16>, vector<16x256xf32> -> vector<16x256xf32>
    %c0_135 = arith.constant 0 : index
    %c0_136 = arith.constant 0 : index
    %87 = vector.load %arg3[%c0_135, %c0_136] : memref<16x1xf32, #tpu.memory_space<vmem>>, vector<16x1xf32>
    %88 = vector.broadcast %87 : vector<16x1xf32> to vector<16x256xf32>
    %89 = arith.addf %86, %88 : vector<16x256xf32>
    %cst_137 = arith.constant 0.000000e+00 : f32
    %90 = vector.broadcast %cst_137 : f32 to vector<16x256xf32>
    %91 = arith.cmpf ogt, %89, %90 : vector<16x256xf32>
    %cst_138 = arith.constant 1.000000e-01 : f32
    %92 = vector.broadcast %cst_138 : f32 to vector<16x256xf32>
    %93 = arith.mulf %92, %89 : vector<16x256xf32>
    %94 = arith.select %91, %89, %93 : vector<16x256xi1>, vector<16x256xf32>
    %95 = vector.broadcast %0 : vector<1x256xf32> to vector<16x256xf32>
    %96 = arith.mulf %95, %94 : vector<16x256xf32>
    %c0_139 = arith.constant 0 : index
    %c0_140 = arith.constant 0 : index
    %c0_141 = arith.constant 0 : index
    %97 = vector.load %arg4[%c0_139, %c0_140, %c0_141] : memref<2x8x16xbf16, #tpu.memory_space<vmem>>, vector<1x8x16xbf16>
    %98 = vector.shape_cast %97 : vector<1x8x16xbf16> to vector<8x16xbf16>
    %99 = arith.truncf %96 : vector<16x256xf32> to vector<16x256xbf16>
    %cst_142 = arith.constant dense<0.000000e+00> : vector<8x256xf32>
    %100 = tpu.matmul %98, %99, %cst_142 {dimension_numbers = #tpu.dot_dimension_numbers<[1], [0], [0], [1], [0, 0, 1, 1], [], []>} : vector<8x16xbf16>, vector<16x256xbf16>, vector<8x256xf32> -> vector<8x256xf32>
    %c0_143 = arith.constant 0 : index
    %c0_144 = arith.constant 0 : index
    %c0_145 = arith.constant 0 : index
    %101 = vector.load %arg5[%c0_143, %c0_144, %c0_145] : memref<2x8x1xf32, #tpu.memory_space<vmem>>, vector<1x8x1xf32>
    %102 = vector.shape_cast %101 : vector<1x8x1xf32> to vector<8x1xf32>
    %103 = vector.broadcast %102 : vector<8x1xf32> to vector<8x256xf32>
    %104 = arith.addf %100, %103 : vector<8x256xf32>
    %cst_146 = arith.constant 0.000000e+00 : f32
    %105 = vector.broadcast %cst_146 : f32 to vector<8x256xf32>
    %106 = arith.cmpf ogt, %104, %105 : vector<8x256xf32>
    %cst_147 = arith.constant 1.000000e-01 : f32
    %107 = vector.broadcast %cst_147 : f32 to vector<8x256xf32>
    %108 = arith.mulf %107, %104 : vector<8x256xf32>
    %109 = arith.select %106, %104, %108 : vector<8x256xi1>, vector<8x256xf32>
    %110 = vector.broadcast %0 : vector<1x256xf32> to vector<8x256xf32>
    %111 = arith.mulf %110, %109 : vector<8x256xf32>
    %112 = arith.truncf %111 : vector<8x256xf32> to vector<8x256xbf16>
    %c0_148 = arith.constant 0 : index
    %c128 = arith.constant 128 : index
    %113 = vector.load %arg10[%c0_148, %c128] : memref<8x512xbf16, #tpu.memory_space<vmem>>, vector<8x256xbf16>
    tpu.vector_store %arg10[%c0_148, %c128], %112 {strides = array<i32>} : memref<8x512xbf16, #tpu.memory_space<vmem>>, vector<8x256xbf16>,
    %c0_149 = arith.constant 0 : index
    %c85 = arith.constant 85 : index
    %114 = vector.load %arg10[%c0_149, %c85] : memref<8x512xbf16, #tpu.memory_space<vmem>>, vector<8x256xbf16>
    %c0_150 = arith.constant 0 : index
    %c0_151 = arith.constant 0 : index
    %115 = vector.load %arg12[%c0_150, %c0_151] : memref<216x256xbf16, #tpu.memory_space<vmem>>, vector<8x256xbf16>
    tpu.vector_store %arg12[%c0_150, %c0_151], %114 {strides = array<i32>} : memref<216x256xbf16, #tpu.memory_space<vmem>>, vector<8x256xbf16>,
    %c0_152 = arith.constant 0 : index
    %c86 = arith.constant 86 : index
    %116 = vector.load %arg10[%c0_152, %c86] : memref<8x512xbf16, #tpu.memory_space<vmem>>, vector<8x256xbf16>
    %c8_153 = arith.constant 8 : index
    %c0_154 = arith.constant 0 : index
    %117 = vector.load %arg12[%c8_153, %c0_154] : memref<216x256xbf16, #tpu.memory_space<vmem>>, vector<8x256xbf16>
    tpu.vector_store %arg12[%c8_153, %c0_154], %116 {strides = array<i32>} : memref<216x256xbf16, #tpu.memory_space<vmem>>, vector<8x256xbf16>,
    %c0_155 = arith.constant 0 : index
    %c87 = arith.constant 87 : index
    %118 = vector.load %arg10[%c0_155, %c87] : memref<8x512xbf16, #tpu.memory_space<vmem>>, vector<8x256xbf16>
    %c16_156 = arith.constant 16 : index
    %c0_157 = arith.constant 0 : index
    %119 = vector.load %arg12[%c16_156, %c0_157] : memref<216x256xbf16, #tpu.memory_space<vmem>>, vector<8x256xbf16>
    tpu.vector_store %arg12[%c16_156, %c0_157], %118 {strides = array<i32>} : memref<216x256xbf16, #tpu.memory_space<vmem>>, vector<8x256xbf16>,
    %c0_158 = arith.constant 0 : index
    %c91 = arith.constant 91 : index
    %120 = vector.load %arg10[%c0_158, %c91] : memref<8x512xbf16, #tpu.memory_space<vmem>>, vector<8x256xbf16>
    %c24_159 = arith.constant 24 : index
    %c0_160 = arith.constant 0 : index
    %121 = vector.load %arg12[%c24_159, %c0_160] : memref<216x256xbf16, #tpu.memory_space<vmem>>, vector<8x256xbf16>
    tpu.vector_store %arg12[%c24_159, %c0_160], %120 {strides = array<i32>} : memref<216x256xbf16, #tpu.memory_space<vmem>>, vector<8x256xbf16>,
    %c0_161 = arith.constant 0 : index
    %c92_162 = arith.constant 92 : index
    %122 = vector.load %arg10[%c0_161, %c92_162] : memref<8x512xbf16, #tpu.memory_space<vmem>>, vector<8x256xbf16>
    %c32_163 = arith.constant 32 : index
    %c0_164 = arith.constant 0 : index
    %123 = vector.load %arg12[%c32_163, %c0_164] : memref<216x256xbf16, #tpu.memory_space<vmem>>, vector<8x256xbf16>
    tpu.vector_store %arg12[%c32_163, %c0_164], %122 {strides = array<i32>} : memref<216x256xbf16, #tpu.memory_space<vmem>>, vector<8x256xbf16>,
    %c0_165 = arith.constant 0 : index
    %c93 = arith.constant 93 : index
    %124 = vector.load %arg10[%c0_165, %c93] : memref<8x512xbf16, #tpu.memory_space<vmem>>, vector<8x256xbf16>
    %c40_166 = arith.constant 40 : index
    %c0_167 = arith.constant 0 : index
    %125 = vector.load %arg12[%c40_166, %c0_167] : memref<216x256xbf16, #tpu.memory_space<vmem>>, vector<8x256xbf16>
    tpu.vector_store %arg12[%c40_166, %c0_167], %124 {strides = array<i32>} : memref<216x256xbf16, #tpu.memory_space<vmem>>, vector<8x256xbf16>,
    %c0_168 = arith.constant 0 : index
    %c97 = arith.constant 97 : index
    %126 = vector.load %arg10[%c0_168, %c97] : memref<8x512xbf16, #tpu.memory_space<vmem>>, vector<8x256xbf16>
    %c48_169 = arith.constant 48 : index
    %c0_170 = arith.constant 0 : index
    %127 = vector.load %arg12[%c48_169, %c0_170] : memref<216x256xbf16, #tpu.memory_space<vmem>>, vector<8x256xbf16>
    tpu.vector_store %arg12[%c48_169, %c0_170], %126 {strides = array<i32>} : memref<216x256xbf16, #tpu.memory_space<vmem>>, vector<8x256xbf16>,
    %c0_171 = arith.constant 0 : index
    %c98 = arith.constant 98 : index
    %128 = vector.load %arg10[%c0_171, %c98] : memref<8x512xbf16, #tpu.memory_space<vmem>>, vector<8x256xbf16>
    %c56_172 = arith.constant 56 : index
    %c0_173 = arith.constant 0 : index
    %129 = vector.load %arg12[%c56_172, %c0_173] : memref<216x256xbf16, #tpu.memory_space<vmem>>, vector<8x256xbf16>
    tpu.vector_store %arg12[%c56_172, %c0_173], %128 {strides = array<i32>} : memref<216x256xbf16, #tpu.memory_space<vmem>>, vector<8x256xbf16>,
    %c0_174 = arith.constant 0 : index
    %c99 = arith.constant 99 : index
    %130 = vector.load %arg10[%c0_174, %c99] : memref<8x512xbf16, #tpu.memory_space<vmem>>, vector<8x256xbf16>
    %c64_175 = arith.constant 64 : index
    %c0_176 = arith.constant 0 : index
    %131 = vector.load %arg12[%c64_175, %c0_176] : memref<216x256xbf16, #tpu.memory_space<vmem>>, vector<8x256xbf16>
    tpu.vector_store %arg12[%c64_175, %c0_176], %130 {strides = array<i32>} : memref<216x256xbf16, #tpu.memory_space<vmem>>, vector<8x256xbf16>,
    %c0_177 = arith.constant 0 : index
    %c121 = arith.constant 121 : index
    %132 = vector.load %arg10[%c0_177, %c121] : memref<8x512xbf16, #tpu.memory_space<vmem>>, vector<8x256xbf16>
    %c72_178 = arith.constant 72 : index
    %c0_179 = arith.constant 0 : index
    %133 = vector.load %arg12[%c72_178, %c0_179] : memref<216x256xbf16, #tpu.memory_space<vmem>>, vector<8x256xbf16>
    tpu.vector_store %arg12[%c72_178, %c0_179], %132 {strides = array<i32>} : memref<216x256xbf16, #tpu.memory_space<vmem>>, vector<8x256xbf16>,
    %c0_180 = arith.constant 0 : index
    %c122 = arith.constant 122 : index
    %134 = vector.load %arg10[%c0_180, %c122] : memref<8x512xbf16, #tpu.memory_space<vmem>>, vector<8x256xbf16>
    %c80_181 = arith.constant 80 : index
    %c0_182 = arith.constant 0 : index
    %135 = vector.load %arg12[%c80_181, %c0_182] : memref<216x256xbf16, #tpu.memory_space<vmem>>, vector<8x256xbf16>
    tpu.vector_store %arg12[%c80_181, %c0_182], %134 {strides = array<i32>} : memref<216x256xbf16, #tpu.memory_space<vmem>>, vector<8x256xbf16>,
    %c0_183 = arith.constant 0 : index
    %c123 = arith.constant 123 : index
    %136 = vector.load %arg10[%c0_183, %c123] : memref<8x512xbf16, #tpu.memory_space<vmem>>, vector<8x256xbf16>
    %c88_184 = arith.constant 88 : index
    %c0_185 = arith.constant 0 : index
    %137 = vector.load %arg12[%c88_184, %c0_185] : memref<216x256xbf16, #tpu.memory_space<vmem>>, vector<8x256xbf16>
    tpu.vector_store %arg12[%c88_184, %c0_185], %136 {strides = array<i32>} : memref<216x256xbf16, #tpu.memory_space<vmem>>, vector<8x256xbf16>,
    %c0_186 = arith.constant 0 : index
    %c127 = arith.constant 127 : index
    %138 = vector.load %arg10[%c0_186, %c127] : memref<8x512xbf16, #tpu.memory_space<vmem>>, vector<8x256xbf16>
    %c96_187 = arith.constant 96 : index
    %c0_188 = arith.constant 0 : index
    %139 = vector.load %arg12[%c96_187, %c0_188] : memref<216x256xbf16, #tpu.memory_space<vmem>>, vector<8x256xbf16>
    tpu.vector_store %arg12[%c96_187, %c0_188], %138 {strides = array<i32>} : memref<216x256xbf16, #tpu.memory_space<vmem>>, vector<8x256xbf16>,
    %c0_189 = arith.constant 0 : index
    %c128_190 = arith.constant 128 : index
    %140 = vector.load %arg10[%c0_189, %c128_190] : memref<8x512xbf16, #tpu.memory_space<vmem>>, vector<8x256xbf16>
    %c104_191 = arith.constant 104 : index
    %c0_192 = arith.constant 0 : index
    %141 = vector.load %arg12[%c104_191, %c0_192] : memref<216x256xbf16, #tpu.memory_space<vmem>>, vector<8x256xbf16>
    tpu.vector_store %arg12[%c104_191, %c0_192], %140 {strides = array<i32>} : memref<216x256xbf16, #tpu.memory_space<vmem>>, vector<8x256xbf16>,
    %c0_193 = arith.constant 0 : index
    %c129 = arith.constant 129 : index
    %142 = vector.load %arg10[%c0_193, %c129] : memref<8x512xbf16, #tpu.memory_space<vmem>>, vector<8x256xbf16>
    %c112 = arith.constant 112 : index
    %c0_194 = arith.constant 0 : index
    %143 = vector.load %arg12[%c112, %c0_194] : memref<216x256xbf16, #tpu.memory_space<vmem>>, vector<8x256xbf16>
    tpu.vector_store %arg12[%c112, %c0_194], %142 {strides = array<i32>} : memref<216x256xbf16, #tpu.memory_space<vmem>>, vector<8x256xbf16>,
    %c0_195 = arith.constant 0 : index
    %c133 = arith.constant 133 : index
    %144 = vector.load %arg10[%c0_195, %c133] : memref<8x512xbf16, #tpu.memory_space<vmem>>, vector<8x256xbf16>
    %c120 = arith.constant 120 : index
    %c0_196 = arith.constant 0 : index
    %145 = vector.load %arg12[%c120, %c0_196] : memref<216x256xbf16, #tpu.memory_space<vmem>>, vector<8x256xbf16>
    tpu.vector_store %arg12[%c120, %c0_196], %144 {strides = array<i32>} : memref<216x256xbf16, #tpu.memory_space<vmem>>, vector<8x256xbf16>,
    %c0_197 = arith.constant 0 : index
    %c134 = arith.constant 134 : index
    %146 = vector.load %arg10[%c0_197, %c134] : memref<8x512xbf16, #tpu.memory_space<vmem>>, vector<8x256xbf16>
    %c128_198 = arith.constant 128 : index
    %c0_199 = arith.constant 0 : index
    %147 = vector.load %arg12[%c128_198, %c0_199] : memref<216x256xbf16, #tpu.memory_space<vmem>>, vector<8x256xbf16>
    tpu.vector_store %arg12[%c128_198, %c0_199], %146 {strides = array<i32>} : memref<216x256xbf16, #tpu.memory_space<vmem>>, vector<8x256xbf16>,
    %c0_200 = arith.constant 0 : index
    %c135 = arith.constant 135 : index
    %148 = vector.load %arg10[%c0_200, %c135] : memref<8x512xbf16, #tpu.memory_space<vmem>>, vector<8x256xbf16>
    %c136 = arith.constant 136 : index
    %c0_201 = arith.constant 0 : index
    %149 = vector.load %arg12[%c136, %c0_201] : memref<216x256xbf16, #tpu.memory_space<vmem>>, vector<8x256xbf16>
    tpu.vector_store %arg12[%c136, %c0_201], %148 {strides = array<i32>} : memref<216x256xbf16, #tpu.memory_space<vmem>>, vector<8x256xbf16>,
    %c0_202 = arith.constant 0 : index
    %c157 = arith.constant 157 : index
    %150 = vector.load %arg10[%c0_202, %c157] : memref<8x512xbf16, #tpu.memory_space<vmem>>, vector<8x256xbf16>
    %c144 = arith.constant 144 : index
    %c0_203 = arith.constant 0 : index
    %151 = vector.load %arg12[%c144, %c0_203] : memref<216x256xbf16, #tpu.memory_space<vmem>>, vector<8x256xbf16>
    tpu.vector_store %arg12[%c144, %c0_203], %150 {strides = array<i32>} : memref<216x256xbf16, #tpu.memory_space<vmem>>, vector<8x256xbf16>,
    %c0_204 = arith.constant 0 : index
    %c158 = arith.constant 158 : index
    %152 = vector.load %arg10[%c0_204, %c158] : memref<8x512xbf16, #tpu.memory_space<vmem>>, vector<8x256xbf16>
    %c152 = arith.constant 152 : index
    %c0_205 = arith.constant 0 : index
    %153 = vector.load %arg12[%c152, %c0_205] : memref<216x256xbf16, #tpu.memory_space<vmem>>, vector<8x256xbf16>
    tpu.vector_store %arg12[%c152, %c0_205], %152 {strides = array<i32>} : memref<216x256xbf16, #tpu.memory_space<vmem>>, vector<8x256xbf16>,
    %c0_206 = arith.constant 0 : index
    %c159 = arith.constant 159 : index
    %154 = vector.load %arg10[%c0_206, %c159] : memref<8x512xbf16, #tpu.memory_space<vmem>>, vector<8x256xbf16>
    %c160 = arith.constant 160 : index
    %c0_207 = arith.constant 0 : index
    %155 = vector.load %arg12[%c160, %c0_207] : memref<216x256xbf16, #tpu.memory_space<vmem>>, vector<8x256xbf16>
    tpu.vector_store %arg12[%c160, %c0_207], %154 {strides = array<i32>} : memref<216x256xbf16, #tpu.memory_space<vmem>>, vector<8x256xbf16>,
    %c0_208 = arith.constant 0 : index
    %c163 = arith.constant 163 : index
    %156 = vector.load %arg10[%c0_208, %c163] : memref<8x512xbf16, #tpu.memory_space<vmem>>, vector<8x256xbf16>
    %c168 = arith.constant 168 : index
    %c0_209 = arith.constant 0 : index
    %157 = vector.load %arg12[%c168, %c0_209] : memref<216x256xbf16, #tpu.memory_space<vmem>>, vector<8x256xbf16>
    tpu.vector_store %arg12[%c168, %c0_209], %156 {strides = array<i32>} : memref<216x256xbf16, #tpu.memory_space<vmem>>, vector<8x256xbf16>,
    %c0_210 = arith.constant 0 : index
    %c164 = arith.constant 164 : index
    %158 = vector.load %arg10[%c0_210, %c164] : memref<8x512xbf16, #tpu.memory_space<vmem>>, vector<8x256xbf16>
    %c176 = arith.constant 176 : index
    %c0_211 = arith.constant 0 : index
    %159 = vector.load %arg12[%c176, %c0_211] : memref<216x256xbf16, #tpu.memory_space<vmem>>, vector<8x256xbf16>
    tpu.vector_store %arg12[%c176, %c0_211], %158 {strides = array<i32>} : memref<216x256xbf16, #tpu.memory_space<vmem>>, vector<8x256xbf16>,
    %c0_212 = arith.constant 0 : index
    %c165 = arith.constant 165 : index
    %160 = vector.load %arg10[%c0_212, %c165] : memref<8x512xbf16, #tpu.memory_space<vmem>>, vector<8x256xbf16>
    %c184 = arith.constant 184 : index
    %c0_213 = arith.constant 0 : index
    %161 = vector.load %arg12[%c184, %c0_213] : memref<216x256xbf16, #tpu.memory_space<vmem>>, vector<8x256xbf16>
    tpu.vector_store %arg12[%c184, %c0_213], %160 {strides = array<i32>} : memref<216x256xbf16, #tpu.memory_space<vmem>>, vector<8x256xbf16>,
    %c0_214 = arith.constant 0 : index
    %c169 = arith.constant 169 : index
    %162 = vector.load %arg10[%c0_214, %c169] : memref<8x512xbf16, #tpu.memory_space<vmem>>, vector<8x256xbf16>
    %c192 = arith.constant 192 : index
    %c0_215 = arith.constant 0 : index
    %163 = vector.load %arg12[%c192, %c0_215] : memref<216x256xbf16, #tpu.memory_space<vmem>>, vector<8x256xbf16>
    tpu.vector_store %arg12[%c192, %c0_215], %162 {strides = array<i32>} : memref<216x256xbf16, #tpu.memory_space<vmem>>, vector<8x256xbf16>,
    %c0_216 = arith.constant 0 : index
    %c170 = arith.constant 170 : index
    %164 = vector.load %arg10[%c0_216, %c170] : memref<8x512xbf16, #tpu.memory_space<vmem>>, vector<8x256xbf16>
    %c200 = arith.constant 200 : index
    %c0_217 = arith.constant 0 : index
    %165 = vector.load %arg12[%c200, %c0_217] : memref<216x256xbf16, #tpu.memory_space<vmem>>, vector<8x256xbf16>
    tpu.vector_store %arg12[%c200, %c0_217], %164 {strides = array<i32>} : memref<216x256xbf16, #tpu.memory_space<vmem>>, vector<8x256xbf16>,
    %c0_218 = arith.constant 0 : index
    %c171 = arith.constant 171 : index
    %166 = vector.load %arg10[%c0_218, %c171] : memref<8x512xbf16, #tpu.memory_space<vmem>>, vector<8x256xbf16>
    %c208 = arith.constant 208 : index
    %c0_219 = arith.constant 0 : index
    %167 = vector.load %arg12[%c208, %c0_219] : memref<216x256xbf16, #tpu.memory_space<vmem>>, vector<8x256xbf16>
    tpu.vector_store %arg12[%c208, %c0_219], %166 {strides = array<i32>} : memref<216x256xbf16, #tpu.memory_space<vmem>>, vector<8x256xbf16>,
    %c0_220 = arith.constant 0 : index
    %c0_221 = arith.constant 0 : index
    %c0_222 = arith.constant 0 : index
    %168 = vector.load %arg6[%c0_220, %c0_221, %c0_222] : memref<2x16x216xbf16, #tpu.memory_space<vmem>>, vector<1x16x216xbf16>
    %169 = vector.shape_cast %168 : vector<1x16x216xbf16> to vector<16x216xbf16>
    %c0_223 = arith.constant 0 : index
    %c0_224 = arith.constant 0 : index
    %170 = vector.load %arg12[%c0_223, %c0_224] : memref<216x256xbf16, #tpu.memory_space<vmem>>, vector<216x256xbf16>
    %cst_225 = arith.constant dense<0.000000e+00> : vector<16x256xf32>
    %171 = tpu.matmul %169, %170, %cst_225 {dimension_numbers = #tpu.dot_dimension_numbers<[1], [0], [0], [1], [0, 0, 1, 1], [], []>} : vector<16x216xbf16>, vector<216x256xbf16>, vector<16x256xf32> -> vector<16x256xf32>
    %c0_226 = arith.constant 0 : index
    %c0_227 = arith.constant 0 : index
    %c0_228 = arith.constant 0 : index
    %172 = vector.load %arg7[%c0_226, %c0_227, %c0_228] : memref<2x16x1xf32, #tpu.memory_space<vmem>>, vector<1x16x1xf32>
    %173 = vector.shape_cast %172 : vector<1x16x1xf32> to vector<16x1xf32>
    %174 = vector.broadcast %173 : vector<16x1xf32> to vector<16x256xf32>
    %175 = arith.addf %171, %174 : vector<16x256xf32>
    %cst_229 = arith.constant 0.000000e+00 : f32
    %176 = vector.broadcast %cst_229 : f32 to vector<16x256xf32>
    %177 = arith.cmpf ogt, %175, %176 : vector<16x256xf32>
    %cst_230 = arith.constant 1.000000e-01 : f32
    %178 = vector.broadcast %cst_230 : f32 to vector<16x256xf32>
    %179 = arith.mulf %178, %175 : vector<16x256xf32>
    %180 = arith.select %177, %175, %179 : vector<16x256xi1>, vector<16x256xf32>
    %181 = vector.broadcast %0 : vector<1x256xf32> to vector<16x256xf32>
    %182 = arith.mulf %181, %180 : vector<16x256xf32>
    %183 = arith.addf %182, %96 : vector<16x256xf32>
    %c1_231 = arith.constant 1 : index
    %c0_232 = arith.constant 0 : index
    %c0_233 = arith.constant 0 : index
    %184 = vector.load %arg4[%c1_231, %c0_232, %c0_233] : memref<2x8x16xbf16, #tpu.memory_space<vmem>>, vector<1x8x16xbf16>
    %185 = vector.shape_cast %184 : vector<1x8x16xbf16> to vector<8x16xbf16>
    %186 = arith.truncf %183 : vector<16x256xf32> to vector<16x256xbf16>
    %cst_234 = arith.constant dense<0.000000e+00> : vector<8x256xf32>
    %187 = tpu.matmul %185, %186, %cst_234 {dimension_numbers = #tpu.dot_dimension_numbers<[1], [0], [0], [1], [0, 0, 1, 1], [], []>} : vector<8x16xbf16>, vector<16x256xbf16>, vector<8x256xf32> -> vector<8x256xf32>
    %c1_235 = arith.constant 1 : index
    %c0_236 = arith.constant 0 : index
    %c0_237 = arith.constant 0 : index
    %188 = vector.load %arg5[%c1_235, %c0_236, %c0_237] : memref<2x8x1xf32, #tpu.memory_space<vmem>>, vector<1x8x1xf32>
    %189 = vector.shape_cast %188 : vector<1x8x1xf32> to vector<8x1xf32>
    %190 = vector.broadcast %189 : vector<8x1xf32> to vector<8x256xf32>
    %191 = arith.addf %187, %190 : vector<8x256xf32>
    %cst_238 = arith.constant 0.000000e+00 : f32
    %192 = vector.broadcast %cst_238 : f32 to vector<8x256xf32>
    %193 = arith.cmpf ogt, %191, %192 : vector<8x256xf32>
    %cst_239 = arith.constant 1.000000e-01 : f32
    %194 = vector.broadcast %cst_239 : f32 to vector<8x256xf32>
    %195 = arith.mulf %194, %191 : vector<8x256xf32>
    %196 = arith.select %193, %191, %195 : vector<8x256xi1>, vector<8x256xf32>
    %197 = vector.broadcast %0 : vector<1x256xf32> to vector<8x256xf32>
    %198 = arith.mulf %197, %196 : vector<8x256xf32>
    %199 = arith.truncf %198 : vector<8x256xf32> to vector<8x256xbf16>
    %c0_240 = arith.constant 0 : index
    %c128_241 = arith.constant 128 : index
    %200 = vector.load %arg10[%c0_240, %c128_241] : memref<8x512xbf16, #tpu.memory_space<vmem>>, vector<8x256xbf16>
    tpu.vector_store %arg10[%c0_240, %c128_241], %199 {strides = array<i32>} : memref<8x512xbf16, #tpu.memory_space<vmem>>, vector<8x256xbf16>,
    %c0_242 = arith.constant 0 : index
    %c85_243 = arith.constant 85 : index
    %201 = vector.load %arg10[%c0_242, %c85_243] : memref<8x512xbf16, #tpu.memory_space<vmem>>, vector<8x256xbf16>
    %c0_244 = arith.constant 0 : index
    %c0_245 = arith.constant 0 : index
    %202 = vector.load %arg12[%c0_244, %c0_245] : memref<216x256xbf16, #tpu.memory_space<vmem>>, vector<8x256xbf16>
    tpu.vector_store %arg12[%c0_244, %c0_245], %201 {strides = array<i32>} : memref<216x256xbf16, #tpu.memory_space<vmem>>, vector<8x256xbf16>,
    %c0_246 = arith.constant 0 : index
    %c86_247 = arith.constant 86 : index
    %203 = vector.load %arg10[%c0_246, %c86_247] : memref<8x512xbf16, #tpu.memory_space<vmem>>, vector<8x256xbf16>
    %c8_248 = arith.constant 8 : index
    %c0_249 = arith.constant 0 : index
    %204 = vector.load %arg12[%c8_248, %c0_249] : memref<216x256xbf16, #tpu.memory_space<vmem>>, vector<8x256xbf16>
    tpu.vector_store %arg12[%c8_248, %c0_249], %203 {strides = array<i32>} : memref<216x256xbf16, #tpu.memory_space<vmem>>, vector<8x256xbf16>,
    %c0_250 = arith.constant 0 : index
    %c87_251 = arith.constant 87 : index
    %205 = vector.load %arg10[%c0_250, %c87_251] : memref<8x512xbf16, #tpu.memory_space<vmem>>, vector<8x256xbf16>
    %c16_252 = arith.constant 16 : index
    %c0_253 = arith.constant 0 : index
    %206 = vector.load %arg12[%c16_252, %c0_253] : memref<216x256xbf16, #tpu.memory_space<vmem>>, vector<8x256xbf16>
    tpu.vector_store %arg12[%c16_252, %c0_253], %205 {strides = array<i32>} : memref<216x256xbf16, #tpu.memory_space<vmem>>, vector<8x256xbf16>,
    %c0_254 = arith.constant 0 : index
    %c91_255 = arith.constant 91 : index
    %207 = vector.load %arg10[%c0_254, %c91_255] : memref<8x512xbf16, #tpu.memory_space<vmem>>, vector<8x256xbf16>
    %c24_256 = arith.constant 24 : index
    %c0_257 = arith.constant 0 : index
    %208 = vector.load %arg12[%c24_256, %c0_257] : memref<216x256xbf16, #tpu.memory_space<vmem>>, vector<8x256xbf16>
    tpu.vector_store %arg12[%c24_256, %c0_257], %207 {strides = array<i32>} : memref<216x256xbf16, #tpu.memory_space<vmem>>, vector<8x256xbf16>,
    %c0_258 = arith.constant 0 : index
    %c92_259 = arith.constant 92 : index
    %209 = vector.load %arg10[%c0_258, %c92_259] : memref<8x512xbf16, #tpu.memory_space<vmem>>, vector<8x256xbf16>
    %c32_260 = arith.constant 32 : index
    %c0_261 = arith.constant 0 : index
    %210 = vector.load %arg12[%c32_260, %c0_261] : memref<216x256xbf16, #tpu.memory_space<vmem>>, vector<8x256xbf16>
    tpu.vector_store %arg12[%c32_260, %c0_261], %209 {strides = array<i32>} : memref<216x256xbf16, #tpu.memory_space<vmem>>, vector<8x256xbf16>,
    %c0_262 = arith.constant 0 : index
    %c93_263 = arith.constant 93 : index
    %211 = vector.load %arg10[%c0_262, %c93_263] : memref<8x512xbf16, #tpu.memory_space<vmem>>, vector<8x256xbf16>
    %c40_264 = arith.constant 40 : index
    %c0_265 = arith.constant 0 : index
    %212 = vector.load %arg12[%c40_264, %c0_265] : memref<216x256xbf16, #tpu.memory_space<vmem>>, vector<8x256xbf16>
    tpu.vector_store %arg12[%c40_264, %c0_265], %211 {strides = array<i32>} : memref<216x256xbf16, #tpu.memory_space<vmem>>, vector<8x256xbf16>,
    %c0_266 = arith.constant 0 : index
    %c97_267 = arith.constant 97 : index
    %213 = vector.load %arg10[%c0_266, %c97_267] : memref<8x512xbf16, #tpu.memory_space<vmem>>, vector<8x256xbf16>
    %c48_268 = arith.constant 48 : index
    %c0_269 = arith.constant 0 : index
    %214 = vector.load %arg12[%c48_268, %c0_269] : memref<216x256xbf16, #tpu.memory_space<vmem>>, vector<8x256xbf16>
    tpu.vector_store %arg12[%c48_268, %c0_269], %213 {strides = array<i32>} : memref<216x256xbf16, #tpu.memory_space<vmem>>, vector<8x256xbf16>,
    %c0_270 = arith.constant 0 : index
    %c98_271 = arith.constant 98 : index
    %215 = vector.load %arg10[%c0_270, %c98_271] : memref<8x512xbf16, #tpu.memory_space<vmem>>, vector<8x256xbf16>
    %c56_272 = arith.constant 56 : index
    %c0_273 = arith.constant 0 : index
    %216 = vector.load %arg12[%c56_272, %c0_273] : memref<216x256xbf16, #tpu.memory_space<vmem>>, vector<8x256xbf16>
    tpu.vector_store %arg12[%c56_272, %c0_273], %215 {strides = array<i32>} : memref<216x256xbf16, #tpu.memory_space<vmem>>, vector<8x256xbf16>,
    %c0_274 = arith.constant 0 : index
    %c99_275 = arith.constant 99 : index
    %217 = vector.load %arg10[%c0_274, %c99_275] : memref<8x512xbf16, #tpu.memory_space<vmem>>, vector<8x256xbf16>
    %c64_276 = arith.constant 64 : index
    %c0_277 = arith.constant 0 : index
    %218 = vector.load %arg12[%c64_276, %c0_277] : memref<216x256xbf16, #tpu.memory_space<vmem>>, vector<8x256xbf16>
    tpu.vector_store %arg12[%c64_276, %c0_277], %217 {strides = array<i32>} : memref<216x256xbf16, #tpu.memory_space<vmem>>, vector<8x256xbf16>,
    %c0_278 = arith.constant 0 : index
    %c121_279 = arith.constant 121 : index
    %219 = vector.load %arg10[%c0_278, %c121_279] : memref<8x512xbf16, #tpu.memory_space<vmem>>, vector<8x256xbf16>
    %c72_280 = arith.constant 72 : index
    %c0_281 = arith.constant 0 : index
    %220 = vector.load %arg12[%c72_280, %c0_281] : memref<216x256xbf16, #tpu.memory_space<vmem>>, vector<8x256xbf16>
    tpu.vector_store %arg12[%c72_280, %c0_281], %219 {strides = array<i32>} : memref<216x256xbf16, #tpu.memory_space<vmem>>, vector<8x256xbf16>,
    %c0_282 = arith.constant 0 : index
    %c122_283 = arith.constant 122 : index
    %221 = vector.load %arg10[%c0_282, %c122_283] : memref<8x512xbf16, #tpu.memory_space<vmem>>, vector<8x256xbf16>
    %c80_284 = arith.constant 80 : index
    %c0_285 = arith.constant 0 : index
    %222 = vector.load %arg12[%c80_284, %c0_285] : memref<216x256xbf16, #tpu.memory_space<vmem>>, vector<8x256xbf16>
    tpu.vector_store %arg12[%c80_284, %c0_285], %221 {strides = array<i32>} : memref<216x256xbf16, #tpu.memory_space<vmem>>, vector<8x256xbf16>,
    %c0_286 = arith.constant 0 : index
    %c123_287 = arith.constant 123 : index
    %223 = vector.load %arg10[%c0_286, %c123_287] : memref<8x512xbf16, #tpu.memory_space<vmem>>, vector<8x256xbf16>
    %c88_288 = arith.constant 88 : index
    %c0_289 = arith.constant 0 : index
    %224 = vector.load %arg12[%c88_288, %c0_289] : memref<216x256xbf16, #tpu.memory_space<vmem>>, vector<8x256xbf16>
    tpu.vector_store %arg12[%c88_288, %c0_289], %223 {strides = array<i32>} : memref<216x256xbf16, #tpu.memory_space<vmem>>, vector<8x256xbf16>,
    %c0_290 = arith.constant 0 : index
    %c127_291 = arith.constant 127 : index
    %225 = vector.load %arg10[%c0_290, %c127_291] : memref<8x512xbf16, #tpu.memory_space<vmem>>, vector<8x256xbf16>
    %c96_292 = arith.constant 96 : index
    %c0_293 = arith.constant 0 : index
    %226 = vector.load %arg12[%c96_292, %c0_293] : memref<216x256xbf16, #tpu.memory_space<vmem>>, vector<8x256xbf16>
    tpu.vector_store %arg12[%c96_292, %c0_293], %225 {strides = array<i32>} : memref<216x256xbf16, #tpu.memory_space<vmem>>, vector<8x256xbf16>,
    %c0_294 = arith.constant 0 : index
    %c128_295 = arith.constant 128 : index
    %227 = vector.load %arg10[%c0_294, %c128_295] : memref<8x512xbf16, #tpu.memory_space<vmem>>, vector<8x256xbf16>
    %c104_296 = arith.constant 104 : index
    %c0_297 = arith.constant 0 : index
    %228 = vector.load %arg12[%c104_296, %c0_297] : memref<216x256xbf16, #tpu.memory_space<vmem>>, vector<8x256xbf16>
    tpu.vector_store %arg12[%c104_296, %c0_297], %227 {strides = array<i32>} : memref<216x256xbf16, #tpu.memory_space<vmem>>, vector<8x256xbf16>,
    %c0_298 = arith.constant 0 : index
    %c129_299 = arith.constant 129 : index
    %229 = vector.load %arg10[%c0_298, %c129_299] : memref<8x512xbf16, #tpu.memory_space<vmem>>, vector<8x256xbf16>
    %c112_300 = arith.constant 112 : index
    %c0_301 = arith.constant 0 : index
    %230 = vector.load %arg12[%c112_300, %c0_301] : memref<216x256xbf16, #tpu.memory_space<vmem>>, vector<8x256xbf16>
    tpu.vector_store %arg12[%c112_300, %c0_301], %229 {strides = array<i32>} : memref<216x256xbf16, #tpu.memory_space<vmem>>, vector<8x256xbf16>,
    %c0_302 = arith.constant 0 : index
    %c133_303 = arith.constant 133 : index
    %231 = vector.load %arg10[%c0_302, %c133_303] : memref<8x512xbf16, #tpu.memory_space<vmem>>, vector<8x256xbf16>
    %c120_304 = arith.constant 120 : index
    %c0_305 = arith.constant 0 : index
    %232 = vector.load %arg12[%c120_304, %c0_305] : memref<216x256xbf16, #tpu.memory_space<vmem>>, vector<8x256xbf16>
    tpu.vector_store %arg12[%c120_304, %c0_305], %231 {strides = array<i32>} : memref<216x256xbf16, #tpu.memory_space<vmem>>, vector<8x256xbf16>,
    %c0_306 = arith.constant 0 : index
    %c134_307 = arith.constant 134 : index
    %233 = vector.load %arg10[%c0_306, %c134_307] : memref<8x512xbf16, #tpu.memory_space<vmem>>, vector<8x256xbf16>
    %c128_308 = arith.constant 128 : index
    %c0_309 = arith.constant 0 : index
    %234 = vector.load %arg12[%c128_308, %c0_309] : memref<216x256xbf16, #tpu.memory_space<vmem>>, vector<8x256xbf16>
    tpu.vector_store %arg12[%c128_308, %c0_309], %233 {strides = array<i32>} : memref<216x256xbf16, #tpu.memory_space<vmem>>, vector<8x256xbf16>,
    %c0_310 = arith.constant 0 : index
    %c135_311 = arith.constant 135 : index
    %235 = vector.load %arg10[%c0_310, %c135_311] : memref<8x512xbf16, #tpu.memory_space<vmem>>, vector<8x256xbf16>
    %c136_312 = arith.constant 136 : index
    %c0_313 = arith.constant 0 : index
    %236 = vector.load %arg12[%c136_312, %c0_313] : memref<216x256xbf16, #tpu.memory_space<vmem>>, vector<8x256xbf16>
    tpu.vector_store %arg12[%c136_312, %c0_313], %235 {strides = array<i32>} : memref<216x256xbf16, #tpu.memory_space<vmem>>, vector<8x256xbf16>,
    %c0_314 = arith.constant 0 : index
    %c157_315 = arith.constant 157 : index
    %237 = vector.load %arg10[%c0_314, %c157_315] : memref<8x512xbf16, #tpu.memory_space<vmem>>, vector<8x256xbf16>
    %c144_316 = arith.constant 144 : index
    %c0_317 = arith.constant 0 : index
    %238 = vector.load %arg12[%c144_316, %c0_317] : memref<216x256xbf16, #tpu.memory_space<vmem>>, vector<8x256xbf16>
    tpu.vector_store %arg12[%c144_316, %c0_317], %237 {strides = array<i32>} : memref<216x256xbf16, #tpu.memory_space<vmem>>, vector<8x256xbf16>,
    %c0_318 = arith.constant 0 : index
    %c158_319 = arith.constant 158 : index
    %239 = vector.load %arg10[%c0_318, %c158_319] : memref<8x512xbf16, #tpu.memory_space<vmem>>, vector<8x256xbf16>
    %c152_320 = arith.constant 152 : index
    %c0_321 = arith.constant 0 : index
    %240 = vector.load %arg12[%c152_320, %c0_321] : memref<216x256xbf16, #tpu.memory_space<vmem>>, vector<8x256xbf16>
    tpu.vector_store %arg12[%c152_320, %c0_321], %239 {strides = array<i32>} : memref<216x256xbf16, #tpu.memory_space<vmem>>, vector<8x256xbf16>,
    %c0_322 = arith.constant 0 : index
    %c159_323 = arith.constant 159 : index
    %241 = vector.load %arg10[%c0_322, %c159_323] : memref<8x512xbf16, #tpu.memory_space<vmem>>, vector<8x256xbf16>
    %c160_324 = arith.constant 160 : index
    %c0_325 = arith.constant 0 : index
    %242 = vector.load %arg12[%c160_324, %c0_325] : memref<216x256xbf16, #tpu.memory_space<vmem>>, vector<8x256xbf16>
    tpu.vector_store %arg12[%c160_324, %c0_325], %241 {strides = array<i32>} : memref<216x256xbf16, #tpu.memory_space<vmem>>, vector<8x256xbf16>,
    %c0_326 = arith.constant 0 : index
    %c163_327 = arith.constant 163 : index
    %243 = vector.load %arg10[%c0_326, %c163_327] : memref<8x512xbf16, #tpu.memory_space<vmem>>, vector<8x256xbf16>
    %c168_328 = arith.constant 168 : index
    %c0_329 = arith.constant 0 : index
    %244 = vector.load %arg12[%c168_328, %c0_329] : memref<216x256xbf16, #tpu.memory_space<vmem>>, vector<8x256xbf16>
    tpu.vector_store %arg12[%c168_328, %c0_329], %243 {strides = array<i32>} : memref<216x256xbf16, #tpu.memory_space<vmem>>, vector<8x256xbf16>,
    %c0_330 = arith.constant 0 : index
    %c164_331 = arith.constant 164 : index
    %245 = vector.load %arg10[%c0_330, %c164_331] : memref<8x512xbf16, #tpu.memory_space<vmem>>, vector<8x256xbf16>
    %c176_332 = arith.constant 176 : index
    %c0_333 = arith.constant 0 : index
    %246 = vector.load %arg12[%c176_332, %c0_333] : memref<216x256xbf16, #tpu.memory_space<vmem>>, vector<8x256xbf16>
    tpu.vector_store %arg12[%c176_332, %c0_333], %245 {strides = array<i32>} : memref<216x256xbf16, #tpu.memory_space<vmem>>, vector<8x256xbf16>,
    %c0_334 = arith.constant 0 : index
    %c165_335 = arith.constant 165 : index
    %247 = vector.load %arg10[%c0_334, %c165_335] : memref<8x512xbf16, #tpu.memory_space<vmem>>, vector<8x256xbf16>
    %c184_336 = arith.constant 184 : index
    %c0_337 = arith.constant 0 : index
    %248 = vector.load %arg12[%c184_336, %c0_337] : memref<216x256xbf16, #tpu.memory_space<vmem>>, vector<8x256xbf16>
    tpu.vector_store %arg12[%c184_336, %c0_337], %247 {strides = array<i32>} : memref<216x256xbf16, #tpu.memory_space<vmem>>, vector<8x256xbf16>,
    %c0_338 = arith.constant 0 : index
    %c169_339 = arith.constant 169 : index
    %249 = vector.load %arg10[%c0_338, %c169_339] : memref<8x512xbf16, #tpu.memory_space<vmem>>, vector<8x256xbf16>
    %c192_340 = arith.constant 192 : index
    %c0_341 = arith.constant 0 : index
    %250 = vector.load %arg12[%c192_340, %c0_341] : memref<216x256xbf16, #tpu.memory_space<vmem>>, vector<8x256xbf16>
    tpu.vector_store %arg12[%c192_340, %c0_341], %249 {strides = array<i32>} : memref<216x256xbf16, #tpu.memory_space<vmem>>, vector<8x256xbf16>,
    %c0_342 = arith.constant 0 : index
    %c170_343 = arith.constant 170 : index
    %251 = vector.load %arg10[%c0_342, %c170_343] : memref<8x512xbf16, #tpu.memory_space<vmem>>, vector<8x256xbf16>
    %c200_344 = arith.constant 200 : index
    %c0_345 = arith.constant 0 : index
    %252 = vector.load %arg12[%c200_344, %c0_345] : memref<216x256xbf16, #tpu.memory_space<vmem>>, vector<8x256xbf16>
    tpu.vector_store %arg12[%c200_344, %c0_345], %251 {strides = array<i32>} : memref<216x256xbf16, #tpu.memory_space<vmem>>, vector<8x256xbf16>,
    %c0_346 = arith.constant 0 : index
    %c171_347 = arith.constant 171 : index
    %253 = vector.load %arg10[%c0_346, %c171_347] : memref<8x512xbf16, #tpu.memory_space<vmem>>, vector<8x256xbf16>
    %c208_348 = arith.constant 208 : index
    %c0_349 = arith.constant 0 : index
    %254 = vector.load %arg12[%c208_348, %c0_349] : memref<216x256xbf16, #tpu.memory_space<vmem>>, vector<8x256xbf16>
    tpu.vector_store %arg12[%c208_348, %c0_349], %253 {strides = array<i32>} : memref<216x256xbf16, #tpu.memory_space<vmem>>, vector<8x256xbf16>,
    %c1_350 = arith.constant 1 : index
    %c0_351 = arith.constant 0 : index
    %c0_352 = arith.constant 0 : index
    %255 = vector.load %arg6[%c1_350, %c0_351, %c0_352] : memref<2x16x216xbf16, #tpu.memory_space<vmem>>, vector<1x16x216xbf16>
    %256 = vector.shape_cast %255 : vector<1x16x216xbf16> to vector<16x216xbf16>
    %c0_353 = arith.constant 0 : index
    %c0_354 = arith.constant 0 : index
    %257 = vector.load %arg12[%c0_353, %c0_354] : memref<216x256xbf16, #tpu.memory_space<vmem>>, vector<216x256xbf16>
    %cst_355 = arith.constant dense<0.000000e+00> : vector<16x256xf32>
    %258 = tpu.matmul %256, %257, %cst_355 {dimension_numbers = #tpu.dot_dimension_numbers<[1], [0], [0], [1], [0, 0, 1, 1], [], []>} : vector<16x216xbf16>, vector<216x256xbf16>, vector<16x256xf32> -> vector<16x256xf32>
    %c1_356 = arith.constant 1 : index
    %c0_357 = arith.constant 0 : index
    %c0_358 = arith.constant 0 : index
    %259 = vector.load %arg7[%c1_356, %c0_357, %c0_358] : memref<2x16x1xf32, #tpu.memory_space<vmem>>, vector<1x16x1xf32>
    %260 = vector.shape_cast %259 : vector<1x16x1xf32> to vector<16x1xf32>
    %261 = vector.broadcast %260 : vector<16x1xf32> to vector<16x256xf32>
    %262 = arith.addf %258, %261 : vector<16x256xf32>
    %cst_359 = arith.constant 0.000000e+00 : f32
    %263 = vector.broadcast %cst_359 : f32 to vector<16x256xf32>
    %264 = arith.cmpf ogt, %262, %263 : vector<16x256xf32>
    %cst_360 = arith.constant 1.000000e-01 : f32
    %265 = vector.broadcast %cst_360 : f32 to vector<16x256xf32>
    %266 = arith.mulf %265, %262 : vector<16x256xf32>
    %267 = arith.select %264, %262, %266 : vector<16x256xi1>, vector<16x256xf32>
    %268 = vector.broadcast %0 : vector<1x256xf32> to vector<16x256xf32>
    %269 = arith.mulf %268, %267 : vector<16x256xf32>
    %270 = arith.addf %269, %183 : vector<16x256xf32>
    %c0_361 = arith.constant 0 : index
    %c0_362 = arith.constant 0 : index
    %c0_363 = arith.constant 0 : index
    %271 = vector.load %arg9[%c0_361, %c0_362, %c0_363] : memref<1x16x256xf32, #tpu.memory_space<vmem>>, vector<1x16x256xf32>
    %272 = vector.shape_cast %271 : vector<1x16x256xf32> to vector<16x256xf32>
    %273 = vector.shape_cast %270 : vector<16x256xf32> to vector<1x16x256xf32>
    tpu.vector_store %arg9[%c0_361, %c0_362, %c0_363], %273 {strides = array<i32>} : memref<1x16x256xf32, #tpu.memory_space<vmem>>, vector<1x16x256xf32>,
    return
  }
  func.func @transform_0(%arg0: i32) -> (i32, i32, i32, i32) {
    %c0_i32 = arith.constant 0 : i32
    %c0_i32_0 = arith.constant 0 : i32
    %c0_i32_1 = arith.constant 0 : i32
    %c0_i32_2 = arith.constant 0 : i32
    return %arg0, %c0_i32, %c0_i32_0, %c0_i32_1 : i32, i32, i32, i32
  }
  func.func @transform_1(%arg0: i32) -> (i32, i32) {
    %c0_i32 = arith.constant 0 : i32
    %c0_i32_0 = arith.constant 0 : i32
    %c0_i32_1 = arith.constant 0 : i32
    return %c0_i32, %c0_i32_0 : i32, i32
  }
  func.func @transform_2(%arg0: i32) -> (i32, i32) {
    %c0_i32 = arith.constant 0 : i32
    %c0_i32_0 = arith.constant 0 : i32
    %c0_i32_1 = arith.constant 0 : i32
    return %c0_i32, %c0_i32_0 : i32, i32
  }
  func.func @transform_3(%arg0: i32) -> (i32, i32, i32) {
    %c0_i32 = arith.constant 0 : i32
    %c0_i32_0 = arith.constant 0 : i32
    %c0_i32_1 = arith.constant 0 : i32
    %c0_i32_2 = arith.constant 0 : i32
    return %c0_i32, %c0_i32_0, %c0_i32_1 : i32, i32, i32
  }
  func.func @transform_4(%arg0: i32) -> (i32, i32, i32) {
    %c0_i32 = arith.constant 0 : i32
    %c0_i32_0 = arith.constant 0 : i32
    %c0_i32_1 = arith.constant 0 : i32
    %c0_i32_2 = arith.constant 0 : i32
    return %c0_i32, %c0_i32_0, %c0_i32_1 : i32, i32, i32
  }
  func.func @transform_5(%arg0: i32) -> (i32, i32, i32) {
    %c0_i32 = arith.constant 0 : i32
    %c0_i32_0 = arith.constant 0 : i32
    %c0_i32_1 = arith.constant 0 : i32
    %c0_i32_2 = arith.constant 0 : i32
    return %c0_i32, %c0_i32_0, %c0_i32_1 : i32, i32, i32
  }
  func.func @transform_6(%arg0: i32) -> (i32, i32, i32) {
    %c0_i32 = arith.constant 0 : i32
    %c0_i32_0 = arith.constant 0 : i32
    %c0_i32_1 = arith.constant 0 : i32
    %c0_i32_2 = arith.constant 0 : i32
    return %c0_i32, %c0_i32_0, %c0_i32_1 : i32, i32, i32
  }
  func.func @transform_7(%arg0: i32) -> (i32, i32) {
    %c0_i32 = arith.constant 0 : i32
    %c0_i32_0 = arith.constant 0 : i32
    %c0_i32_1 = arith.constant 0 : i32
    return %c0_i32, %c0_i32_0 : i32, i32
  }
  func.func @transform_8(%arg0: i32) -> (i32, i32, i32) {
    %c0_i32 = arith.constant 0 : i32
    %c0_i32_0 = arith.constant 0 : i32
    %c0_i32_1 = arith.constant 0 : i32
    return %arg0, %c0_i32, %c0_i32_0 : i32, i32, i32
  }
}

</mosaic_0001>

<llo_original>
// kernel: down_block_forward.1
$region0: #{down_block_forward.1}
  #allocation0 [shape = 'u32[]', space=smem, size = 0x4, offset = 0x4, fixed_abs, tag = 'smem constant byte address 0x4 - core index']
  #allocation1 [shape = 'u32[144,128]{1,0:T(1,128)}', space=vmem, size = 0x12000, scoped, tag = 'internal scratch']
  #allocation2 [shape = 'bf16[8,512]{1,0:T(8,128)(2,1)}', space=vmem, size = 0x2000, scoped, tag = 'scratch operand']
  #allocation3 [shape = 'bf16[108,256]{1,0:T(8,128)(2,1)}', space=vmem, size = 0xe000, scoped, tag = 'scratch operand']
  #allocation4 [shape = 'bf16[216,256]{1,0:T(8,128)(2,1)}', space=vmem, size = 0x1b000, scoped, tag = 'scratch operand']
  %s0 = inlined_call_operand.vmem [shape: bf16[2,8,4,384], index: 0, kind: input, shape index: {}]
  %s1 = inlined_call_operand.vmem [shape: bf16[16,108], index: 1, kind: input, shape index: {}]
  %s2 = inlined_call_operand.vmem [shape: f32[16,1], index: 2, kind: input, shape index: {}]
  %s3 = inlined_call_operand.vmem [shape: bf16[2,8,16], index: 3, kind: input, shape index: {}]
  %s4 = inlined_call_operand.vmem [shape: f32[2,8,1], index: 4, kind: input, shape index: {}]
  %s5 = inlined_call_operand.vmem [shape: bf16[2,16,216], index: 5, kind: input, shape index: {}]
  %s6 = inlined_call_operand.vmem [shape: f32[2,16,1], index: 6, kind: input, shape index: {}]
  %s7 = inlined_call_operand.vmem [shape: f32[1,256], index: 7, kind: input, shape index: {}]
  %s8 = inlined_call_operand.vmem [shape: f32[2,16,256], index: 8, kind: output, shape index: {}]
  %s9 = sld [smem:[#allocation0]]
  $region65: #{down_block_forward.1} parent=0
    _
  %s11 = ssub.s32 1, %s9
  %s12 = scalar_select 0, %s11, %s9
  loop: start=0, step=1, limit=4
  $region2: #{down_block_forward.1} parent=0 // loop_pre_header
    _
  $region3: #{down_block_forward.1} parent=0 // loop_header
    %s14 = sphi 0, %s18
    %p15 = scmp.ge.s32.totalorder %s14, 4
    %s24 = sphi 0, %s26
    %s27 = sphi 0, %s24
    %s28 = sphi 0, %s27
    %s44 = sphi 0, %s28
    %s48 = sphi 0, %s48
    %s50 = sphi 0, %s48
    %s51 = sphi 0, %s50
    %s65 = sphi 0, %s51
    %s69 = sphi 0, %s69
    %s71 = sphi 0, %s69
    %s72 = sphi 0, %s71
    %s86 = sphi 0, %s72
    %s90 = sphi 0, %s90
    %s92 = sphi 0, %s90
    %s93 = sphi 0, %s92
    %s107 = sphi 0, %s93
    %s111 = sphi 0, %s111
    %s113 = sphi 0, %s111
    %s114 = sphi 0, %s113
    %s128 = sphi 0, %s114
    %s132 = sphi 0, %s132
    %s134 = sphi 0, %s132
    %s135 = sphi 0, %s134
    %s149 = sphi 0, %s135
    %s153 = sphi 0, %s153
    %s155 = sphi 0, %s153
    %s156 = sphi 0, %s155
    %s170 = sphi 0, %s156
    %s174 = sphi 0, %s174
    %s176 = sphi 0, %s174
    %s177 = sphi 0, %s176
    %s191 = sphi 0, %s177
    %s197 = sphi 0, %s199
    %s200 = sphi 0, %s197
    %s201 = sphi 0, %s200
    %s217 = sphi 0, %s201
  $region4: #{down_block_forward.1} parent=0 // loop_header_branch
    %17 = sbr.rel (%p15) target = $region8
  $region5: #{down_block_forward.1} parent=0 // loop_body
    %s19 = ssub.s32 %s14, 1
    %s20 = ssub.s32 %s14, 2
    %s21 = sadd.s32 %s14, 1
    %s22 = ssub.s32 %s14, %s21
    %p23 = scmp.eq.s32.totalorder %s22, 0
    %s25 = sadd.s32 %s24, 1
    %s26 = scalar_select %p23, %s24, %s25
    %p29 = pneg %p23
    %p30 = scmp.eq.s32.totalorder %s14, 1
    %p31 = por %p29, %p30
    %p32 = scmp.ne.s32.totalorder %s24, %s27
    %p33 = scmp.eq.s32.totalorder %s14, 0
    %p34 = por %p32, %p33
    %p35 = scmp.ne.s32.totalorder %s24, %s27
    %p36 = scmp.eq.s32.totalorder %s19, 1
    %p37 = por %p35, %p36
    %p38 = scmp.ne.s32.totalorder %s27, %s28
    %p39 = scmp.eq.s32.totalorder %s19, 0
    %p40 = por %p38, %p39
    %p41 = scmp.ne.s32.totalorder %s27, %s28
    %p42 = scmp.eq.s32.totalorder %s20, 1
    %p43 = por %p41, %p42
    %p45 = scmp.ne.s32.totalorder %s28, %s44
    %p46 = scmp.eq.s32.totalorder %s20, 0
    %p47 = por %p45, %p46
    %s49 = sadd.s32 %s48, 1
    %p52 = scmp.eq.s32.totalorder %s14, 1
    %p53 = scmp.ne.s32.totalorder %s48, %s50
    %p54 = scmp.eq.s32.totalorder %s14, 0
    %p55 = por %p53, %p54
    %p56 = scmp.ne.s32.totalorder %s48, %s50
    %p57 = scmp.eq.s32.totalorder %s19, 1
    %p58 = por %p56, %p57
    %p59 = scmp.ne.s32.totalorder %s50, %s51
    %p60 = scmp.eq.s32.totalorder %s19, 0
    %p61 = por %p59, %p60
    %p62 = scmp.ne.s32.totalorder %s50, %s51
    %p63 = scmp.eq.s32.totalorder %s20, 1
    %p64 = por %p62, %p63
    %p66 = scmp.ne.s32.totalorder %s51, %s65
    %p67 = scmp.eq.s32.totalorder %s20, 0
    %p68 = por %p66, %p67
    %s70 = sadd.s32 %s69, 1
    %p73 = scmp.eq.s32.totalorder %s14, 1
    %p74 = scmp.ne.s32.totalorder %s69, %s71
    %p75 = scmp.eq.s32.totalorder %s14, 0
    %p76 = por %p74, %p75
    %p77 = scmp.ne.s32.totalorder %s69, %s71
    %p78 = scmp.eq.s32.totalorder %s19, 1
    %p79 = por %p77, %p78
    %p80 = scmp.ne.s32.totalorder %s71, %s72
    %p81 = scmp.eq.s32.totalorder %s19, 0
    %p82 = por %p80, %p81
    %p83 = scmp.ne.s32.totalorder %s71, %s72
    %p84 = scmp.eq.s32.totalorder %s20, 1
    %p85 = por %p83, %p84
    %p87 = scmp.ne.s32.totalorder %s72, %s86
    %p88 = scmp.eq.s32.totalorder %s20, 0
    %p89 = por %p87, %p88
    %s91 = sadd.s32 %s90, 1
    %p94 = scmp.eq.s32.totalorder %s14, 1
    %p95 = scmp.ne.s32.totalorder %s90, %s92
    %p96 = scmp.eq.s32.totalorder %s14, 0
    %p97 = por %p95, %p96
    %p98 = scmp.ne.s32.totalorder %s90, %s92
    %p99 = scmp.eq.s32.totalorder %s19, 1
    %p100 = por %p98, %p99
    %p101 = scmp.ne.s32.totalorder %s92, %s93
    %p102 = scmp.eq.s32.totalorder %s19, 0
    %p103 = por %p101, %p102
    %p104 = scmp.ne.s32.totalorder %s92, %s93
    %p105 = scmp.eq.s32.totalorder %s20, 1
    %p106 = por %p104, %p105
    %p108 = scmp.ne.s32.totalorder %s93, %s107
    %p109 = scmp.eq.s32.totalorder %s20, 0
    %p110 = por %p108, %p109
    %s112 = sadd.s32 %s111, 1
    %p115 = scmp.eq.s32.totalorder %s14, 1
    %p116 = scmp.ne.s32.totalorder %s111, %s113
    %p117 = scmp.eq.s32.totalorder %s14, 0
    %p118 = por %p116, %p117
    %p119 = scmp.ne.s32.totalorder %s111, %s113
    %p120 = scmp.eq.s32.totalorder %s19, 1
    %p121 = por %p119, %p120
    %p122 = scmp.ne.s32.totalorder %s113, %s114
    %p123 = scmp.eq.s32.totalorder %s19, 0
    %p124 = por %p122, %p123
    %p125 = scmp.ne.s32.totalorder %s113, %s114
    %p126 = scmp.eq.s32.totalorder %s20, 1
    %p127 = por %p125, %p126
    %p129 = scmp.ne.s32.totalorder %s114, %s128
    %p130 = scmp.eq.s32.totalorder %s20, 0
    %p131 = por %p129, %p130
    %s133 = sadd.s32 %s132, 1
    %p136 = scmp.eq.s32.totalorder %s14, 1
    %p137 = scmp.ne.s32.totalorder %s132, %s134
    %p138 = scmp.eq.s32.totalorder %s14, 0
    %p139 = por %p137, %p138
    %p140 = scmp.ne.s32.totalorder %s132, %s134
    %p141 = scmp.eq.s32.totalorder %s19, 1
    %p142 = por %p140, %p141
    %p143 = scmp.ne.s32.totalorder %s134, %s135
    %p144 = scmp.eq.s32.totalorder %s19, 0
    %p145 = por %p143, %p144
    %p146 = scmp.ne.s32.totalorder %s134, %s135
    %p147 = scmp.eq.s32.totalorder %s20, 1
    %p148 = por %p146, %p147
    %p150 = scmp.ne.s32.totalorder %s135, %s149
    %p151 = scmp.eq.s32.totalorder %s20, 0
    %p152 = por %p150, %p151
    %s154 = sadd.s32 %s153, 1
    %p157 = scmp.eq.s32.totalorder %s14, 1
    %p158 = scmp.ne.s32.totalorder %s153, %s155
    %p159 = scmp.eq.s32.totalorder %s14, 0
    %p160 = por %p158, %p159
    %p161 = scmp.ne.s32.totalorder %s153, %s155
    %p162 = scmp.eq.s32.totalorder %s19, 1
    %p163 = por %p161, %p162
    %p164 = scmp.ne.s32.totalorder %s155, %s156
    %p165 = scmp.eq.s32.totalorder %s19, 0
    %p166 = por %p164, %p165
    %p167 = scmp.ne.s32.totalorder %s155, %s156
    %p168 = scmp.eq.s32.totalorder %s20, 1
    %p169 = por %p167, %p168
    %p171 = scmp.ne.s32.totalorder %s156, %s170
    %p172 = scmp.eq.s32.totalorder %s20, 0
    %p173 = por %p171, %p172
    %s175 = sadd.s32 %s174, 1
    %p178 = scmp.eq.s32.totalorder %s14, 1
    %p179 = scmp.ne.s32.totalorder %s174, %s176
    %p180 = scmp.eq.s32.totalorder %s14, 0
    %p181 = por %p179, %p180
    %p182 = scmp.ne.s32.totalorder %s174, %s176
    %p183 = scmp.eq.s32.totalorder %s19, 1
    %p184 = por %p182, %p183
    %p185 = scmp.ne.s32.totalorder %s176, %s177
    %p186 = scmp.eq.s32.totalorder %s19, 0
    %p187 = por %p185, %p186
    %p188 = scmp.ne.s32.totalorder %s176, %s177
    %p189 = scmp.eq.s32.totalorder %s20, 1
    %p190 = por %p188, %p189
    %p192 = scmp.ne.s32.totalorder %s177, %s191
    %p193 = scmp.eq.s32.totalorder %s20, 0
    %p194 = por %p192, %p193
    %s195 = ssub.s32 %s14, %s21
    %p196 = scmp.eq.s32.totalorder %s195, 0
    %s198 = sadd.s32 %s197, 1
    %s199 = scalar_select %p196, %s197, %s198
    %p202 = pneg %p196
    %p203 = scmp.eq.s32.totalorder %s14, 1
    %p204 = por %p202, %p203
    %p205 = scmp.ne.s32.totalorder %s197, %s200
    %p206 = scmp.eq.s32.totalorder %s14, 0
    %p207 = por %p205, %p206
    %p208 = scmp.ne.s32.totalorder %s197, %s200
    %p209 = scmp.eq.s32.totalorder %s19, 1
    %p210 = por %p208, %p209
    %p211 = scmp.ne.s32.totalorder %s200, %s201
    %p212 = scmp.eq.s32.totalorder %s19, 0
    %p213 = por %p211, %p212
    %p214 = scmp.ne.s32.totalorder %s200, %s201
    %p215 = scmp.eq.s32.totalorder %s20, 1
    %p216 = por %p214, %p215
    %p218 = scmp.ne.s32.totalorder %s201, %s217
    %p219 = scmp.eq.s32.totalorder %s20, 0
    %p220 = por %p218, %p219
    %p221 = scmp.le.s32.totalorder 1, %s14
    %p222 = scmp.lt.s32.totalorder %s14, 3
    %p223 = pnand %p221, %p222
    %p224 = pneg %p223
    // Predicated region
    $region9: #{down_block_forward.1} parent=5 // pred_check
      _
    $region10: #{down_block_forward.1} parent=5 // pred_check_branch
      %226 = sbr.rel (%p223) target = $region12
    $region11: #{down_block_forward.1} parent=5 // pred_region
      %s227 = ssub.s32 %s14, 1
      // Predicated region
      $region13: #{down_block_forward.1} parent=11 // pred_check
        %p228 = pneg %p61
      $region14: #{down_block_forward.1} parent=11 // pred_check_branch
        %230 = sbr.rel (%p228) target = $region16
      $region15: #{down_block_forward.1} parent=11 // pred_region
        _
      $region16: #{down_block_forward.1} parent=11 // pred_fallthru
        _
      // Predicated region
      $region17: #{down_block_forward.1} parent=11 // pred_check
        %p231 = pneg %p82
      $region18: #{down_block_forward.1} parent=11 // pred_check_branch
        %233 = sbr.rel (%p231) target = $region20
      $region19: #{down_block_forward.1} parent=11 // pred_region
        _
      $region20: #{down_block_forward.1} parent=11 // pred_fallthru
        _
      // Predicated region
      $region21: #{down_block_forward.1} parent=11 // pred_check
        %p234 = pneg %p103
      $region22: #{down_block_forward.1} parent=11 // pred_check_branch
        %236 = sbr.rel (%p234) target = $region24
      $region23: #{down_block_forward.1} parent=11 // pred_region
        _
      $region24: #{down_block_forward.1} parent=11 // pred_fallthru
        _
      // Predicated region
      $region25: #{down_block_forward.1} parent=11 // pred_check
        %p237 = pneg %p124
      $region26: #{down_block_forward.1} parent=11 // pred_check_branch
        %239 = sbr.rel (%p237) target = $region28
      $region27: #{down_block_forward.1} parent=11 // pred_region
        _
      $region28: #{down_block_forward.1} parent=11 // pred_fallthru
        _
      // Predicated region
      $region29: #{down_block_forward.1} parent=11 // pred_check
        %p240 = pneg %p145
      $region30: #{down_block_forward.1} parent=11 // pred_check_branch
        %242 = sbr.rel (%p240) target = $region32
      $region31: #{down_block_forward.1} parent=11 // pred_region
        _
      $region32: #{down_block_forward.1} parent=11 // pred_fallthru
        _
      // Predicated region
      $region33: #{down_block_forward.1} parent=11 // pred_check
        %p243 = pneg %p166
      $region34: #{down_block_forward.1} parent=11 // pred_check_branch
        %245 = sbr.rel (%p243) target = $region36
      $region35: #{down_block_forward.1} parent=11 // pred_region
        _
      $region36: #{down_block_forward.1} parent=11 // pred_fallthru
        _
      // Predicated region
      $region37: #{down_block_forward.1} parent=11 // pred_check
        %p246 = pneg %p187
      $region38: #{down_block_forward.1} parent=11 // pred_check_branch
        %248 = sbr.rel (%p246) target = $region40
      $region39: #{down_block_forward.1} parent=11 // pred_region
        _
      $region40: #{down_block_forward.1} parent=11 // pred_fallthru
        _
    $region12: #{down_block_forward.1} parent=5 // pred_fallthru
      _
    %p249 = scmp.lt.s32.totalorder %s14, 2
    // Predicated region
    $region41: #{down_block_forward.1} parent=5 // pred_check
      %p250 = pneg %p249
    $region42: #{down_block_forward.1} parent=5 // pred_check_branch
      %252 = sbr.rel (%p250) target = $region44
    $region43: #{down_block_forward.1} parent=5 // pred_region
      // Predicated region
      $region45: #{down_block_forward.1} parent=43 // pred_check
        %p253 = pneg %p34
      $region46: #{down_block_forward.1} parent=43 // pred_check_branch
        %255 = sbr.rel (%p253) target = $region48
      $region47: #{down_block_forward.1} parent=43 // pred_region
        %p256 = scmp.lt.s32.totalorder %s14, 1
        %s257 = scalar_select %p256, %s14, 1
        %s258 = smul.addr %s257, 24
        %s259 = smul.addr %s258, 2
        %s260 = scalar_lea.vmem %s0, %s259
      $region48: #{down_block_forward.1} parent=43 // pred_fallthru
        _
    $region44: #{down_block_forward.1} parent=5 // pred_fallthru
      _
    %p261 = scmp.le.s32.totalorder 1, %s14
    %p262 = scmp.lt.s32.totalorder %s14, 3
    %p263 = pnand %p261, %p262
    %p264 = pneg %p263
    // Predicated region
    $region49: #{down_block_forward.1} parent=5 // pred_check
      _
    $region50: #{down_block_forward.1} parent=5 // pred_check_branch
      %266 = sbr.rel (%p263) target = $region52
    $region51: #{down_block_forward.1} parent=5 // pred_region
      %s267 = ssub.s32 %s14, 1
      %p268 = scmp.lt.s32.totalorder %s19, 1
      %s269 = scalar_select %p268, %s19, 1
      %s270 = smul.addr %s269, 24
      %s271 = smul.addr %s270, 2
      %s272 = scalar_lea.vmem %s0, %s271
      %p273 = pneg %p40
      %p274 = pneg %p37
      %p275 = pneg %p61
      %p276 = pneg %p58
      %p277 = pneg %p82
      %p278 = pneg %p79
      %p279 = pneg %p103
      %p280 = pneg %p100
      %p281 = pneg %p124
      %p282 = pneg %p121
      %p283 = pneg %p145
      %p284 = pneg %p142
      %p285 = pneg %p166
      %p286 = pneg %p163
      %p287 = pneg %p187
      %p288 = pneg %p184
      %p289 = pneg %p213
      %p290 = pneg %p210
      %p291 = scmp.lt.s32.totalorder %s19, 1
      %s292 = scalar_select %p291, %s19, 1
      %s293 = smul.addr %s292, 4
      %s294 = smul.addr %s293, 8
      %s295 = scalar_lea.vmem %s8, %s294
      %p296 = scmp.lt.s32.totalorder %s19, 1
      %s297 = scalar_select %p296, %s19, 1
      %s298 = smul.addr %s297, 24
      %s299 = smul.addr %s298, 2
      %s300 = scalar_lea.vmem %s0, %s299
      %p301 = scmp.lt.s32.totalorder %s19, 1
      %s302 = scalar_select %p301, %s19, 1
      %s303 = smul.addr %s302, 4
      %s304 = smul.addr %s303, 8
      %s305 = scalar_lea.vmem %s8, %s304
      %v307 = vld [vmem:[%s7] sm:$0x3]
      %308 = vst [vmem:[#allocation2] sm:$0xff] 0
      %309 = vst [vmem:[#allocation2 + $0x8] sm:$0xff] 0
      %v310 = vld [vmem:[%s300] sm:$0xf]
      %v313 = vunpack.c.l.s4 1983009808
      %v314 = vunpack.c.0.s8 %v313
      %v315 = vlaneseq
      %v316 = vshrl.u32 %v315, 7
      %v317 = vsub.s32 %v314, %v316
      %v318 = vrot.slane %v310, %v317
      %320 = vst [vmem:[#allocation3] sm:$0x33] %v318
      %s321 = scalar_lea.vmem %s300, 6
      %v322 = vld [vmem:[%s321] sm:$0xf]
      %v324 = vcombine.low %v322, %v322
      %v326 = vunpack.c.l.s4 1983009808
      %v327 = vunpack.c.0.s8 %v326
      %v328 = vlaneseq
      %v329 = vshrl.u32 %v328, 7
      %v330 = vsub.s32 %v327, %v329
      %v331 = vrot.slane %v324, %v330
      %333 = vst [vmem:[#allocation3] sm:$0xcc] %v331
      %v334 = vld [vmem:[%s300] sm:$0x3f]
      %v336 = vcombine.high %v334, %v334
      %v338 = vunpack.c.l.s4 1983009808
      %v339 = vunpack.c.0.s8 %v338
      %v340 = vlaneseq
      %v341 = vshrl.u32 %v340, 7
      %v342 = vsub.s32 %v339, %v341
      %v343 = vrot.slane %v334, %v342
      %v345 = vunpack.c.l.s4 1983009808
      %v346 = vunpack.c.0.s8 %v345
      %v347 = vlaneseq
      %v348 = vshrl.u32 %v347, 7
      %v349 = vsub.s32 %v346, %v348
      %v350 = vrot.slane %v336, %v349
      %351 = vrot.lane.b32.xlu0 %v343, 127
      %v352 = vpop.permute.xlu0 %351
      %353 = vrot.lane.b32.xlu0 %v350, 127
      %v354 = vpop.permute.xlu0 %353
      %v355 = vrot.slane %v352, 4
      %v356 = vrot.slane %v354, 4
      %vm357 = vcmask 1043456
      %v358 = vsel %vm357, %v355, %v356
      %vm359 = vcmask 1039360
      %v360 = vsel %vm359, %v352, %v358
      %362 = vst [vmem:[#allocation3 + $0x8] sm:$0x33] %v360
      %s363 = scalar_lea.vmem %s300, 12
      %v364 = vld [vmem:[%s363] sm:$0xf]
      %v366 = vcombine.low %v364, %v364
      %v368 = vunpack.c.l.s4 1983009808
      %v369 = vunpack.c.0.s8 %v368
      %v370 = vlaneseq
      %v371 = vshrl.u32 %v370, 7
      %v372 = vsub.s32 %v369, %v371
      %v373 = vrot.slane %v366, %v372
      %375 = vst [vmem:[#allocation3 + $0x8] sm:$0xcc] %v373
      %s376 = scalar_lea.vmem %s300, 18
      %v377 = vld [vmem:[%s376] sm:$0xf]
      %v380 = vunpack.c.l.s4 1983009808
      %v381 = vunpack.c.0.s8 %v380
      %v382 = vlaneseq
      %v383 = vshrl.u32 %v382, 7
      %v384 = vsub.s32 %v381, %v383
      %v385 = vrot.slane %v377, %v384
      %387 = vst [vmem:[#allocation3 + $0x10] sm:$0x33] %v385
      %v388 = vld [vmem:[%s363] sm:$0x3f]
      %v390 = vcombine.low %v388, %v388
      %v392 = vunpack.c.l.s4 1983009808
      %v393 = vunpack.c.0.s8 %v392
      %v394 = vlaneseq
      %v395 = vshrl.u32 %v394, 7
      %v396 = vsub.s32 %v393, %v395
      %v397 = vrot.slane %v390, %v396
      %v399 = vunpack.c.l.s4 1983009808
      %v400 = vunpack.c.0.s8 %v399
      %v401 = vlaneseq
      %v402 = vshrl.u32 %v401, 7
      %v403 = vsub.s32 %v400, %v402
      %v404 = vrot.slane %v388, %v403
      %405 = vrot.lane.b32.xlu0 %v397, 127
      %v406 = vpop.permute.xlu0 %405
      %407 = vrot.lane.b32.xlu0 %v404, 127
      %v408 = vpop.permute.xlu0 %407
      %v409 = vrot.slane %v406, 4
      %v410 = vrot.slane %v408, 4
      %v411 = vsel %vm357, %v409, %v410
      %v412 = vsel %vm359, %v406, %v411
      %414 = vst [vmem:[#allocation3 + $0x10] sm:$0xcc] %v412
      %v415 = vld [vmem:[%s300] sm:$0x3f]
      %v417 = vcombine.high %v415, %v415
      %v419 = vunpack.c.l.s4 1983009808
      %v420 = vunpack.c.0.s8 %v419
      %v421 = vlaneseq
      %v422 = vshrl.u32 %v421, 7
      %v423 = vsub.s32 %v420, %v422
      %v424 = vrot.slane %v415, %v423
      %v426 = vunpack.c.l.s4 1983009808
      %v427 = vunpack.c.0.s8 %v426
      %v428 = vlaneseq
      %v429 = vshrl.u32 %v428, 7
      %v430 = vsub.s32 %v427, %v429
      %v431 = vrot.slane %v417, %v430
      %432 = vrot.lane.b32.xlu0 %v424, 122
      %v433 = vpop.permute.xlu0 %432
      %434 = vrot.lane.b32.xlu0 %v431, 122
      %v435 = vpop.permute.xlu0 %434
      %v436 = vrot.slane %v433, 4
      %v437 = vrot.slane %v435, 4
      %v438 = vsel %vm357, %v436, %v437
      %vm439 = vcmask 998400
      %v440 = vsel %vm439, %v433, %v438
      %442 = vst [vmem:[#allocation3 + $0x18] sm:$0x33] %v440
      %v443 = vld [vmem:[%s321] sm:$0x3f]
      %v445 = vcombine.low %v443, %v443
      %v447 = vunpack.c.l.s4 1983009808
      %v448 = vunpack.c.0.s8 %v447
      %v449 = vlaneseq
      %v450 = vshrl.u32 %v449, 7
      %v451 = vsub.s32 %v448, %v450
      %v452 = vrot.slane %v445, %v451
      %v454 = vunpack.c.l.s4 1983009808
      %v455 = vunpack.c.0.s8 %v454
      %v456 = vlaneseq
      %v457 = vshrl.u32 %v456, 7
      %v458 = vsub.s32 %v455, %v457
      %v459 = vrot.slane %v443, %v458
      %460 = vrot.lane.b32.xlu0 %v452, 122
      %v461 = vpop.permute.xlu0 %460
      %462 = vrot.lane.b32.xlu0 %v459, 122
      %v463 = vpop.permute.xlu0 %462
      %v464 = vrot.slane %v461, 4
      %v465 = vrot.slane %v463, 4
      %v466 = vsel %vm357, %v464, %v465
      %v467 = vsel %vm439, %v461, %v466
      %469 = vst [vmem:[#allocation3 + $0x18] sm:$0xcc] %v467
      %v470 = vld [vmem:[%s300] sm:$0x3f]
      %v472 = vcombine.high %v470, %v470
      %v474 = vunpack.c.l.s4 1983009808
      %v475 = vunpack.c.0.s8 %v474
      %v476 = vlaneseq
      %v477 = vshrl.u32 %v476, 7
      %v478 = vsub.s32 %v475, %v477
      %v479 = vrot.slane %v470, %v478
      %v481 = vunpack.c.l.s4 1983009808
      %v482 = vunpack.c.0.s8 %v481
      %v483 = vlaneseq
      %v484 = vshrl.u32 %v483, 7
      %v485 = vsub.s32 %v482, %v484
      %v486 = vrot.slane %v472, %v485
      %487 = vrot.lane.b32.xlu0 %v479, 121
      %v488 = vpop.permute.xlu0 %487
      %489 = vrot.lane.b32.xlu0 %v486, 121
      %v490 = vpop.permute.xlu0 %489
      %v491 = vrot.slane %v488, 4
      %v492 = vrot.slane %v490, 4
      %v493 = vsel %vm357, %v491, %v492
      %vm494 = vcmask 990208
      %v495 = vsel %vm494, %v488, %v493
      %497 = vst [vmem:[#allocation3 + $0x20] sm:$0x33] %v495
      %s498 = scalar_lea.vmem %s300, 24
      %v499 = vld [vmem:[%s498] sm:$0xf]
      %v501 = vcombine.low %v499, %v499
      %v503 = vunpack.c.l.s4 1983009808
      %v504 = vunpack.c.0.s8 %v503
      %v505 = vlaneseq
      %v506 = vshrl.u32 %v505, 7
      %v507 = vsub.s32 %v504, %v506
      %v508 = vrot.slane %v501, %v507
      %510 = vst [vmem:[#allocation3 + $0x20] sm:$0xcc] %v508
      %s511 = scalar_lea.vmem %s300, 30
      %v512 = vld [vmem:[%s511] sm:$0xf]
      %v515 = vunpack.c.l.s4 1983009808
      %v516 = vunpack.c.0.s8 %v515
      %v517 = vlaneseq
      %v518 = vshrl.u32 %v517, 7
      %v519 = vsub.s32 %v516, %v518
      %v520 = vrot.slane %v512, %v519
      %522 = vst [vmem:[#allocation3 + $0x28] sm:$0x33] %v520
      %v523 = vld [vmem:[%s498] sm:$0x3f]
      %v525 = vcombine.low %v523, %v523
      %v527 = vunpack.c.l.s4 1983009808
      %v528 = vunpack.c.0.s8 %v527
      %v529 = vlaneseq
      %v530 = vshrl.u32 %v529, 7
      %v531 = vsub.s32 %v528, %v530
      %v532 = vrot.slane %v525, %v531
      %v534 = vunpack.c.l.s4 1983009808
      %v535 = vunpack.c.0.s8 %v534
      %v536 = vlaneseq
      %v537 = vshrl.u32 %v536, 7
      %v538 = vsub.s32 %v535, %v537
      %v539 = vrot.slane %v523, %v538
      %540 = vrot.lane.b32.xlu0 %v532, 127
      %v541 = vpop.permute.xlu0 %540
      %542 = vrot.lane.b32.xlu0 %v539, 127
      %v543 = vpop.permute.xlu0 %542
      %v544 = vrot.slane %v541, 4
      %v545 = vrot.slane %v543, 4
      %v546 = vsel %vm357, %v544, %v545
      %v547 = vsel %vm359, %v541, %v546
      %549 = vst [vmem:[#allocation3 + $0x28] sm:$0xcc] %v547
      %s550 = scalar_lea.vmem %s300, 36
      %v551 = vld [vmem:[%s550] sm:$0xf]
      %v554 = vunpack.c.l.s4 1983009808
      %v555 = vunpack.c.0.s8 %v554
      %v556 = vlaneseq
      %v557 = vshrl.u32 %v556, 7
      %v558 = vsub.s32 %v555, %v557
      %v559 = vrot.slane %v551, %v558
      %561 = vst [vmem:[#allocation3 + $0x30] sm:$0x33] %v559
      %s562 = scalar_lea.vmem %s300, 42
      %v563 = vld [vmem:[%s562] sm:$0xf]
      %v565 = vcombine.low %v563, %v563
      %v567 = vunpack.c.l.s4 1983009808
      %v568 = vunpack.c.0.s8 %v567
      %v569 = vlaneseq
      %v570 = vshrl.u32 %v569, 7
      %v571 = vsub.s32 %v568, %v570
      %v572 = vrot.slane %v565, %v571
      %574 = vst [vmem:[#allocation3 + $0x30] sm:$0xcc] %v572
      %v575 = vld [vmem:[%s550] sm:$0x3f]
      %v577 = vcombine.high %v575, %v575
      %v579 = vunpack.c.l.s4 1983009808
      %v580 = vunpack.c.0.s8 %v579
      %v581 = vlaneseq
      %v582 = vshrl.u32 %v581, 7
      %v583 = vsub.s32 %v580, %v582
      %v584 = vrot.slane %v575, %v583
      %v586 = vunpack.c.l.s4 1983009808
      %v587 = vunpack.c.0.s8 %v586
      %v588 = vlaneseq
      %v589 = vshrl.u32 %v588, 7
      %v590 = vsub.s32 %v587, %v589
      %v591 = vrot.slane %v577, %v590
      %592 = vrot.lane.b32.xlu0 %v584, 127
      %v593 = vpop.permute.xlu0 %592
      %594 = vrot.lane.b32.xlu0 %v591, 127
      %v595 = vpop.permute.xlu0 %594
      %v596 = vrot.slane %v593, 4
      %v597 = vrot.slane %v595, 4
      %v598 = vsel %vm357, %v596, %v597
      %v599 = vsel %vm359, %v593, %v598
      %601 = vst [vmem:[#allocation3 + $0x38] sm:$0x33] %v599
      %v602 = vld [vmem:[%s498] sm:$0x3f]
      %v604 = vcombine.low %v602, %v602
      %v606 = vunpack.c.l.s4 1983009808
      %v607 = vunpack.c.0.s8 %v606
      %v608 = vlaneseq
      %v609 = vshrl.u32 %v608, 7
      %v610 = vsub.s32 %v607, %v609
      %v611 = vrot.slane %v604, %v610
      %v613 = vunpack.c.l.s4 1983009808
      %v614 = vunpack.c.0.s8 %v613
      %v615 = vlaneseq
      %v616 = vshrl.u32 %v615, 7
      %v617 = vsub.s32 %v614, %v616
      %v618 = vrot.slane %v602, %v617
      %619 = vrot.lane.b32.xlu0 %v611, 122
      %v620 = vpop.permute.xlu0 %619
      %621 = vrot.lane.b32.xlu0 %v618, 122
      %v622 = vpop.permute.xlu0 %621
      %v623 = vrot.slane %v620, 4
      %v624 = vrot.slane %v622, 4
      %v625 = vsel %vm357, %v623, %v624
      %v626 = vsel %vm439, %v620, %v625
      %628 = vst [vmem:[#allocation3 + $0x38] sm:$0xcc] %v626
      %v629 = vld [vmem:[%s511] sm:$0x3f]
      %v631 = vcombine.high %v629, %v629
      %v633 = vunpack.c.l.s4 1983009808
      %v634 = vunpack.c.0.s8 %v633
      %v635 = vlaneseq
      %v636 = vshrl.u32 %v635, 7
      %v637 = vsub.s32 %v634, %v636
      %v638 = vrot.slane %v629, %v637
      %v640 = vunpack.c.l.s4 1983009808
      %v641 = vunpack.c.0.s8 %v640
      %v642 = vlaneseq
      %v643 = vshrl.u32 %v642, 7
      %v644 = vsub.s32 %v641, %v643
      %v645 = vrot.slane %v631, %v644
      %646 = vrot.lane.b32.xlu0 %v638, 122
      %v647 = vpop.permute.xlu0 %646
      %648 = vrot.lane.b32.xlu0 %v645, 122
      %v649 = vpop.permute.xlu0 %648
      %v650 = vrot.slane %v647, 4
      %v651 = vrot.slane %v649, 4
      %v652 = vsel %vm357, %v650, %v651
      %v653 = vsel %vm439, %v647, %v652
      %655 = vst [vmem:[#allocation3 + $0x40] sm:$0x33] %v653
      %v656 = vld [vmem:[%s498] sm:$0x3f]
      %v658 = vcombine.low %v656, %v656
      %v660 = vunpack.c.l.s4 1983009808
      %v661 = vunpack.c.0.s8 %v660
      %v662 = vlaneseq
      %v663 = vshrl.u32 %v662, 7
      %v664 = vsub.s32 %v661, %v663
      %v665 = vrot.slane %v658, %v664
      %v667 = vunpack.c.l.s4 1983009808
      %v668 = vunpack.c.0.s8 %v667
      %v669 = vlaneseq
      %v670 = vshrl.u32 %v669, 7
      %v671 = vsub.s32 %v668, %v670
      %v672 = vrot.slane %v656, %v671
      %673 = vrot.lane.b32.xlu0 %v665, 121
      %v674 = vpop.permute.xlu0 %673
      %675 = vrot.lane.b32.xlu0 %v672, 121
      %v676 = vpop.permute.xlu0 %675
      %v677 = vrot.slane %v674, 4
      %v678 = vrot.slane %v676, 4
      %v679 = vsel %vm357, %v677, %v678
      %v680 = vsel %vm494, %v674, %v679
      %682 = vst [vmem:[#allocation3 + $0x40] sm:$0xcc] %v680
      %v683 = vld [vmem:[%s300] sm:$0x3f]
      %v685 = vcombine.high %v683, %v683
      %v687 = vunpack.c.l.s4 1983009808
      %v688 = vunpack.c.0.s8 %v687
      %v689 = vlaneseq
      %v690 = vshrl.u32 %v689, 7
      %v691 = vsub.s32 %v688, %v690
      %v692 = vrot.slane %v683, %v691
      %v694 = vunpack.c.l.s4 1983009808
      %v695 = vunpack.c.0.s8 %v694
      %v696 = vlaneseq
      %v697 = vshrl.u32 %v696, 7
      %v698 = vsub.s32 %v695, %v697
      %v699 = vrot.slane %v685, %v698
      %700 = vrot.lane.b32.xlu0 %v692, 92
      %v701 = vpop.permute.xlu0 %700
      %702 = vrot.lane.b32.xlu0 %v699, 92
      %v703 = vpop.permute.xlu0 %702
      %v704 = vrot.slane %v701, 4
      %v705 = vrot.slane %v703, 4
      %v706 = vsel %vm357, %v704, %v705
      %vm707 = vcmask 752640
      %v708 = vsel %vm707, %v701, %v706
      %710 = vst [vmem:[#allocation3 + $0x48] sm:$0x33] %v708
      %v711 = vld [vmem:[%s321] sm:$0x3f]
      %v713 = vcombine.low %v711, %v711
      %v715 = vunpack.c.l.s4 1983009808
      %v716 = vunpack.c.0.s8 %v715
      %v717 = vlaneseq
      %v718 = vshrl.u32 %v717, 7
      %v719 = vsub.s32 %v716, %v718
      %v720 = vrot.slane %v713, %v719
      %v722 = vunpack.c.l.s4 1983009808
      %v723 = vunpack.c.0.s8 %v722
      %v724 = vlaneseq
      %v725 = vshrl.u32 %v724, 7
      %v726 = vsub.s32 %v723, %v725
      %v727 = vrot.slane %v711, %v726
      %728 = vrot.lane.b32.xlu0 %v720, 92
      %v729 = vpop.permute.xlu0 %728
      %730 = vrot.lane.b32.xlu0 %v727, 92
      %v731 = vpop.permute.xlu0 %730
      %v732 = vrot.slane %v729, 4
      %v733 = vrot.slane %v731, 4
      %v734 = vsel %vm357, %v732, %v733
      %v735 = vsel %vm707, %v729, %v734
      %737 = vst [vmem:[#allocation3 + $0x48] sm:$0xcc] %v735
      %v738 = vld [vmem:[%s300] sm:$0x3f]
      %v740 = vcombine.high %v738, %v738
      %v742 = vunpack.c.l.s4 1983009808
      %v743 = vunpack.c.0.s8 %v742
      %v744 = vlaneseq
      %v745 = vshrl.u32 %v744, 7
      %v746 = vsub.s32 %v743, %v745
      %v747 = vrot.slane %v738, %v746
      %v749 = vunpack.c.l.s4 1983009808
      %v750 = vunpack.c.0.s8 %v749
      %v751 = vlaneseq
      %v752 = vshrl.u32 %v751, 7
      %v753 = vsub.s32 %v750, %v752
      %v754 = vrot.slane %v740, %v753
      %755 = vrot.lane.b32.xlu0 %v747, 91
      %v756 = vpop.permute.xlu0 %755
      %757 = vrot.lane.b32.xlu0 %v754, 91
      %v758 = vpop.permute.xlu0 %757
      %v759 = vrot.slane %v756, 4
      %v760 = vrot.slane %v758, 4
      %v761 = vsel %vm357, %v759, %v760
      %vm762 = vcmask 744448
      %v763 = vsel %vm762, %v756, %v761
      %765 = vst [vmem:[#allocation3 + $0x50] sm:$0x33] %v763
      %v766 = vld [vmem:[%s363] sm:$0x3f]
      %v768 = vcombine.low %v766, %v766
      %v770 = vunpack.c.l.s4 1983009808
      %v771 = vunpack.c.0.s8 %v770
      %v772 = vlaneseq
      %v773 = vshrl.u32 %v772, 7
      %v774 = vsub.s32 %v771, %v773
      %v775 = vrot.slane %v768, %v774
      %v777 = vunpack.c.l.s4 1983009808
      %v778 = vunpack.c.0.s8 %v777
      %v779 = vlaneseq
      %v780 = vshrl.u32 %v779, 7
      %v781 = vsub.s32 %v778, %v780
      %v782 = vrot.slane %v766, %v781
      %783 = vrot.lane.b32.xlu0 %v775, 92
      %v784 = vpop.permute.xlu0 %783
      %785 = vrot.lane.b32.xlu0 %v782, 92
      %v786 = vpop.permute.xlu0 %785
      %v787 = vrot.slane %v784, 4
      %v788 = vrot.slane %v786, 4
      %v789 = vsel %vm357, %v787, %v788
      %v790 = vsel %vm707, %v784, %v789
      %792 = vst [vmem:[#allocation3 + $0x50] sm:$0xcc] %v790
      %v793 = vld [vmem:[%s376] sm:$0x3f]
      %v795 = vcombine.high %v793, %v793
      %v797 = vunpack.c.l.s4 1983009808
      %v798 = vunpack.c.0.s8 %v797
      %v799 = vlaneseq
      %v800 = vshrl.u32 %v799, 7
      %v801 = vsub.s32 %v798, %v800
      %v802 = vrot.slane %v793, %v801
      %v804 = vunpack.c.l.s4 1983009808
      %v805 = vunpack.c.0.s8 %v804
      %v806 = vlaneseq
      %v807 = vshrl.u32 %v806, 7
      %v808 = vsub.s32 %v805, %v807
      %v809 = vrot.slane %v795, %v808
      %810 = vrot.lane.b32.xlu0 %v802, 92
      %v811 = vpop.permute.xlu0 %810
      %812 = vrot.lane.b32.xlu0 %v809, 92
      %v813 = vpop.permute.xlu0 %812
      %v814 = vrot.slane %v811, 4
      %v815 = vrot.slane %v813, 4
      %v816 = vsel %vm357, %v814, %v815
      %v817 = vsel %vm707, %v811, %v816
      %819 = vst [vmem:[#allocation3 + $0x58] sm:$0x33] %v817
      %v820 = vld [vmem:[%s363] sm:$0x3f]
      %v822 = vcombine.low %v820, %v820
      %v824 = vunpack.c.l.s4 1983009808
      %v825 = vunpack.c.0.s8 %v824
      %v826 = vlaneseq
      %v827 = vshrl.u32 %v826, 7
      %v828 = vsub.s32 %v825, %v827
      %v829 = vrot.slane %v822, %v828
      %v831 = vunpack.c.l.s4 1983009808
      %v832 = vunpack.c.0.s8 %v831
      %v833 = vlaneseq
      %v834 = vshrl.u32 %v833, 7
      %v835 = vsub.s32 %v832, %v834
      %v836 = vrot.slane %v820, %v835
      %837 = vrot.lane.b32.xlu0 %v829, 91
      %v838 = vpop.permute.xlu0 %837
      %839 = vrot.lane.b32.xlu0 %v836, 91
      %v840 = vpop.permute.xlu0 %839
      %v841 = vrot.slane %v838, 4
      %v842 = vrot.slane %v840, 4
      %v843 = vsel %vm357, %v841, %v842
      %v844 = vsel %vm762, %v838, %v843
      %846 = vst [vmem:[#allocation3 + $0x58] sm:$0xcc] %v844
      %v847 = vld [vmem:[%s300] sm:$0x3f]
      %v849 = vcombine.high %v847, %v847
      %v851 = vunpack.c.l.s4 1983009808
      %v852 = vunpack.c.0.s8 %v851
      %v853 = vlaneseq
      %v854 = vshrl.u32 %v853, 7
      %v855 = vsub.s32 %v852, %v854
      %v856 = vrot.slane %v847, %v855
      %v858 = vunpack.c.l.s4 1983009808
      %v859 = vunpack.c.0.s8 %v858
      %v860 = vlaneseq
      %v861 = vshrl.u32 %v860, 7
      %v862 = vsub.s32 %v859, %v861
      %v863 = vrot.slane %v849, %v862
      %864 = vrot.lane.b32.xlu0 %v856, 86
      %v865 = vpop.permute.xlu0 %864
      %866 = vrot.lane.b32.xlu0 %v863, 86
      %v867 = vpop.permute.xlu0 %866
      %v868 = vrot.slane %v865, 4
      %v869 = vrot.slane %v867, 4
      %v870 = vsel %vm357, %v868, %v869
      %vm871 = vcmask 703488
      %v872 = vsel %vm871, %v865, %v870
      %874 = vst [vmem:[#allocation3 + $0x60] sm:$0x33] %v872
      %v875 = vld [vmem:[%s321] sm:$0x3f]
      %v877 = vcombine.low %v875, %v875
      %v879 = vunpack.c.l.s4 1983009808
      %v880 = vunpack.c.0.s8 %v879
      %v881 = vlaneseq
      %v882 = vshrl.u32 %v881, 7
      %v883 = vsub.s32 %v880, %v882
      %v884 = vrot.slane %v877, %v883
      %v886 = vunpack.c.l.s4 1983009808
      %v887 = vunpack.c.0.s8 %v886
      %v888 = vlaneseq
      %v889 = vshrl.u32 %v888, 7
      %v890 = vsub.s32 %v887, %v889
      %v891 = vrot.slane %v875, %v890
      %892 = vrot.lane.b32.xlu0 %v884, 86
      %v893 = vpop.permute.xlu0 %892
      %894 = vrot.lane.b32.xlu0 %v891, 86
      %v895 = vpop.permute.xlu0 %894
      %v896 = vrot.slane %v893, 4
      %v897 = vrot.slane %v895, 4
      %v898 = vsel %vm357, %v896, %v897
      %v899 = vsel %vm871, %v893, %v898
      %901 = vst [vmem:[#allocation3 + $0x60] sm:$0xcc] %v899
      %v902 = vld [vmem:[%s300] sm:$0x3f]
      %v904 = vcombine.high %v902, %v902
      %v906 = vunpack.c.l.s4 1983009808
      %v907 = vunpack.c.0.s8 %v906
      %v908 = vlaneseq
      %v909 = vshrl.u32 %v908, 7
      %v910 = vsub.s32 %v907, %v909
      %v911 = vrot.slane %v902, %v910
      %v913 = vunpack.c.l.s4 1983009808
      %v914 = vunpack.c.0.s8 %v913
      %v915 = vlaneseq
      %v916 = vshrl.u32 %v915, 7
      %v917 = vsub.s32 %v914, %v916
      %v918 = vrot.slane %v904, %v917
      %919 = vrot.lane.b32.xlu0 %v911, 85
      %v920 = vpop.permute.xlu0 %919
      %921 = vrot.lane.b32.xlu0 %v918, 85
      %v922 = vpop.permute.xlu0 %921
      %v923 = vrot.slane %v920, 4
      %v924 = vrot.slane %v922, 4
      %v925 = vsel %vm357, %v923, %v924
      %vm926 = vcmask 695296
      %v927 = vsel %vm926, %v920, %v925
      %929 = vst [vmem:[#allocation3 + $0x68] sm:$0x33] %v927
      %v930 = vld [vmem:[%s1] sm:$0xf]
      %v931 = vld [vmem:[%s1 + $0x4] sm:$0xf]
      %v932 = vld [vmem:[#allocation3] sm:$0xff]
      %v933 = vld [vmem:[#allocation3 + $0x8] sm:$0xff]
      %v934 = vld [vmem:[#allocation3 + $0x10] sm:$0xff]
      %v935 = vld [vmem:[#allocation3 + $0x18] sm:$0xff]
      %v936 = vld [vmem:[#allocation3 + $0x20] sm:$0xff]
      %v937 = vld [vmem:[#allocation3 + $0x28] sm:$0xff]
      %v938 = vld [vmem:[#allocation3 + $0x30] sm:$0xff]
      %v939 = vld [vmem:[#allocation3 + $0x38] sm:$0xff]
      %v940 = vld [vmem:[#allocation3 + $0x40] sm:$0xff]
      %v941 = vld [vmem:[#allocation3 + $0x48] sm:$0xff]
      %v942 = vld [vmem:[#allocation3 + $0x50] sm:$0xff]
      %v943 = vld [vmem:[#allocation3 + $0x58] sm:$0xff]
      %v944 = vld [vmem:[#allocation3 + $0x60] sm:$0xff]
      %v945 = vld [vmem:[#allocation3 + $0x68] sm:$0x33]
      %v946 = vld [vmem:[%s2] sm:$0xff]
      %v947 = vld [vmem:[%s2 + $0x8] sm:$0xff]
      %949 = vset.pattern.permute.xlu0 0
      %950 = vperm.xlu0 %949, %v946
      %v951 = vpop.permute.xlu0 %950
      %954 = vset.pattern.permute.xlu0 0
      %955 = vperm.xlu0 %954, %v947
      %v956 = vpop.permute.xlu0 %955
      %v960 = vunpack.c.l.b16 %v930
      %v961 = vunpack.c.l.b16 %v931
      %v962 = vpack.c.b16 %v961, %v960
      %v977 = vunpack.c.l.b16 %v932
      %v978 = vunpack.c.h.b16 %v932
      %v979 = vunpack.c.l.b16 %v933
      %v980 = vunpack.c.h.b16 %v933
      %v981 = vunpack.c.l.b16 %v934
      %v982 = vunpack.c.h.b16 %v934
      %v983 = vunpack.c.l.b16 %v935
      %v984 = vunpack.c.h.b16 %v935
      %v985 = vunpack.c.l.b16 %v936
      %v986 = vunpack.c.h.b16 %v936
      %v987 = vunpack.c.l.b16 %v937
      %v988 = vunpack.c.h.b16 %v937
      %v989 = vunpack.c.l.b16 %v938
      %v990 = vunpack.c.h.b16 %v938
      %v991 = vunpack.c.l.b16 %v939
      %v992 = vunpack.c.h.b16 %v939
      %v993 = vunpack.c.l.b16 %v940
      %v994 = vunpack.c.h.b16 %v940
      %v995 = vunpack.c.l.b16 %v941
      %v996 = vunpack.c.h.b16 %v941
      %v997 = vunpack.c.l.b16 %v942
      %v998 = vunpack.c.h.b16 %v942
      %v999 = vunpack.c.l.b16 %v943
      %v1000 = vunpack.c.h.b16 %v943
      %v1001 = vunpack.c.l.b16 %v944
      %v1002 = vunpack.c.h.b16 %v944
      %v1003 = vunpack.c.l.b16 %v945
      %v1004 = vunpack.c.h.b16 %v945
      %v1005 = vpack.c.b16 %v979, %v977
      %v1006 = vpack.c.b16 %v980, %v978
      %v1007 = vpack.c.b16 %v983, %v981
      %v1008 = vpack.c.b16 %v984, %v982
      %v1009 = vpack.c.b16 %v987, %v985
      %v1010 = vpack.c.b16 %v988, %v986
      %v1011 = vpack.c.b16 %v991, %v989
      %v1012 = vpack.c.b16 %v992, %v990
      %v1013 = vpack.c.b16 %v995, %v993
      %v1014 = vpack.c.b16 %v996, %v994
      %v1015 = vpack.c.b16 %v999, %v997
      %v1016 = vpack.c.b16 %v1000, %v998
      %v1017 = vpack.c.b16 %v1003, %v1001
      %v1018 = vpack.c.b16 %v1004, %v1002
      %vm1031 = vcmask 883712
      %v1033 = vsel %vm1031, %v962, 0
      %vm1035 = vcmask 1045504
      %v1037 = vsel %vm1035, %v1017, 0
      %v1040 = vsel %vm1035, %v1018, 0
      %1042 = vmatprep.subr.bf16.mxu0 %v1006
      %1043 = vmatpush1.bf16.msra.mxu0 %v1005
      %1044 = vmatprep.subr.bf16.mxu0 %v1008
      %1045 = vmatpush1.bf16.msra.mxu0 %v1007
      %1046 = vmatprep.subr.bf16.mxu0 %v1010
      %1047 = vmatpush1.bf16.msra.mxu0 %v1009
      %1048 = vmatprep.subr.bf16.mxu0 %v1012
      %1049 = vmatpush1.bf16.msra.mxu0 %v1011
      %1050 = vmatprep.subr.bf16.mxu0 %v1014
      %1051 = vmatpush1.bf16.msra.mxu0 %v1013
      %1052 = vmatprep.subr.bf16.mxu0 %v1016
      %1053 = vmatpush1.bf16.msra.mxu0 %v1015
      %1054 = vmatprep.subr.bf16.mxu0 %v1040
      %1055 = vmatpush1.bf16.msra.mxu0 %v1037
      %1056 = vmatprep.subr.bf16.mxu0 0
      %1057 = vmatpush1.bf16.msra.mxu0 0
      %1058 = vmatprep.subr.bf16.mxu0 0
      %1059 = vmatpush1.bf16.msra.mxu0 0
      %1060 = vmatprep.subr.bf16.mxu0 0
      %1061 = vmatpush1.bf16.msra.mxu0 0
      %1062 = vmatprep.subr.bf16.mxu0 0
      %1063 = vmatpush1.bf16.msra.mxu0 0
      %1064 = vmatprep.subr.bf16.mxu0 0
      %1065 = vmatpush1.bf16.msra.mxu0 0
      %1066 = vmatprep.subr.bf16.mxu0 0
      %1067 = vmatpush1.bf16.msra.mxu0 0
      %1068 = vmatprep.subr.bf16.mxu0 0
      %1069 = vmatpush1.bf16.msra.mxu0 0
      %1070 = vmatprep.subr.bf16.mxu0 0
      %1071 = vmatpush1.bf16.msra.mxu0 0
      %1072 = vmatprep.subr.bf16.mxu0 0
      %1073 = vmatpush1.bf16.msra.mxu0 0
      %1074 = vmatprep.mubr.bf16.mxu0 0
      %1075 = vmatmul.mubr.bf16.gmra.mrb[0].mxu0 %v1033
      %v1076 = vpop.f32.mrb[0].mxu0
      %v1077 = vadd.f32 %v951, %v1076
      %v1078 = vpop.f32.mrb[0].mxu0
      %v1079 = vadd.f32 %v951, %v1078
      %v1080 = vpop.f32.mrb[0].mxu0
      %v1081 = vadd.f32 %v956, %v1080
      %v1082 = vpop.f32.mrb[0].mxu0
      %v1083 = vadd.f32 %v956, %v1082
      %1084 = vdwg.mxu0
      %vm1085 = vcmp.gt.f32.partialorder %v1077, 0.0
      %vm1086 = vcmp.gt.f32.partialorder %v1079, 0.0
      %vm1087 = vcmp.gt.f32.partialorder %v1081, 0.0
      %vm1088 = vcmp.gt.f32.partialorder %v1083, 0.0
      %v1089 = vmul.f32 %v1077, 0.1
      %v1090 = vmul.f32 %v1079, 0.1
      %v1091 = vmul.f32 %v1081, 0.1
      %v1092 = vmul.f32 %v1083, 0.1
      %v1093 = vsel %vm1085, %v1077, %v1089
      %v1094 = vsel %vm1086, %v1079, %v1090
      %v1095 = vsel %vm1087, %v1081, %v1091
      %v1096 = vsel %vm1088, %v1083, %v1092
      %v1098 = vlaneseq
      %v1099 = vshrl.u32 %v1098, 7
      %v1100 = vsub.s32 0, %v1099
      %v1101 = vrot.slane %v307, %v1100
      %v1102 = vlaneseq
      %v1103 = vshrl.u32 %v1102, 7
      %v1104 = vsub.s32 1, %v1103
      %v1105 = vrot.slane %v307, %v1104
      %v1108 = vmul.f32 %v1101, %v1093
      %v1109 = vmul.f32 %v1105, %v1094
      %v1110 = vmul.f32 %v1101, %v1095
      %v1111 = vmul.f32 %v1105, %v1096
      %v1112 = vld [vmem:[%s3] sm:$0xf]
      %v1113 = vpack.c.bf16 %v1110, %v1108
      %v1114 = vpack.c.bf16 %v1111, %v1109
      %v1115 = vld [vmem:[%s4] sm:$0xff]
      %1117 = vset.pattern.permute.xlu0 0
      %1118 = vperm.xlu0 %1117, %v1115
      %v1119 = vpop.permute.xlu0 %1118
      %vm1121 = vcmask 130048
      %v1123 = vsel %vm1121, %v1112, 0
      %1125 = vmatprep.subr.bf16.mxu0 %v1114
      %1126 = vmatpush1.bf16.msra.mxu0 %v1113
      %1127 = vmatprep.subr.bf16.mxu0 0
      %1128 = vmatpush1.bf16.msra.mxu0 0
      %1129 = vmatprep.subr.bf16.mxu0 0
      %1130 = vmatpush1.bf16.msra.mxu0 0
      %1131 = vmatprep.subr.bf16.mxu0 0
      %1132 = vmatpush1.bf16.msra.mxu0 0
      %1133 = vmatprep.subr.bf16.mxu0 0
      %1134 = vmatpush1.bf16.msra.mxu0 0
      %1135 = vmatprep.subr.bf16.mxu0 0
      %1136 = vmatpush1.bf16.msra.mxu0 0
      %1137 = vmatprep.subr.bf16.mxu0 0
      %1138 = vmatpush1.bf16.msra.mxu0 0
      %1139 = vmatprep.subr.bf16.mxu0 0
      %1140 = vmatpush1.bf16.msra.mxu0 0
      %1141 = vmatprep.subr.bf16.mxu0 0
      %1142 = vmatpush1.bf16.msra.mxu0 0
      %1143 = vmatprep.subr.bf16.mxu0 0
      %1144 = vmatpush1.bf16.msra.mxu0 0
      %1145 = vmatprep.subr.bf16.mxu0 0
      %1146 = vmatpush1.bf16.msra.mxu0 0
      %1147 = vmatprep.subr.bf16.mxu0 0
      %1148 = vmatpush1.bf16.msra.mxu0 0
      %1149 = vmatprep.subr.bf16.mxu0 0
      %1150 = vmatpush1.bf16.msra.mxu0 0
      %1151 = vmatprep.subr.bf16.mxu0 0
      %1152 = vmatpush1.bf16.msra.mxu0 0
      %1153 = vmatprep.subr.bf16.mxu0 0
      %1154 = vmatpush1.bf16.msra.mxu0 0
      %1155 = vmatprep.subr.bf16.mxu0 0
      %1156 = vmatpush1.bf16.msra.mxu0 0
      %1157 = vmatprep.mubr.bf16.mxu0 0
      %1158 = vmatmul.mubr.bf16.gmra.mrb[0].mxu0 %v1123
      %v1159 = vpop.f32.mrb[0].mxu0
      %v1160 = vadd.f32 %v1119, %v1159
      %v1161 = vpop.f32.mrb[0].mxu0
      %v1162 = vadd.f32 %v1119, %v1161
      %v1163 = vpop.f32.mrb[0].mxu0
      %v1164 = vpop.f32.mrb[0].mxu0
      %1165 = vdwg.mxu0
      %vm1166 = vcmp.gt.f32.partialorder %v1160, 0.0
      %vm1167 = vcmp.gt.f32.partialorder %v1162, 0.0
      %v1168 = vmul.f32 %v1160, 0.1
      %v1169 = vmul.f32 %v1162, 0.1
      %v1170 = vsel %vm1166, %v1160, %v1168
      %v1171 = vsel %vm1167, %v1162, %v1169
      %v1172 = vmul.f32 %v1101, %v1170
      %v1173 = vmul.f32 %v1105, %v1171
      %v1174 = vpack.c.bf16 %v1172, %v1172
      %v1175 = vpack.c.bf16 %v1173, %v1173
      %v1178 = vunpack.c.l.b16 %v1174
      %v1179 = vunpack.c.l.b16 %v1175
      %v1180 = vpack.c.b16 %v1179, %v1178
      %1182 = vst [vmem:[#allocation2 + $0x4] sm:$0xff] %v1180
      %v1183 = vld [vmem:[#allocation2] sm:$0xff]
      %v1184 = vld [vmem:[#allocation2 + $0x8] sm:$0xf]
      %1187 = vrot.lane.b32.xlu0 %v1183, 43
      %v1188 = vpop.permute.xlu0 %1187
      %1189 = vrot.lane.b32.xlu0 %v1184, 43
      %v1190 = vpop.permute.xlu0 %1189
      %v1191 = vrot.slane %v1188, 4
      %v1192 = vrot.slane %v1190, 4
      %v1193 = vsel %vm357, %v1191, %v1192
      %vm1194 = vcmask 351232
      %v1195 = vsel %vm1194, %v1188, %v1193
      %1197 = vst [vmem:[#allocation4] sm:$0xff] %v1195
      %v1198 = vld [vmem:[#allocation2] sm:$0xff]
      %v1199 = vld [vmem:[#allocation2 + $0x8] sm:$0xf]
      %1202 = vrot.lane.b32.xlu0 %v1198, 42
      %v1203 = vpop.permute.xlu0 %1202
      %1204 = vrot.lane.b32.xlu0 %v1199, 42
      %v1205 = vpop.permute.xlu0 %1204
      %v1206 = vrot.slane %v1203, 4
      %v1207 = vrot.slane %v1205, 4
      %v1208 = vsel %vm357, %v1206, %v1207
      %vm1209 = vcmask 343040
      %v1210 = vsel %vm1209, %v1203, %v1208
      %1212 = vst [vmem:[#allocation4 + $0x8] sm:$0xff] %v1210
      %v1213 = vld [vmem:[#allocation2] sm:$0xff]
      %v1214 = vld [vmem:[#allocation2 + $0x8] sm:$0xf]
      %1217 = vrot.lane.b32.xlu0 %v1213, 41
      %v1218 = vpop.permute.xlu0 %1217
      %1219 = vrot.lane.b32.xlu0 %v1214, 41
      %v1220 = vpop.permute.xlu0 %1219
      %v1221 = vrot.slane %v1218, 4
      %v1222 = vrot.slane %v1220, 4
      %v1223 = vsel %vm357, %v1221, %v1222
      %vm1224 = vcmask 334848
      %v1225 = vsel %vm1224, %v1218, %v1223
      %1227 = vst [vmem:[#allocation4 + $0x10] sm:$0xff] %v1225
      %v1228 = vld [vmem:[#allocation2] sm:$0xff]
      %v1229 = vld [vmem:[#allocation2 + $0x8] sm:$0xf]
      %1232 = vrot.lane.b32.xlu0 %v1228, 37
      %v1233 = vpop.permute.xlu0 %1232
      %1234 = vrot.lane.b32.xlu0 %v1229, 37
      %v1235 = vpop.permute.xlu0 %1234
      %v1236 = vrot.slane %v1233, 4
      %v1237 = vrot.slane %v1235, 4
      %v1238 = vsel %vm357, %v1236, %v1237
      %vm1239 = vcmask 302080
      %v1240 = vsel %vm1239, %v1233, %v1238
      %1242 = vst [vmem:[#allocation4 + $0x18] sm:$0xff] %v1240
      %v1243 = vld [vmem:[#allocation2] sm:$0xff]
      %v1244 = vld [vmem:[#allocation2 + $0x8] sm:$0xf]
      %1247 = vrot.lane.b32.xlu0 %v1243, 36
      %v1248 = vpop.permute.xlu0 %1247
      %1249 = vrot.lane.b32.xlu0 %v1244, 36
      %v1250 = vpop.permute.xlu0 %1249
      %v1251 = vrot.slane %v1248, 4
      %v1252 = vrot.slane %v1250, 4
      %v1253 = vsel %vm357, %v1251, %v1252
      %vm1254 = vcmask 293888
      %v1255 = vsel %vm1254, %v1248, %v1253
      %1257 = vst [vmem:[#allocation4 + $0x20] sm:$0xff] %v1255
      %v1258 = vld [vmem:[#allocation2] sm:$0xff]
      %v1259 = vld [vmem:[#allocation2 + $0x8] sm:$0xf]
      %1262 = vrot.lane.b32.xlu0 %v1258, 35
      %v1263 = vpop.permute.xlu0 %1262
      %1264 = vrot.lane.b32.xlu0 %v1259, 35
      %v1265 = vpop.permute.xlu0 %1264
      %v1266 = vrot.slane %v1263, 4
      %v1267 = vrot.slane %v1265, 4
      %v1268 = vsel %vm357, %v1266, %v1267
      %vm1269 = vcmask 285696
      %v1270 = vsel %vm1269, %v1263, %v1268
      %1272 = vst [vmem:[#allocation4 + $0x28] sm:$0xff] %v1270
      %v1273 = vld [vmem:[#allocation2] sm:$0xff]
      %v1274 = vld [vmem:[#allocation2 + $0x8] sm:$0xf]
      %1277 = vrot.lane.b32.xlu0 %v1273, 31
      %v1278 = vpop.permute.xlu0 %1277
      %1279 = vrot.lane.b32.xlu0 %v1274, 31
      %v1280 = vpop.permute.xlu0 %1279
      %v1281 = vrot.slane %v1278, 4
      %v1282 = vrot.slane %v1280, 4
      %v1283 = vsel %vm357, %v1281, %v1282
      %vm1284 = vcmask 252928
      %v1285 = vsel %vm1284, %v1278, %v1283
      %1287 = vst [vmem:[#allocation4 + $0x30] sm:$0xff] %v1285
      %v1288 = vld [vmem:[#allocation2] sm:$0xff]
      %v1289 = vld [vmem:[#allocation2 + $0x8] sm:$0xf]
      %1292 = vrot.lane.b32.xlu0 %v1288, 30
      %v1293 = vpop.permute.xlu0 %1292
      %1294 = vrot.lane.b32.xlu0 %v1289, 30
      %v1295 = vpop.permute.xlu0 %1294
      %v1296 = vrot.slane %v1293, 4
      %v1297 = vrot.slane %v1295, 4
      %v1298 = vsel %vm357, %v1296, %v1297
      %vm1299 = vcmask 244736
      %v1300 = vsel %vm1299, %v1293, %v1298
      %1302 = vst [vmem:[#allocation4 + $0x38] sm:$0xff] %v1300
      %v1303 = vld [vmem:[#allocation2] sm:$0xff]
      %v1304 = vld [vmem:[#allocation2 + $0x8] sm:$0xf]
      %1307 = vrot.lane.b32.xlu0 %v1303, 29
      %v1308 = vpop.permute.xlu0 %1307
      %1309 = vrot.lane.b32.xlu0 %v1304, 29
      %v1310 = vpop.permute.xlu0 %1309
      %v1311 = vrot.slane %v1308, 4
      %v1312 = vrot.slane %v1310, 4
      %v1313 = vsel %vm357, %v1311, %v1312
      %vm1314 = vcmask 236544
      %v1315 = vsel %vm1314, %v1308, %v1313
      %1317 = vst [vmem:[#allocation4 + $0x40] sm:$0xff] %v1315
      %v1318 = vld [vmem:[#allocation2] sm:$0xff]
      %v1319 = vld [vmem:[#allocation2 + $0x8] sm:$0xf]
      %1322 = vrot.lane.b32.xlu0 %v1318, 7
      %v1323 = vpop.permute.xlu0 %1322
      %1324 = vrot.lane.b32.xlu0 %v1319, 7
      %v1325 = vpop.permute.xlu0 %1324
      %v1326 = vrot.slane %v1323, 4
      %v1327 = vrot.slane %v1325, 4
      %v1328 = vsel %vm357, %v1326, %v1327
      %vm1329 = vcmask 56320
      %v1330 = vsel %vm1329, %v1323, %v1328
      %1332 = vst [vmem:[#allocation4 + $0x48] sm:$0xff] %v1330
      %v1333 = vld [vmem:[#allocation2] sm:$0xff]
      %v1334 = vld [vmem:[#allocation2 + $0x8] sm:$0xf]
      %1337 = vrot.lane.b32.xlu0 %v1333, 6
      %v1338 = vpop.permute.xlu0 %1337
      %1339 = vrot.lane.b32.xlu0 %v1334, 6
      %v1340 = vpop.permute.xlu0 %1339
      %v1341 = vrot.slane %v1338, 4
      %v1342 = vrot.slane %v1340, 4
      %v1343 = vsel %vm357, %v1341, %v1342
      %vm1344 = vcmask 48128
      %v1345 = vsel %vm1344, %v1338, %v1343
      %1347 = vst [vmem:[#allocation4 + $0x50] sm:$0xff] %v1345
      %v1348 = vld [vmem:[#allocation2] sm:$0xff]
      %v1349 = vld [vmem:[#allocation2 + $0x8] sm:$0xf]
      %1352 = vrot.lane.b32.xlu0 %v1348, 5
      %v1353 = vpop.permute.xlu0 %1352
      %1354 = vrot.lane.b32.xlu0 %v1349, 5
      %v1355 = vpop.permute.xlu0 %1354
      %v1356 = vrot.slane %v1353, 4
      %v1357 = vrot.slane %v1355, 4
      %v1358 = vsel %vm357, %v1356, %v1357
      %vm1359 = vcmask 39936
      %v1360 = vsel %vm1359, %v1353, %v1358
      %1362 = vst [vmem:[#allocation4 + $0x58] sm:$0xff] %v1360
      %v1363 = vld [vmem:[#allocation2] sm:$0xff]
      %v1364 = vld [vmem:[#allocation2 + $0x8] sm:$0xf]
      %1367 = vrot.lane.b32.xlu0 %v1363, 1
      %v1368 = vpop.permute.xlu0 %1367
      %1369 = vrot.lane.b32.xlu0 %v1364, 1
      %v1370 = vpop.permute.xlu0 %1369
      %v1371 = vrot.slane %v1368, 4
      %v1372 = vrot.slane %v1370, 4
      %v1373 = vsel %vm357, %v1371, %v1372
      %vm1374 = vcmask 7168
      %v1375 = vsel %vm1374, %v1368, %v1373
      %1377 = vst [vmem:[#allocation4 + $0x60] sm:$0xff] %v1375
      %v1378 = vld [vmem:[#allocation2 + $0x4] sm:$0xff]
      %1379 = vst [vmem:[#allocation4 + $0x68] sm:$0xff] %v1378
      %v1380 = vld [vmem:[#allocation2 + $0x4] sm:$0xff]
      %v1381 = vld [vmem:[#allocation2 + $0xc] sm:$0xf]
      %1384 = vrot.lane.b32.xlu0 %v1380, 127
      %v1385 = vpop.permute.xlu0 %1384
      %1386 = vrot.lane.b32.xlu0 %v1381, 127
      %v1387 = vpop.permute.xlu0 %1386
      %v1388 = vrot.slane %v1385, 4
      %v1389 = vrot.slane %v1387, 4
      %v1390 = vsel %vm357, %v1388, %v1389
      %v1391 = vsel %vm359, %v1385, %v1390
      %1393 = vst [vmem:[#allocation4 + $0x70] sm:$0xff] %v1391
      %v1394 = vld [vmem:[#allocation2 + $0x4] sm:$0xff]
      %v1395 = vld [vmem:[#allocation2 + $0xc] sm:$0xf]
      %1398 = vrot.lane.b32.xlu0 %v1394, 123
      %v1399 = vpop.permute.xlu0 %1398
      %1400 = vrot.lane.b32.xlu0 %v1395, 123
      %v1401 = vpop.permute.xlu0 %1400
      %v1402 = vrot.slane %v1399, 4
      %v1403 = vrot.slane %v1401, 4
      %v1404 = vsel %vm357, %v1402, %v1403
      %vm1405 = vcmask 1006592
      %v1406 = vsel %vm1405, %v1399, %v1404
      %1408 = vst [vmem:[#allocation4 + $0x78] sm:$0xff] %v1406
      %v1409 = vld [vmem:[#allocation2 + $0x4] sm:$0xff]
      %v1410 = vld [vmem:[#allocation2 + $0xc] sm:$0xf]
      %1413 = vrot.lane.b32.xlu0 %v1409, 122
      %v1414 = vpop.permute.xlu0 %1413
      %1415 = vrot.lane.b32.xlu0 %v1410, 122
      %v1416 = vpop.permute.xlu0 %1415
      %v1417 = vrot.slane %v1414, 4
      %v1418 = vrot.slane %v1416, 4
      %v1419 = vsel %vm357, %v1417, %v1418
      %v1420 = vsel %vm439, %v1414, %v1419
      %1422 = vst [vmem:[#allocation4 + $0x80] sm:$0xff] %v1420
      %v1423 = vld [vmem:[#allocation2 + $0x4] sm:$0xff]
      %v1424 = vld [vmem:[#allocation2 + $0xc] sm:$0xf]
      %1427 = vrot.lane.b32.xlu0 %v1423, 121
      %v1428 = vpop.permute.xlu0 %1427
      %1429 = vrot.lane.b32.xlu0 %v1424, 121
      %v1430 = vpop.permute.xlu0 %1429
      %v1431 = vrot.slane %v1428, 4
      %v1432 = vrot.slane %v1430, 4
      %v1433 = vsel %vm357, %v1431, %v1432
      %v1434 = vsel %vm494, %v1428, %v1433
      %1436 = vst [vmem:[#allocation4 + $0x88] sm:$0xff] %v1434
      %v1437 = vld [vmem:[#allocation2 + $0x4] sm:$0xff]
      %v1438 = vld [vmem:[#allocation2 + $0xc] sm:$0xf]
      %1441 = vrot.lane.b32.xlu0 %v1437, 99
      %v1442 = vpop.permute.xlu0 %1441
      %1443 = vrot.lane.b32.xlu0 %v1438, 99
      %v1444 = vpop.permute.xlu0 %1443
      %v1445 = vrot.slane %v1442, 4
      %v1446 = vrot.slane %v1444, 4
      %v1447 = vsel %vm357, %v1445, %v1446
      %vm1448 = vcmask 809984
      %v1449 = vsel %vm1448, %v1442, %v1447
      %1451 = vst [vmem:[#allocation4 + $0x90] sm:$0xff] %v1449
      %v1452 = vld [vmem:[#allocation2 + $0x4] sm:$0xff]
      %v1453 = vld [vmem:[#allocation2 + $0xc] sm:$0xf]
      %1456 = vrot.lane.b32.xlu0 %v1452, 98
      %v1457 = vpop.permute.xlu0 %1456
      %1458 = vrot.lane.b32.xlu0 %v1453, 98
      %v1459 = vpop.permute.xlu0 %1458
      %v1460 = vrot.slane %v1457, 4
      %v1461 = vrot.slane %v1459, 4
      %v1462 = vsel %vm357, %v1460, %v1461
      %vm1463 = vcmask 801792
      %v1464 = vsel %vm1463, %v1457, %v1462
      %1466 = vst [vmem:[#allocation4 + $0x98] sm:$0xff] %v1464
      %v1467 = vld [vmem:[#allocation2 + $0x4] sm:$0xff]
      %v1468 = vld [vmem:[#allocation2 + $0xc] sm:$0xf]
      %1471 = vrot.lane.b32.xlu0 %v1467, 97
      %v1472 = vpop.permute.xlu0 %1471
      %1473 = vrot.lane.b32.xlu0 %v1468, 97
      %v1474 = vpop.permute.xlu0 %1473
      %v1475 = vrot.slane %v1472, 4
      %v1476 = vrot.slane %v1474, 4
      %v1477 = vsel %vm357, %v1475, %v1476
      %vm1478 = vcmask 793600
      %v1479 = vsel %vm1478, %v1472, %v1477
      %1481 = vst [vmem:[#allocation4 + $0xa0] sm:$0xff] %v1479
      %v1482 = vld [vmem:[#allocation2 + $0x4] sm:$0xff]
      %v1483 = vld [vmem:[#allocation2 + $0xc] sm:$0xf]
      %1486 = vrot.lane.b32.xlu0 %v1482, 93
      %v1487 = vpop.permute.xlu0 %1486
      %1488 = vrot.lane.b32.xlu0 %v1483, 93
      %v1489 = vpop.permute.xlu0 %1488
      %v1490 = vrot.slane %v1487, 4
      %v1491 = vrot.slane %v1489, 4
      %v1492 = vsel %vm357, %v1490, %v1491
      %vm1493 = vcmask 760832
      %v1494 = vsel %vm1493, %v1487, %v1492
      %1496 = vst [vmem:[#allocation4 + $0xa8] sm:$0xff] %v1494
      %v1497 = vld [vmem:[#allocation2 + $0x4] sm:$0xff]
      %v1498 = vld [vmem:[#allocation2 + $0xc] sm:$0xf]
      %1501 = vrot.lane.b32.xlu0 %v1497, 92
      %v1502 = vpop.permute.xlu0 %1501
      %1503 = vrot.lane.b32.xlu0 %v1498, 92
      %v1504 = vpop.permute.xlu0 %1503
      %v1505 = vrot.slane %v1502, 4
      %v1506 = vrot.slane %v1504, 4
      %v1507 = vsel %vm357, %v1505, %v1506
      %v1508 = vsel %vm707, %v1502, %v1507
      %1510 = vst [vmem:[#allocation4 + $0xb0] sm:$0xff] %v1508
      %v1511 = vld [vmem:[#allocation2 + $0x4] sm:$0xff]
      %v1512 = vld [vmem:[#allocation2 + $0xc] sm:$0xf]
      %1515 = vrot.lane.b32.xlu0 %v1511, 91
      %v1516 = vpop.permute.xlu0 %1515
      %1517 = vrot.lane.b32.xlu0 %v1512, 91
      %v1518 = vpop.permute.xlu0 %1517
      %v1519 = vrot.slane %v1516, 4
      %v1520 = vrot.slane %v1518, 4
      %v1521 = vsel %vm357, %v1519, %v1520
      %v1522 = vsel %vm762, %v1516, %v1521
      %1524 = vst [vmem:[#allocation4 + $0xb8] sm:$0xff] %v1522
      %v1525 = vld [vmem:[#allocation2 + $0x4] sm:$0xff]
      %v1526 = vld [vmem:[#allocation2 + $0xc] sm:$0xf]
      %1529 = vrot.lane.b32.xlu0 %v1525, 87
      %v1530 = vpop.permute.xlu0 %1529
      %1531 = vrot.lane.b32.xlu0 %v1526, 87
      %v1532 = vpop.permute.xlu0 %1531
      %v1533 = vrot.slane %v1530, 4
      %v1534 = vrot.slane %v1532, 4
      %v1535 = vsel %vm357, %v1533, %v1534
      %vm1536 = vcmask 711680
      %v1537 = vsel %vm1536, %v1530, %v1535
      %1539 = vst [vmem:[#allocation4 + $0xc0] sm:$0xff] %v1537
      %v1540 = vld [vmem:[#allocation2 + $0x4] sm:$0xff]
      %v1541 = vld [vmem:[#allocation2 + $0xc] sm:$0xf]
      %1544 = vrot.lane.b32.xlu0 %v1540, 86
      %v1545 = vpop.permute.xlu0 %1544
      %1546 = vrot.lane.b32.xlu0 %v1541, 86
      %v1547 = vpop.permute.xlu0 %1546
      %v1548 = vrot.slane %v1545, 4
      %v1549 = vrot.slane %v1547, 4
      %v1550 = vsel %vm357, %v1548, %v1549
      %v1551 = vsel %vm871, %v1545, %v1550
      %1553 = vst [vmem:[#allocation4 + $0xc8] sm:$0xff] %v1551
      %v1554 = vld [vmem:[#allocation2 + $0x4] sm:$0xff]
      %v1555 = vld [vmem:[#allocation2 + $0xc] sm:$0xf]
      %1558 = vrot.lane.b32.xlu0 %v1554, 85
      %v1559 = vpop.permute.xlu0 %1558
      %1560 = vrot.lane.b32.xlu0 %v1555, 85
      %v1561 = vpop.permute.xlu0 %1560
      %v1562 = vrot.slane %v1559, 4
      %v1563 = vrot.slane %v1561, 4
      %v1564 = vsel %vm357, %v1562, %v1563
      %v1565 = vsel %vm926, %v1559, %v1564
      %1567 = vst [vmem:[#allocation4 + $0xd0] sm:$0xff] %v1565
      %v1568 = vld [vmem:[%s5] sm:$0xff]
      %v1569 = vld [vmem:[%s5 + $0x8] sm:$0xff]
      %v1570 = vld [vmem:[#allocation4] sm:$0xff]
      %v1571 = vld [vmem:[#allocation4 + $0x8] sm:$0xff]
      %v1572 = vld [vmem:[#allocation4 + $0x10] sm:$0xff]
      %v1573 = vld [vmem:[#allocation4 + $0x18] sm:$0xff]
      %v1574 = vld [vmem:[#allocation4 + $0x20] sm:$0xff]
      %v1575 = vld [vmem:[#allocation4 + $0x28] sm:$0xff]
      %v1576 = vld [vmem:[#allocation4 + $0x30] sm:$0xff]
      %v1577 = vld [vmem:[#allocation4 + $0x38] sm:$0xff]
      %v1578 = vld [vmem:[#allocation4 + $0x40] sm:$0xff]
      %v1579 = vld [vmem:[#allocation4 + $0x48] sm:$0xff]
      %v1580 = vld [vmem:[#allocation4 + $0x50] sm:$0xff]
      %v1581 = vld [vmem:[#allocation4 + $0x58] sm:$0xff]
      %v1582 = vld [vmem:[#allocation4 + $0x60] sm:$0xff]
      %v1583 = vld [vmem:[#allocation4 + $0x68] sm:$0xff]
      %v1584 = vld [vmem:[#allocation4 + $0x70] sm:$0xff]
      %v1585 = vld [vmem:[#allocation4 + $0x78] sm:$0xff]
      %v1586 = vld [vmem:[#allocation4 + $0x80] sm:$0xff]
      %v1587 = vld [vmem:[#allocation4 + $0x88] sm:$0xff]
      %v1588 = vld [vmem:[#allocation4 + $0x90] sm:$0xff]
      %v1589 = vld [vmem:[#allocation4 + $0x98] sm:$0xff]
      %v1590 = vld [vmem:[#allocation4 + $0xa0] sm:$0xff]
      %v1591 = vld [vmem:[#allocation4 + $0xa8] sm:$0xff]
      %v1592 = vld [vmem:[#allocation4 + $0xb0] sm:$0xff]
      %v1593 = vld [vmem:[#allocation4 + $0xb8] sm:$0xff]
      %v1594 = vld [vmem:[#allocation4 + $0xc0] sm:$0xff]
      %v1595 = vld [vmem:[#allocation4 + $0xc8] sm:$0xff]
      %v1596 = vld [vmem:[#allocation4 + $0xd0] sm:$0xff]
      %v1597 = vld [vmem:[%s6] sm:$0xff]
      %v1598 = vld [vmem:[%s6 + $0x8] sm:$0xff]
      %1600 = vset.pattern.permute.xlu0 0
      %1601 = vperm.xlu0 %1600, %v1597
      %v1602 = vpop.permute.xlu0 %1601
      %1605 = vset.pattern.permute.xlu0 0
      %1606 = vperm.xlu0 %1605, %v1598
      %v1607 = vpop.permute.xlu0 %1606
      %v1611 = vunpack.c.l.b16 %v1568
      %v1612 = vunpack.c.h.b16 %v1568
      %v1613 = vunpack.c.l.b16 %v1569
      %v1614 = vunpack.c.h.b16 %v1569
      %v1615 = vpack.c.b16 %v1613, %v1611
      %v1616 = vpack.c.b16 %v1614, %v1612
      %v1645 = vunpack.c.l.b16 %v1570
      %v1646 = vunpack.c.h.b16 %v1570
      %v1647 = vunpack.c.l.b16 %v1571
      %v1648 = vunpack.c.h.b16 %v1571
      %v1649 = vunpack.c.l.b16 %v1572
      %v1650 = vunpack.c.h.b16 %v1572
      %v1651 = vunpack.c.l.b16 %v1573
      %v1652 = vunpack.c.h.b16 %v1573
      %v1653 = vunpack.c.l.b16 %v1574
      %v1654 = vunpack.c.h.b16 %v1574
      %v1655 = vunpack.c.l.b16 %v1575
      %v1656 = vunpack.c.h.b16 %v1575
      %v1657 = vunpack.c.l.b16 %v1576
      %v1658 = vunpack.c.h.b16 %v1576
      %v1659 = vunpack.c.l.b16 %v1577
      %v1660 = vunpack.c.h.b16 %v1577
      %v1661 = vunpack.c.l.b16 %v1578
      %v1662 = vunpack.c.h.b16 %v1578
      %v1663 = vunpack.c.l.b16 %v1579
      %v1664 = vunpack.c.h.b16 %v1579
      %v1665 = vunpack.c.l.b16 %v1580
      %v1666 = vunpack.c.h.b16 %v1580
      %v1667 = vunpack.c.l.b16 %v1581
      %v1668 = vunpack.c.h.b16 %v1581
      %v1669 = vunpack.c.l.b16 %v1582
      %v1670 = vunpack.c.h.b16 %v1582
      %v1671 = vunpack.c.l.b16 %v1583
      %v1672 = vunpack.c.h.b16 %v1583
      %v1673 = vunpack.c.l.b16 %v1584
      %v1674 = vunpack.c.h.b16 %v1584
      %v1675 = vunpack.c.l.b16 %v1585
      %v1676 = vunpack.c.h.b16 %v1585
      %v1677 = vunpack.c.l.b16 %v1586
      %v1678 = vunpack.c.h.b16 %v1586
      %v1679 = vunpack.c.l.b16 %v1587
      %v1680 = vunpack.c.h.b16 %v1587
      %v1681 = vunpack.c.l.b16 %v1588
      %v1682 = vunpack.c.h.b16 %v1588
      %v1683 = vunpack.c.l.b16 %v1589
      %v1684 = vunpack.c.h.b16 %v1589
      %v1685 = vunpack.c.l.b16 %v1590
      %v1686 = vunpack.c.h.b16 %v1590
      %v1687 = vunpack.c.l.b16 %v1591
      %v1688 = vunpack.c.h.b16 %v1591
      %v1689 = vunpack.c.l.b16 %v1592
      %v1690 = vunpack.c.h.b16 %v1592
      %v1691 = vunpack.c.l.b16 %v1593
      %v1692 = vunpack.c.h.b16 %v1593
      %v1693 = vunpack.c.l.b16 %v1594
      %v1694 = vunpack.c.h.b16 %v1594
      %v1695 = vunpack.c.l.b16 %v1595
      %v1696 = vunpack.c.h.b16 %v1595
      %v1697 = vunpack.c.l.b16 %v1596
      %v1698 = vunpack.c.h.b16 %v1596
      %v1699 = vpack.c.b16 %v1647, %v1645
      %v1700 = vpack.c.b16 %v1648, %v1646
      %v1701 = vpack.c.b16 %v1651, %v1649
      %v1702 = vpack.c.b16 %v1652, %v1650
      %v1703 = vpack.c.b16 %v1655, %v1653
      %v1704 = vpack.c.b16 %v1656, %v1654
      %v1705 = vpack.c.b16 %v1659, %v1657
      %v1706 = vpack.c.b16 %v1660, %v1658
      %v1707 = vpack.c.b16 %v1663, %v1661
      %v1708 = vpack.c.b16 %v1664, %v1662
      %v1709 = vpack.c.b16 %v1667, %v1665
      %v1710 = vpack.c.b16 %v1668, %v1666
      %v1711 = vpack.c.b16 %v1671, %v1669
      %v1712 = vpack.c.b16 %v1672, %v1670
      %v1713 = vpack.c.b16 %v1675, %v1673
      %v1714 = vpack.c.b16 %v1676, %v1674
      %v1715 = vpack.c.b16 %v1679, %v1677
      %v1716 = vpack.c.b16 %v1680, %v1678
      %v1717 = vpack.c.b16 %v1683, %v1681
      %v1718 = vpack.c.b16 %v1684, %v1682
      %v1719 = vpack.c.b16 %v1687, %v1685
      %v1720 = vpack.c.b16 %v1688, %v1686
      %v1721 = vpack.c.b16 %v1691, %v1689
      %v1722 = vpack.c.b16 %v1692, %v1690
      %v1723 = vpack.c.b16 %v1695, %v1693
      %v1724 = vpack.c.b16 %v1696, %v1694
      %v1725 = vpack.c.b16 %v1697, %v1697
      %v1726 = vpack.c.b16 %v1698, %v1698
      %vm1753 = vcmask 719872
      %v1755 = vsel %vm1753, %v1616, 0
      %vm1757 = vcmask 1043456
      %v1759 = vsel %vm1757, %v1725, 0
      %v1762 = vsel %vm1757, %v1726, 0
      %1764 = vmatprep.subr.bf16.mxu0 %v1700
      %1765 = vmatpush1.bf16.msra.mxu0 %v1699
      %1766 = vmatprep.subr.bf16.mxu0 %v1702
      %1767 = vmatpush1.bf16.msra.mxu0 %v1701
      %1768 = vmatprep.subr.bf16.mxu0 %v1704
      %1769 = vmatpush1.bf16.msra.mxu0 %v1703
      %1770 = vmatprep.subr.bf16.mxu0 %v1706
      %1771 = vmatpush1.bf16.msra.mxu0 %v1705
      %1772 = vmatprep.subr.bf16.mxu0 %v1708
      %1773 = vmatpush1.bf16.msra.mxu0 %v1707
      %1774 = vmatprep.subr.bf16.mxu0 %v1710
      %1775 = vmatpush1.bf16.msra.mxu0 %v1709
      %1776 = vmatprep.subr.bf16.mxu0 %v1712
      %1777 = vmatpush1.bf16.msra.mxu0 %v1711
      %1778 = vmatprep.subr.bf16.mxu0 %v1714
      %1779 = vmatpush1.bf16.msra.mxu0 %v1713
      %1780 = vmatprep.subr.bf16.mxu0 %v1716
      %1781 = vmatpush1.bf16.msra.mxu0 %v1715
      %1782 = vmatprep.subr.bf16.mxu0 %v1718
      %1783 = vmatpush1.bf16.msra.mxu0 %v1717
      %1784 = vmatprep.subr.bf16.mxu0 %v1720
      %1785 = vmatpush1.bf16.msra.mxu0 %v1719
      %1786 = vmatprep.subr.bf16.mxu0 %v1722
      %1787 = vmatpush1.bf16.msra.mxu0 %v1721
      %1788 = vmatprep.subr.bf16.mxu0 %v1724
      %1789 = vmatpush1.bf16.msra.mxu0 %v1723
      %1790 = vmatprep.subr.bf16.mxu0 %v1762
      %1791 = vmatpush1.bf16.msra.mxu0 %v1759
      %1792 = vmatprep.subr.bf16.mxu0 0
      %1793 = vmatpush1.bf16.msra.mxu0 0
      %1794 = vmatprep.subr.bf16.mxu0 0
      %1795 = vmatpush1.bf16.msra.mxu0 0
      %1796 = vmatprep.mubr.bf16.mxu0 %v1755
      %1797 = vmatmul.mubr.bf16.gmra.mrb[0].mxu0 %v1615
      %v1798 = vpop.f32.mrb[0].mxu0
      %v1799 = vadd.f32 %v1602, %v1798
      %v1800 = vpop.f32.mrb[0].mxu0
      %v1801 = vadd.f32 %v1602, %v1800
      %v1802 = vpop.f32.mrb[0].mxu0
      %v1803 = vadd.f32 %v1607, %v1802
      %v1804 = vpop.f32.mrb[0].mxu0
      %v1805 = vadd.f32 %v1607, %v1804
      %1806 = vdwg.mxu0
      %vm1807 = vcmp.gt.f32.partialorder %v1799, 0.0
      %vm1808 = vcmp.gt.f32.partialorder %v1801, 0.0
      %vm1809 = vcmp.gt.f32.partialorder %v1803, 0.0
      %vm1810 = vcmp.gt.f32.partialorder %v1805, 0.0
      %v1811 = vmul.f32 %v1799, 0.1
      %v1812 = vmul.f32 %v1801, 0.1
      %v1813 = vmul.f32 %v1803, 0.1
      %v1814 = vmul.f32 %v1805, 0.1
      %v1815 = vsel %vm1807, %v1799, %v1811
      %v1816 = vsel %vm1808, %v1801, %v1812
      %v1817 = vsel %vm1809, %v1803, %v1813
      %v1818 = vsel %vm1810, %v1805, %v1814
      %v1819 = vmul.f32 %v1101, %v1815
      %v1820 = vmul.f32 %v1105, %v1816
      %v1821 = vmul.f32 %v1101, %v1817
      %v1822 = vmul.f32 %v1105, %v1818
      %v1823 = vadd.f32 %v1819, %v1108
      %v1824 = vadd.f32 %v1820, %v1109
      %v1825 = vadd.f32 %v1821, %v1110
      %v1826 = vadd.f32 %v1822, %v1111
      %s1827 = scalar_lea.vmem %s3, 4
      %v1828 = vld [vmem:[%s1827] sm:$0xf]
      %v1829 = vpack.c.bf16 %v1825, %v1823
      %v1830 = vpack.c.bf16 %v1826, %v1824
      %s1831 = scalar_lea.vmem %s4, 8
      %v1832 = vld [vmem:[%s1831] sm:$0xff]
      %1834 = vset.pattern.permute.xlu0 0
      %1835 = vperm.xlu0 %1834, %v1832
      %v1836 = vpop.permute.xlu0 %1835
      %v1839 = vsel %vm1121, %v1828, 0
      %1841 = vmatprep.subr.bf16.mxu0 %v1830
      %1842 = vmatpush1.bf16.msra.mxu0 %v1829
      %1843 = vmatprep.subr.bf16.mxu0 0
      %1844 = vmatpush1.bf16.msra.mxu0 0
      %1845 = vmatprep.subr.bf16.mxu0 0
      %1846 = vmatpush1.bf16.msra.mxu0 0
      %1847 = vmatprep.subr.bf16.mxu0 0
      %1848 = vmatpush1.bf16.msra.mxu0 0
      %1849 = vmatprep.subr.bf16.mxu0 0
      %1850 = vmatpush1.bf16.msra.mxu0 0
      %1851 = vmatprep.subr.bf16.mxu0 0
      %1852 = vmatpush1.bf16.msra.mxu0 0
      %1853 = vmatprep.subr.bf16.mxu0 0
      %1854 = vmatpush1.bf16.msra.mxu0 0
      %1855 = vmatprep.subr.bf16.mxu0 0
      %1856 = vmatpush1.bf16.msra.mxu0 0
      %1857 = vmatprep.subr.bf16.mxu0 0
      %1858 = vmatpush1.bf16.msra.mxu0 0
      %1859 = vmatprep.subr.bf16.mxu0 0
      %1860 = vmatpush1.bf16.msra.mxu0 0
      %1861 = vmatprep.subr.bf16.mxu0 0
      %1862 = vmatpush1.bf16.msra.mxu0 0
      %1863 = vmatprep.subr.bf16.mxu0 0
      %1864 = vmatpush1.bf16.msra.mxu0 0
      %1865 = vmatprep.subr.bf16.mxu0 0
      %1866 = vmatpush1.bf16.msra.mxu0 0
      %1867 = vmatprep.subr.bf16.mxu0 0
      %1868 = vmatpush1.bf16.msra.mxu0 0
      %1869 = vmatprep.subr.bf16.mxu0 0
      %1870 = vmatpush1.bf16.msra.mxu0 0
      %1871 = vmatprep.subr.bf16.mxu0 0
      %1872 = vmatpush1.bf16.msra.mxu0 0
      %1873 = vmatprep.mubr.bf16.mxu0 0
      %1874 = vmatmul.mubr.bf16.gmra.mrb[0].mxu0 %v1839
      %v1875 = vpop.f32.mrb[0].mxu0
      %v1876 = vadd.f32 %v1836, %v1875
      %v1877 = vpop.f32.mrb[0].mxu0
      %v1878 = vadd.f32 %v1836, %v1877
      %v1879 = vpop.f32.mrb[0].mxu0
      %v1880 = vpop.f32.mrb[0].mxu0
      %1881 = vdwg.mxu0
      %vm1882 = vcmp.gt.f32.partialorder %v1876, 0.0
      %vm1883 = vcmp.gt.f32.partialorder %v1878, 0.0
      %v1884 = vmul.f32 %v1876, 0.1
      %v1885 = vmul.f32 %v1878, 0.1
      %v1886 = vsel %vm1882, %v1876, %v1884
      %v1887 = vsel %vm1883, %v1878, %v1885
      %v1888 = vmul.f32 %v1101, %v1886
      %v1889 = vmul.f32 %v1105, %v1887
      %v1890 = vpack.c.bf16 %v1888, %v1888
      %v1891 = vpack.c.bf16 %v1889, %v1889
      %v1894 = vunpack.c.l.b16 %v1890
      %v1895 = vunpack.c.l.b16 %v1891
      %v1896 = vpack.c.b16 %v1895, %v1894
      %1898 = vst [vmem:[#allocation2 + $0x4] sm:$0xff] %v1896
      %v1899 = vld [vmem:[#allocation2] sm:$0xff]
      %v1900 = vld [vmem:[#allocation2 + $0x8] sm:$0xf]
      %1903 = vrot.lane.b32.xlu0 %v1899, 43
      %v1904 = vpop.permute.xlu0 %1903
      %1905 = vrot.lane.b32.xlu0 %v1900, 43
      %v1906 = vpop.permute.xlu0 %1905
      %v1907 = vrot.slane %v1904, 4
      %v1908 = vrot.slane %v1906, 4
      %v1909 = vsel %vm357, %v1907, %v1908
      %v1910 = vsel %vm1194, %v1904, %v1909
      %1912 = vst [vmem:[#allocation4] sm:$0xff] %v1910
      %v1913 = vld [vmem:[#allocation2] sm:$0xff]
      %v1914 = vld [vmem:[#allocation2 + $0x8] sm:$0xf]
      %1917 = vrot.lane.b32.xlu0 %v1913, 42
      %v1918 = vpop.permute.xlu0 %1917
      %1919 = vrot.lane.b32.xlu0 %v1914, 42
      %v1920 = vpop.permute.xlu0 %1919
      %v1921 = vrot.slane %v1918, 4
      %v1922 = vrot.slane %v1920, 4
      %v1923 = vsel %vm357, %v1921, %v1922
      %v1924 = vsel %vm1209, %v1918, %v1923
      %1926 = vst [vmem:[#allocation4 + $0x8] sm:$0xff] %v1924
      %v1927 = vld [vmem:[#allocation2] sm:$0xff]
      %v1928 = vld [vmem:[#allocation2 + $0x8] sm:$0xf]
      %1931 = vrot.lane.b32.xlu0 %v1927, 41
      %v1932 = vpop.permute.xlu0 %1931
      %1933 = vrot.lane.b32.xlu0 %v1928, 41
      %v1934 = vpop.permute.xlu0 %1933
      %v1935 = vrot.slane %v1932, 4
      %v1936 = vrot.slane %v1934, 4
      %v1937 = vsel %vm357, %v1935, %v1936
      %v1938 = vsel %vm1224, %v1932, %v1937
      %1940 = vst [vmem:[#allocation4 + $0x10] sm:$0xff] %v1938
      %v1941 = vld [vmem:[#allocation2] sm:$0xff]
      %v1942 = vld [vmem:[#allocation2 + $0x8] sm:$0xf]
      %1945 = vrot.lane.b32.xlu0 %v1941, 37
      %v1946 = vpop.permute.xlu0 %1945
      %1947 = vrot.lane.b32.xlu0 %v1942, 37
      %v1948 = vpop.permute.xlu0 %1947
      %v1949 = vrot.slane %v1946, 4
      %v1950 = vrot.slane %v1948, 4
      %v1951 = vsel %vm357, %v1949, %v1950
      %v1952 = vsel %vm1239, %v1946, %v1951
      %1954 = vst [vmem:[#allocation4 + $0x18] sm:$0xff] %v1952
      %v1955 = vld [vmem:[#allocation2] sm:$0xff]
      %v1956 = vld [vmem:[#allocation2 + $0x8] sm:$0xf]
      %1959 = vrot.lane.b32.xlu0 %v1955, 36
      %v1960 = vpop.permute.xlu0 %1959
      %1961 = vrot.lane.b32.xlu0 %v1956, 36
      %v1962 = vpop.permute.xlu0 %1961
      %v1963 = vrot.slane %v1960, 4
      %v1964 = vrot.slane %v1962, 4
      %v1965 = vsel %vm357, %v1963, %v1964
      %v1966 = vsel %vm1254, %v1960, %v1965
      %1968 = vst [vmem:[#allocation4 + $0x20] sm:$0xff] %v1966
      %v1969 = vld [vmem:[#allocation2] sm:$0xff]
      %v1970 = vld [vmem:[#allocation2 + $0x8] sm:$0xf]
      %1973 = vrot.lane.b32.xlu0 %v1969, 35
      %v1974 = vpop.permute.xlu0 %1973
      %1975 = vrot.lane.b32.xlu0 %v1970, 35
      %v1976 = vpop.permute.xlu0 %1975
      %v1977 = vrot.slane %v1974, 4
      %v1978 = vrot.slane %v1976, 4
      %v1979 = vsel %vm357, %v1977, %v1978
      %v1980 = vsel %vm1269, %v1974, %v1979
      %1982 = vst [vmem:[#allocation4 + $0x28] sm:$0xff] %v1980
      %v1983 = vld [vmem:[#allocation2] sm:$0xff]
      %v1984 = vld [vmem:[#allocation2 + $0x8] sm:$0xf]
      %1987 = vrot.lane.b32.xlu0 %v1983, 31
      %v1988 = vpop.permute.xlu0 %1987
      %1989 = vrot.lane.b32.xlu0 %v1984, 31
      %v1990 = vpop.permute.xlu0 %1989
      %v1991 = vrot.slane %v1988, 4
      %v1992 = vrot.slane %v1990, 4
      %v1993 = vsel %vm357, %v1991, %v1992
      %v1994 = vsel %vm1284, %v1988, %v1993
      %1996 = vst [vmem:[#allocation4 + $0x30] sm:$0xff] %v1994
      %v1997 = vld [vmem:[#allocation2] sm:$0xff]
      %v1998 = vld [vmem:[#allocation2 + $0x8] sm:$0xf]
      %2001 = vrot.lane.b32.xlu0 %v1997, 30
      %v2002 = vpop.permute.xlu0 %2001
      %2003 = vrot.lane.b32.xlu0 %v1998, 30
      %v2004 = vpop.permute.xlu0 %2003
      %v2005 = vrot.slane %v2002, 4
      %v2006 = vrot.slane %v2004, 4
      %v2007 = vsel %vm357, %v2005, %v2006
      %v2008 = vsel %vm1299, %v2002, %v2007
      %2010 = vst [vmem:[#allocation4 + $0x38] sm:$0xff] %v2008
      %v2011 = vld [vmem:[#allocation2] sm:$0xff]
      %v2012 = vld [vmem:[#allocation2 + $0x8] sm:$0xf]
      %2015 = vrot.lane.b32.xlu0 %v2011, 29
      %v2016 = vpop.permute.xlu0 %2015
      %2017 = vrot.lane.b32.xlu0 %v2012, 29
      %v2018 = vpop.permute.xlu0 %2017
      %v2019 = vrot.slane %v2016, 4
      %v2020 = vrot.slane %v2018, 4
      %v2021 = vsel %vm357, %v2019, %v2020
      %v2022 = vsel %vm1314, %v2016, %v2021
      %2024 = vst [vmem:[#allocation4 + $0x40] sm:$0xff] %v2022
      %v2025 = vld [vmem:[#allocation2] sm:$0xff]
      %v2026 = vld [vmem:[#allocation2 + $0x8] sm:$0xf]
      %2029 = vrot.lane.b32.xlu0 %v2025, 7
      %v2030 = vpop.permute.xlu0 %2029
      %2031 = vrot.lane.b32.xlu0 %v2026, 7
      %v2032 = vpop.permute.xlu0 %2031
      %v2033 = vrot.slane %v2030, 4
      %v2034 = vrot.slane %v2032, 4
      %v2035 = vsel %vm357, %v2033, %v2034
      %v2036 = vsel %vm1329, %v2030, %v2035
      %2038 = vst [vmem:[#allocation4 + $0x48] sm:$0xff] %v2036
      %v2039 = vld [vmem:[#allocation2] sm:$0xff]
      %v2040 = vld [vmem:[#allocation2 + $0x8] sm:$0xf]
      %2043 = vrot.lane.b32.xlu0 %v2039, 6
      %v2044 = vpop.permute.xlu0 %2043
      %2045 = vrot.lane.b32.xlu0 %v2040, 6
      %v2046 = vpop.permute.xlu0 %2045
      %v2047 = vrot.slane %v2044, 4
      %v2048 = vrot.slane %v2046, 4
      %v2049 = vsel %vm357, %v2047, %v2048
      %v2050 = vsel %vm1344, %v2044, %v2049
      %2052 = vst [vmem:[#allocation4 + $0x50] sm:$0xff] %v2050
      %v2053 = vld [vmem:[#allocation2] sm:$0xff]
      %v2054 = vld [vmem:[#allocation2 + $0x8] sm:$0xf]
      %2057 = vrot.lane.b32.xlu0 %v2053, 5
      %v2058 = vpop.permute.xlu0 %2057
      %2059 = vrot.lane.b32.xlu0 %v2054, 5
      %v2060 = vpop.permute.xlu0 %2059
      %v2061 = vrot.slane %v2058, 4
      %v2062 = vrot.slane %v2060, 4
      %v2063 = vsel %vm357, %v2061, %v2062
      %v2064 = vsel %vm1359, %v2058, %v2063
      %2066 = vst [vmem:[#allocation4 + $0x58] sm:$0xff] %v2064
      %v2067 = vld [vmem:[#allocation2] sm:$0xff]
      %v2068 = vld [vmem:[#allocation2 + $0x8] sm:$0xf]
      %2071 = vrot.lane.b32.xlu0 %v2067, 1
      %v2072 = vpop.permute.xlu0 %2071
      %2073 = vrot.lane.b32.xlu0 %v2068, 1
      %v2074 = vpop.permute.xlu0 %2073
      %v2075 = vrot.slane %v2072, 4
      %v2076 = vrot.slane %v2074, 4
      %v2077 = vsel %vm357, %v2075, %v2076
      %v2078 = vsel %vm1374, %v2072, %v2077
      %2080 = vst [vmem:[#allocation4 + $0x60] sm:$0xff] %v2078
      %v2081 = vld [vmem:[#allocation2 + $0x4] sm:$0xff]
      %2082 = vst [vmem:[#allocation4 + $0x68] sm:$0xff] %v2081
      %v2083 = vld [vmem:[#allocation2 + $0x4] sm:$0xff]
      %v2084 = vld [vmem:[#allocation2 + $0xc] sm:$0xf]
      %2087 = vrot.lane.b32.xlu0 %v2083, 127
      %v2088 = vpop.permute.xlu0 %2087
      %2089 = vrot.lane.b32.xlu0 %v2084, 127
      %v2090 = vpop.permute.xlu0 %2089
      %v2091 = vrot.slane %v2088, 4
      %v2092 = vrot.slane %v2090, 4
      %v2093 = vsel %vm357, %v2091, %v2092
      %v2094 = vsel %vm359, %v2088, %v2093
      %2096 = vst [vmem:[#allocation4 + $0x70] sm:$0xff] %v2094
      %v2097 = vld [vmem:[#allocation2 + $0x4] sm:$0xff]
      %v2098 = vld [vmem:[#allocation2 + $0xc] sm:$0xf]
      %2101 = vrot.lane.b32.xlu0 %v2097, 123
      %v2102 = vpop.permute.xlu0 %2101
      %2103 = vrot.lane.b32.xlu0 %v2098, 123
      %v2104 = vpop.permute.xlu0 %2103
      %v2105 = vrot.slane %v2102, 4
      %v2106 = vrot.slane %v2104, 4
      %v2107 = vsel %vm357, %v2105, %v2106
      %v2108 = vsel %vm1405, %v2102, %v2107
      %2110 = vst [vmem:[#allocation4 + $0x78] sm:$0xff] %v2108
      %v2111 = vld [vmem:[#allocation2 + $0x4] sm:$0xff]
      %v2112 = vld [vmem:[#allocation2 + $0xc] sm:$0xf]
      %2115 = vrot.lane.b32.xlu0 %v2111, 122
      %v2116 = vpop.permute.xlu0 %2115
      %2117 = vrot.lane.b32.xlu0 %v2112, 122
      %v2118 = vpop.permute.xlu0 %2117
      %v2119 = vrot.slane %v2116, 4
      %v2120 = vrot.slane %v2118, 4
      %v2121 = vsel %vm357, %v2119, %v2120
      %v2122 = vsel %vm439, %v2116, %v2121
      %2124 = vst [vmem:[#allocation4 + $0x80] sm:$0xff] %v2122
      %v2125 = vld [vmem:[#allocation2 + $0x4] sm:$0xff]
      %v2126 = vld [vmem:[#allocation2 + $0xc] sm:$0xf]
      %2129 = vrot.lane.b32.xlu0 %v2125, 121
      %v2130 = vpop.permute.xlu0 %2129
      %2131 = vrot.lane.b32.xlu0 %v2126, 121
      %v2132 = vpop.permute.xlu0 %2131
      %v2133 = vrot.slane %v2130, 4
      %v2134 = vrot.slane %v2132, 4
      %v2135 = vsel %vm357, %v2133, %v2134
      %v2136 = vsel %vm494, %v2130, %v2135
      %2138 = vst [vmem:[#allocation4 + $0x88] sm:$0xff] %v2136
      %v2139 = vld [vmem:[#allocation2 + $0x4] sm:$0xff]
      %v2140 = vld [vmem:[#allocation2 + $0xc] sm:$0xf]
      %2143 = vrot.lane.b32.xlu0 %v2139, 99
      %v2144 = vpop.permute.xlu0 %2143
      %2145 = vrot.lane.b32.xlu0 %v2140, 99
      %v2146 = vpop.permute.xlu0 %2145
      %v2147 = vrot.slane %v2144, 4
      %v2148 = vrot.slane %v2146, 4
      %v2149 = vsel %vm357, %v2147, %v2148
      %v2150 = vsel %vm1448, %v2144, %v2149
      %2152 = vst [vmem:[#allocation4 + $0x90] sm:$0xff] %v2150
      %v2153 = vld [vmem:[#allocation2 + $0x4] sm:$0xff]
      %v2154 = vld [vmem:[#allocation2 + $0xc] sm:$0xf]
      %2157 = vrot.lane.b32.xlu0 %v2153, 98
      %v2158 = vpop.permute.xlu0 %2157
      %2159 = vrot.lane.b32.xlu0 %v2154, 98
      %v2160 = vpop.permute.xlu0 %2159
      %v2161 = vrot.slane %v2158, 4
      %v2162 = vrot.slane %v2160, 4
      %v2163 = vsel %vm357, %v2161, %v2162
      %v2164 = vsel %vm1463, %v2158, %v2163
      %2166 = vst [vmem:[#allocation4 + $0x98] sm:$0xff] %v2164
      %v2167 = vld [vmem:[#allocation2 + $0x4] sm:$0xff]
      %v2168 = vld [vmem:[#allocation2 + $0xc] sm:$0xf]
      %2171 = vrot.lane.b32.xlu0 %v2167, 97
      %v2172 = vpop.permute.xlu0 %2171
      %2173 = vrot.lane.b32.xlu0 %v2168, 97
      %v2174 = vpop.permute.xlu0 %2173
      %v2175 = vrot.slane %v2172, 4
      %v2176 = vrot.slane %v2174, 4
      %v2177 = vsel %vm357, %v2175, %v2176
      %v2178 = vsel %vm1478, %v2172, %v2177
      %2180 = vst [vmem:[#allocation4 + $0xa0] sm:$0xff] %v2178
      %v2181 = vld [vmem:[#allocation2 + $0x4] sm:$0xff]
      %v2182 = vld [vmem:[#allocation2 + $0xc] sm:$0xf]
      %2185 = vrot.lane.b32.xlu0 %v2181, 93
      %v2186 = vpop.permute.xlu0 %2185
      %2187 = vrot.lane.b32.xlu0 %v2182, 93
      %v2188 = vpop.permute.xlu0 %2187
      %v2189 = vrot.slane %v2186, 4
      %v2190 = vrot.slane %v2188, 4
      %v2191 = vsel %vm357, %v2189, %v2190
      %v2192 = vsel %vm1493, %v2186, %v2191
      %2194 = vst [vmem:[#allocation4 + $0xa8] sm:$0xff] %v2192
      %v2195 = vld [vmem:[#allocation2 + $0x4] sm:$0xff]
      %v2196 = vld [vmem:[#allocation2 + $0xc] sm:$0xf]
      %2199 = vrot.lane.b32.xlu0 %v2195, 92
      %v2200 = vpop.permute.xlu0 %2199
      %2201 = vrot.lane.b32.xlu0 %v2196, 92
      %v2202 = vpop.permute.xlu0 %2201
      %v2203 = vrot.slane %v2200, 4
      %v2204 = vrot.slane %v2202, 4
      %v2205 = vsel %vm357, %v2203, %v2204
      %v2206 = vsel %vm707, %v2200, %v2205
      %2208 = vst [vmem:[#allocation4 + $0xb0] sm:$0xff] %v2206
      %v2209 = vld [vmem:[#allocation2 + $0x4] sm:$0xff]
      %v2210 = vld [vmem:[#allocation2 + $0xc] sm:$0xf]
      %2213 = vrot.lane.b32.xlu0 %v2209, 91
      %v2214 = vpop.permute.xlu0 %2213
      %2215 = vrot.lane.b32.xlu0 %v2210, 91
      %v2216 = vpop.permute.xlu0 %2215
      %v2217 = vrot.slane %v2214, 4
      %v2218 = vrot.slane %v2216, 4
      %v2219 = vsel %vm357, %v2217, %v2218
      %v2220 = vsel %vm762, %v2214, %v2219
      %2222 = vst [vmem:[#allocation4 + $0xb8] sm:$0xff] %v2220
      %v2223 = vld [vmem:[#allocation2 + $0x4] sm:$0xff]
      %v2224 = vld [vmem:[#allocation2 + $0xc] sm:$0xf]
      %2227 = vrot.lane.b32.xlu0 %v2223, 87
      %v2228 = vpop.permute.xlu0 %2227
      %2229 = vrot.lane.b32.xlu0 %v2224, 87
      %v2230 = vpop.permute.xlu0 %2229
      %v2231 = vrot.slane %v2228, 4
      %v2232 = vrot.slane %v2230, 4
      %v2233 = vsel %vm357, %v2231, %v2232
      %v2234 = vsel %vm1536, %v2228, %v2233
      %2236 = vst [vmem:[#allocation4 + $0xc0] sm:$0xff] %v2234
      %v2237 = vld [vmem:[#allocation2 + $0x4] sm:$0xff]
      %v2238 = vld [vmem:[#allocation2 + $0xc] sm:$0xf]
      %2241 = vrot.lane.b32.xlu0 %v2237, 86
      %v2242 = vpop.permute.xlu0 %2241
      %2243 = vrot.lane.b32.xlu0 %v2238, 86
      %v2244 = vpop.permute.xlu0 %2243
      %v2245 = vrot.slane %v2242, 4
      %v2246 = vrot.slane %v2244, 4
      %v2247 = vsel %vm357, %v2245, %v2246
      %v2248 = vsel %vm871, %v2242, %v2247
      %2250 = vst [vmem:[#allocation4 + $0xc8] sm:$0xff] %v2248
      %v2251 = vld [vmem:[#allocation2 + $0x4] sm:$0xff]
      %v2252 = vld [vmem:[#allocation2 + $0xc] sm:$0xf]
      %2255 = vrot.lane.b32.xlu0 %v2251, 85
      %v2256 = vpop.permute.xlu0 %2255
      %2257 = vrot.lane.b32.xlu0 %v2252, 85
      %v2258 = vpop.permute.xlu0 %2257
      %v2259 = vrot.slane %v2256, 4
      %v2260 = vrot.slane %v2258, 4
      %v2261 = vsel %vm357, %v2259, %v2260
      %v2262 = vsel %vm926, %v2256, %v2261
      %2264 = vst [vmem:[#allocation4 + $0xd0] sm:$0xff] %v2262
      %s2265 = scalar_lea.vmem %s5, 16
      %v2266 = vld [vmem:[%s2265] sm:$0xff]
      %v2267 = vld [vmem:[%s2265 + $0x8] sm:$0xff]
      %v2268 = vld [vmem:[#allocation4] sm:$0xff]
      %v2269 = vld [vmem:[#allocation4 + $0x8] sm:$0xff]
      %v2270 = vld [vmem:[#allocation4 + $0x10] sm:$0xff]
      %v2271 = vld [vmem:[#allocation4 + $0x18] sm:$0xff]
      %v2272 = vld [vmem:[#allocation4 + $0x20] sm:$0xff]
      %v2273 = vld [vmem:[#allocation4 + $0x28] sm:$0xff]
      %v2274 = vld [vmem:[#allocation4 + $0x30] sm:$0xff]
      %v2275 = vld [vmem:[#allocation4 + $0x38] sm:$0xff]
      %v2276 = vld [vmem:[#allocation4 + $0x40] sm:$0xff]
      %v2277 = vld [vmem:[#allocation4 + $0x48] sm:$0xff]
      %v2278 = vld [vmem:[#allocation4 + $0x50] sm:$0xff]
      %v2279 = vld [vmem:[#allocation4 + $0x58] sm:$0xff]
      %v2280 = vld [vmem:[#allocation4 + $0x60] sm:$0xff]
      %v2281 = vld [vmem:[#allocation4 + $0x68] sm:$0xff]
      %v2282 = vld [vmem:[#allocation4 + $0x70] sm:$0xff]
      %v2283 = vld [vmem:[#allocation4 + $0x78] sm:$0xff]
      %v2284 = vld [vmem:[#allocation4 + $0x80] sm:$0xff]
      %v2285 = vld [vmem:[#allocation4 + $0x88] sm:$0xff]
      %v2286 = vld [vmem:[#allocation4 + $0x90] sm:$0xff]
      %v2287 = vld [vmem:[#allocation4 + $0x98] sm:$0xff]
      %v2288 = vld [vmem:[#allocation4 + $0xa0] sm:$0xff]
      %v2289 = vld [vmem:[#allocation4 + $0xa8] sm:$0xff]
      %v2290 = vld [vmem:[#allocation4 + $0xb0] sm:$0xff]
      %v2291 = vld [vmem:[#allocation4 + $0xb8] sm:$0xff]
      %v2292 = vld [vmem:[#allocation4 + $0xc0] sm:$0xff]
      %v2293 = vld [vmem:[#allocation4 + $0xc8] sm:$0xff]
      %v2294 = vld [vmem:[#allocation4 + $0xd0] sm:$0xff]
      %s2295 = scalar_lea.vmem %s6, 16
      %v2296 = vld [vmem:[%s2295] sm:$0xff]
      %v2297 = vld [vmem:[%s2295 + $0x8] sm:$0xff]
      %2299 = vset.pattern.permute.xlu0 0
      %2300 = vperm.xlu0 %2299, %v2296
      %v2301 = vpop.permute.xlu0 %2300
      %2304 = vset.pattern.permute.xlu0 0
      %2305 = vperm.xlu0 %2304, %v2297
      %v2306 = vpop.permute.xlu0 %2305
      %v2310 = vunpack.c.l.b16 %v2266
      %v2311 = vunpack.c.h.b16 %v2266
      %v2312 = vunpack.c.l.b16 %v2267
      %v2313 = vunpack.c.h.b16 %v2267
      %v2314 = vpack.c.b16 %v2312, %v2310
      %v2315 = vpack.c.b16 %v2313, %v2311
      %v2344 = vunpack.c.l.b16 %v2268
      %v2345 = vunpack.c.h.b16 %v2268
      %v2346 = vunpack.c.l.b16 %v2269
      %v2347 = vunpack.c.h.b16 %v2269
      %v2348 = vunpack.c.l.b16 %v2270
      %v2349 = vunpack.c.h.b16 %v2270
      %v2350 = vunpack.c.l.b16 %v2271
      %v2351 = vunpack.c.h.b16 %v2271
      %v2352 = vunpack.c.l.b16 %v2272
      %v2353 = vunpack.c.h.b16 %v2272
      %v2354 = vunpack.c.l.b16 %v2273
      %v2355 = vunpack.c.h.b16 %v2273
      %v2356 = vunpack.c.l.b16 %v2274
      %v2357 = vunpack.c.h.b16 %v2274
      %v2358 = vunpack.c.l.b16 %v2275
      %v2359 = vunpack.c.h.b16 %v2275
      %v2360 = vunpack.c.l.b16 %v2276
      %v2361 = vunpack.c.h.b16 %v2276
      %v2362 = vunpack.c.l.b16 %v2277
      %v2363 = vunpack.c.h.b16 %v2277
      %v2364 = vunpack.c.l.b16 %v2278
      %v2365 = vunpack.c.h.b16 %v2278
      %v2366 = vunpack.c.l.b16 %v2279
      %v2367 = vunpack.c.h.b16 %v2279
      %v2368 = vunpack.c.l.b16 %v2280
      %v2369 = vunpack.c.h.b16 %v2280
      %v2370 = vunpack.c.l.b16 %v2281
      %v2371 = vunpack.c.h.b16 %v2281
      %v2372 = vunpack.c.l.b16 %v2282
      %v2373 = vunpack.c.h.b16 %v2282
      %v2374 = vunpack.c.l.b16 %v2283
      %v2375 = vunpack.c.h.b16 %v2283
      %v2376 = vunpack.c.l.b16 %v2284
      %v2377 = vunpack.c.h.b16 %v2284
      %v2378 = vunpack.c.l.b16 %v2285
      %v2379 = vunpack.c.h.b16 %v2285
      %v2380 = vunpack.c.l.b16 %v2286
      %v2381 = vunpack.c.h.b16 %v2286
      %v2382 = vunpack.c.l.b16 %v2287
      %v2383 = vunpack.c.h.b16 %v2287
      %v2384 = vunpack.c.l.b16 %v2288
      %v2385 = vunpack.c.h.b16 %v2288
      %v2386 = vunpack.c.l.b16 %v2289
      %v2387 = vunpack.c.h.b16 %v2289
      %v2388 = vunpack.c.l.b16 %v2290
      %v2389 = vunpack.c.h.b16 %v2290
      %v2390 = vunpack.c.l.b16 %v2291
      %v2391 = vunpack.c.h.b16 %v2291
      %v2392 = vunpack.c.l.b16 %v2292
      %v2393 = vunpack.c.h.b16 %v2292
      %v2394 = vunpack.c.l.b16 %v2293
      %v2395 = vunpack.c.h.b16 %v2293
      %v2396 = vunpack.c.l.b16 %v2294
      %v2397 = vunpack.c.h.b16 %v2294
      %v2398 = vpack.c.b16 %v2346, %v2344
      %v2399 = vpack.c.b16 %v2347, %v2345
      %v2400 = vpack.c.b16 %v2350, %v2348
      %v2401 = vpack.c.b16 %v2351, %v2349
      %v2402 = vpack.c.b16 %v2354, %v2352
      %v2403 = vpack.c.b16 %v2355, %v2353
      %v2404 = vpack.c.b16 %v2358, %v2356
      %v2405 = vpack.c.b16 %v2359, %v2357
      %v2406 = vpack.c.b16 %v2362, %v2360
      %v2407 = vpack.c.b16 %v2363, %v2361
      %v2408 = vpack.c.b16 %v2366, %v2364
      %v2409 = vpack.c.b16 %v2367, %v2365
      %v2410 = vpack.c.b16 %v2370, %v2368
      %v2411 = vpack.c.b16 %v2371, %v2369
      %v2412 = vpack.c.b16 %v2374, %v2372
      %v2413 = vpack.c.b16 %v2375, %v2373
      %v2414 = vpack.c.b16 %v2378, %v2376
      %v2415 = vpack.c.b16 %v2379, %v2377
      %v2416 = vpack.c.b16 %v2382, %v2380
      %v2417 = vpack.c.b16 %v2383, %v2381
      %v2418 = vpack.c.b16 %v2386, %v2384
      %v2419 = vpack.c.b16 %v2387, %v2385
      %v2420 = vpack.c.b16 %v2390, %v2388
      %v2421 = vpack.c.b16 %v2391, %v2389
      %v2422 = vpack.c.b16 %v2394, %v2392
      %v2423 = vpack.c.b16 %v2395, %v2393
      %v2424 = vpack.c.b16 %v2396, %v2396
      %v2425 = vpack.c.b16 %v2397, %v2397
      %v2453 = vsel %vm1753, %v2315, 0
      %v2456 = vsel %vm1757, %v2424, 0
      %v2459 = vsel %vm1757, %v2425, 0
      %2461 = vmatprep.subr.bf16.mxu0 %v2399
      %2462 = vmatpush1.bf16.msra.mxu0 %v2398
      %2463 = vmatprep.subr.bf16.mxu0 %v2401
      %2464 = vmatpush1.bf16.msra.mxu0 %v2400
      %2465 = vmatprep.subr.bf16.mxu0 %v2403
      %2466 = vmatpush1.bf16.msra.mxu0 %v2402
      %2467 = vmatprep.subr.bf16.mxu0 %v2405
      %2468 = vmatpush1.bf16.msra.mxu0 %v2404
      %2469 = vmatprep.subr.bf16.mxu0 %v2407
      %2470 = vmatpush1.bf16.msra.mxu0 %v2406
      %2471 = vmatprep.subr.bf16.mxu0 %v2409
      %2472 = vmatpush1.bf16.msra.mxu0 %v2408
      %2473 = vmatprep.subr.bf16.mxu0 %v2411
      %2474 = vmatpush1.bf16.msra.mxu0 %v2410
      %2475 = vmatprep.subr.bf16.mxu0 %v2413
      %2476 = vmatpush1.bf16.msra.mxu0 %v2412
      %2477 = vmatprep.subr.bf16.mxu0 %v2415
      %2478 = vmatpush1.bf16.msra.mxu0 %v2414
      %2479 = vmatprep.subr.bf16.mxu0 %v2417
      %2480 = vmatpush1.bf16.msra.mxu0 %v2416
      %2481 = vmatprep.subr.bf16.mxu0 %v2419
      %2482 = vmatpush1.bf16.msra.mxu0 %v2418
      %2483 = vmatprep.subr.bf16.mxu0 %v2421
      %2484 = vmatpush1.bf16.msra.mxu0 %v2420
      %2485 = vmatprep.subr.bf16.mxu0 %v2423
      %2486 = vmatpush1.bf16.msra.mxu0 %v2422
      %2487 = vmatprep.subr.bf16.mxu0 %v2459
      %2488 = vmatpush1.bf16.msra.mxu0 %v2456
      %2489 = vmatprep.subr.bf16.mxu0 0
      %2490 = vmatpush1.bf16.msra.mxu0 0
      %2491 = vmatprep.subr.bf16.mxu0 0
      %2492 = vmatpush1.bf16.msra.mxu0 0
      %2493 = vmatprep.mubr.bf16.mxu0 %v2453
      %2494 = vmatmul.mubr.bf16.gmra.mrb[0].mxu0 %v2314
      %v2495 = vpop.f32.mrb[0].mxu0
      %v2496 = vadd.f32 %v2301, %v2495
      %v2497 = vpop.f32.mrb[0].mxu0
      %v2498 = vadd.f32 %v2301, %v2497
      %v2499 = vpop.f32.mrb[0].mxu0
      %v2500 = vadd.f32 %v2306, %v2499
      %v2501 = vpop.f32.mrb[0].mxu0
      %v2502 = vadd.f32 %v2306, %v2501
      %2503 = vdwg.mxu0
      %vm2504 = vcmp.gt.f32.partialorder %v2496, 0.0
      %vm2505 = vcmp.gt.f32.partialorder %v2498, 0.0
      %vm2506 = vcmp.gt.f32.partialorder %v2500, 0.0
      %vm2507 = vcmp.gt.f32.partialorder %v2502, 0.0
      %v2508 = vmul.f32 %v2496, 0.1
      %v2509 = vmul.f32 %v2498, 0.1
      %v2510 = vmul.f32 %v2500, 0.1
      %v2511 = vmul.f32 %v2502, 0.1
      %v2512 = vsel %vm2504, %v2496, %v2508
      %v2513 = vsel %vm2505, %v2498, %v2509
      %v2514 = vsel %vm2506, %v2500, %v2510
      %v2515 = vsel %vm2507, %v2502, %v2511
      %v2516 = vmul.f32 %v1101, %v2512
      %v2517 = vmul.f32 %v1105, %v2513
      %v2518 = vmul.f32 %v1101, %v2514
      %v2519 = vmul.f32 %v1105, %v2515
      %v2520 = vadd.f32 %v2516, %v1823
      %v2521 = vadd.f32 %v2517, %v1824
      %v2522 = vadd.f32 %v2518, %v1825
      %v2523 = vadd.f32 %v2519, %v1826
      %2524 = vst [vmem:[%s305] sm:$0xff] %v2520
      %2525 = vst [vmem:[%s305 + $0x8] sm:$0xff] %v2521
      %2526 = vst [vmem:[%s305 + $0x10] sm:$0xff] %v2522
      %2527 = vst [vmem:[%s305 + $0x18] sm:$0xff] %v2523
      %p2528 = scmp.lt.s32.totalorder %s19, 1
      %s2529 = scalar_select %p2528, %s19, 1
      %s2530 = smul.addr %s2529, 4
      %s2531 = smul.addr %s2530, 8
      %s2532 = scalar_lea.vmem %s8, %s2531
      // Predicated region
      $region53: #{down_block_forward.1} parent=51 // pred_check
        %p2533 = pneg %p210
      $region54: #{down_block_forward.1} parent=51 // pred_check_branch
        %2535 = sbr.rel (%p2533) target = $region56
      $region55: #{down_block_forward.1} parent=51 // pred_region
        _
      $region56: #{down_block_forward.1} parent=51 // pred_fallthru
        _
    $region52: #{down_block_forward.1} parent=5 // pred_fallthru
      _
    %p2536 = scmp.le.s32.totalorder 2, %s14
    // Predicated region
    $region57: #{down_block_forward.1} parent=5 // pred_check
      %p2537 = pneg %p2536
    $region58: #{down_block_forward.1} parent=5 // pred_check_branch
      %2539 = sbr.rel (%p2537) target = $region60
    $region59: #{down_block_forward.1} parent=5 // pred_region
      %s2540 = ssub.s32 %s14, 2
      // Predicated region
      $region61: #{down_block_forward.1} parent=59 // pred_check
        %p2541 = pneg %p216
      $region62: #{down_block_forward.1} parent=59 // pred_check_branch
        %2543 = sbr.rel (%p2541) target = $region64
      $region63: #{down_block_forward.1} parent=59 // pred_region
        %p2544 = scmp.lt.s32.totalorder %s20, 1
        %s2545 = scalar_select %p2544, %s20, 1
        %s2546 = smul.addr %s2545, 4
        %s2547 = smul.addr %s2546, 8
        %s2548 = scalar_lea.vmem %s8, %s2547
      $region64: #{down_block_forward.1} parent=59 // pred_fallthru
        _
    $region60: #{down_block_forward.1} parent=5 // pred_fallthru
      _
  $region6: #{down_block_forward.1} parent=0 // loop_footer
    %s18 = sadd.s32 1, %s14
  $region7: #{down_block_forward.1} parent=0 // loop_footer_branch
    %13 = sbr.rel target = $region3
  $region8: #{down_block_forward.1} parent=0 // loop_exit
    _

</llo_original>
